<compile_context>
chip_gen: v6e
topology: v6e:2x2x1
jax: 0.10.0
libtpu: 0.0.40
codegen_flags: <defaults>
</compile_context>

<pallas_src>
import jax
import jax.numpy as jnp
from jax import lax
from jax.experimental import pallas as pl
from jax.experimental.pallas import tpu as pltpu

EPS = 1e-5
NEG_SLOPE = 0.2
ROW_TILE_TARGET = 512      # rows per grid step; bf16 (512 x 4096) patch tile
                           # is 4 MiB -> ~12 MiB double-buffered, fine everywhere


def _round_up(n, m):
    return ((n + m - 1) // m) * m


def _row_tiling(rows, target=ROW_TILE_TARGET):
    """Fixed large row tiles (pad rows up to a multiple of the tile).

    The tile is capped at ceil(rows/2) so there are >=2 grid steps whenever
    rows > 8, letting v7x's megacore shard the 'parallel' axis; harmless on
    single-TensorCore chips.  No divisor hunt -> no degenerate 8-row tiles.
    """
    half = _round_up(max((rows + 1) // 2, 8), 8)
    tile = min(target, half)
    return tile, _round_up(rows, tile)


def _compiler_params(vmem_bytes):
    # Explicit scoped-VMEM budget: actual need + 4 MiB headroom, floored at
    # 16 MiB, capped at 48 MiB (safe under v7x's 64 MiB physical VMEM).
    limit = int(min(max(vmem_bytes + (4 << 20), 16 << 20), 48 << 20))
    return pltpu.CompilerParams(dimension_semantics=("parallel",),
                                vmem_limit_bytes=limit)


# ----------------------------- glue: im2col ---------------------------------
def _im2col(x_nhwc, k, stride, pad):
    """Extract kxk patches -> (N*Ho*Wo, k*k*C). Pure data movement (bf16)."""
    N, H, W, C = x_nhwc.shape
    xp = jnp.pad(x_nhwc, ((0, 0), (pad, pad), (pad, pad), (0, 0)))
    Ho = (H + 2 * pad - k) // stride + 1
    Wo = (W + 2 * pad - k) // stride + 1
    cols = []
    for kh in range(k):
        for kw in range(k):
            cols.append(xp[:, kh:kh + stride * Ho:stride,
                            kw:kw + stride * Wo:stride, :])
    p = jnp.stack(cols, axis=3)                       # (N, Ho, Wo, k*k, C)
    return p.reshape(N * Ho * Wo, k * k * C), (N, Ho, Wo)


# --------------------------- Pallas kernels ----------------------------------
def _conv_stats_kernel(p_ref, w_ref, y_ref, ps_ref):
    # Conv as bf16 x bf16 -> f32 MXU matmul (bias-free).
    y = jnp.dot(p_ref[...], w_ref[...], preferred_element_type=jnp.float32)
    # Per-tile channel sum / sum-of-squares in f32 BEFORE the bf16 cast.
    s = jnp.sum(y, axis=0, keepdims=True)
    ss = jnp.sum(y * y, axis=0, keepdims=True)
    ps_ref[...] = jnp.concatenate([s, ss], axis=0)[None]
    y_ref[...] = y.astype(y_ref.dtype)                # bf16 intermediate


def _bn_lrelu_kernel(y_ref, scale_ref, shift_ref, o_ref):
    # Folded BN affine (scale/shift precomputed from batch stats) + LeakyReLU.
    z = y_ref[...].astype(jnp.float32) * scale_ref[...] + shift_ref[...]
    o_ref[...] = jnp.maximum(z, NEG_SLOPE * z).astype(o_ref.dtype)


def _matmul_kernel(p_ref, w_ref, o_ref):
    o_ref[...] = jnp.dot(p_ref[...], w_ref[...],
                         preferred_element_type=jnp.float32)


# ----------------------------- layer wrappers --------------------------------
def _conv_bn_lrelu(act, w, gamma, beta, stride=2, pad=1):
    """act: (N,H,W,Cin) bf16 real channels (layer 1 may be zero-padded to 8);
       w: (4,4,Cin_t,Cout_t) f32.  Returns (N,Ho,Wo,Cout_t) bf16."""
    ks0, ks1, cin_t, cout_t = w.shape
    cin = act.shape[-1]
    cout_p = _round_up(cout_t, 128)          # lane-dense stores; 256-wide when
                                             # cout>=256 (full v6e/v7x MXU width)

    # Weight matrix in (K, Cout_pad) layout, bf16 for the MXU.
    w_emb = jnp.zeros((ks0, ks1, cin, cout_p), jnp.float32)
    w_emb = w_emb.at[:, :, :cin_t, :cout_t].set(w)
    w_mat = w_emb.reshape(ks0 * ks1 * cin, cout_p).astype(jnp.bfloat16)

    patches, (N, Ho, Wo) = _im2col(act, ks0, stride, pad)
    rows = N * Ho * Wo
    K = patches.shape[1]                     # 16 * Cin_real
    tile_r, rows_pad = _row_tiling(rows)
    if rows_pad != rows:                     # zero rows are stat-neutral
        patches = jnp.pad(patches, ((0, rows_pad - rows), (0, 0)))
    n_tiles = rows_pad // tile_r

    # ---- pass A: tiled matmul (bf16 y out) + per-tile BN stat partials ----
    vmem_a = (2 * tile_r * K * 2 + 2 * K * cout_p * 2
              + 2 * tile_r * cout_p * 2 + 2 * 2 * cout_p * 4)
    y, partial = pl.pallas_call(
        _conv_stats_kernel,
        grid=(n_tiles,),
        in_specs=[pl.BlockSpec((tile_r, K), lambda i: (i, 0)),
                  pl.BlockSpec((K, cout_p), lambda i: (0, 0))],
        out_specs=[pl.BlockSpec((tile_r, cout_p), lambda i: (i, 0)),
                   pl.BlockSpec((1, 2, cout_p), lambda i: (i, 0, 0))],
        out_shape=[jax.ShapeDtypeStruct((rows_pad, cout_p), jnp.bfloat16),
                   jax.ShapeDtypeStruct((n_tiles, 2, cout_p), jnp.float32)],
        compiler_params=_compiler_params(vmem_a),
        cost_estimate=pl.CostEstimate(
            flops=2 * rows_pad * K * cout_p,
            transcendentals=0,
            bytes_accessed=(rows_pad * K * 2 + K * cout_p * 2
                            + rows_pad * cout_p * 2 + n_tiles * 2 * cout_p * 4)),
    )(patches, w_mat)

    # ---- fold training-mode batch stats into per-channel scale/shift ----
    # NOTE: single-pass E[y^2]-E[y]^2 variance (clamped >=0); matches reference.
    stats = jnp.sum(partial, axis=0)                      # (2, cout_p), tiny
    mean = stats[0] / rows
    var = jnp.maximum(stats[1] / rows - mean * mean, 0.0)
    g_p = jnp.zeros((cout_p,), jnp.float32).at[:cout_t].set(gamma)
    b_p = jnp.zeros((cout_p,), jnp.float32).at[:cout_t].set(beta)
    scale = g_p * lax.rsqrt(var + EPS)
    shift = b_p - mean * scale

    # ---- pass B: normalize + LeakyReLU, bf16 output ----
    vmem_b = 2 * tile_r * cout_p * 2 * 2 + 2 * 2 * cout_p * 4
    out = pl.pallas_call(
        _bn_lrelu_kernel,
        grid=(n_tiles,),
        in_specs=[pl.BlockSpec((tile_r, cout_p), lambda i: (i, 0)),
                  pl.BlockSpec((1, cout_p), lambda i: (0, 0)),
                  pl.BlockSpec((1, cout_p), lambda i: (0, 0))],
        out_specs=pl.BlockSpec((tile_r, cout_p), lambda i: (i, 0)),
        out_shape=jax.ShapeDtypeStruct((rows_pad, cout_p), jnp.bfloat16),
        compiler_params=_compiler_params(vmem_b),
        cost_estimate=pl.CostEstimate(
            flops=4 * rows_pad * cout_p, transcendentals=0,
            bytes_accessed=rows_pad * cout_p * 4),
    )(y, scale.reshape(1, cout_p), shift.reshape(1, cout_p))

    if rows_pad != rows:
        out = out[:rows]
    # Lane-dense stores stay inside the kernel; hand only the REAL channels to
    # the next layer so its im2col / matmul K is 16*Cout_real (padded lanes are
    # exactly zero, so slicing them off is free of numeric effect).
    return out.reshape(N, Ho, Wo, cout_p)[..., :cout_t]


def _final_conv(act, w):
    """Predictor: Conv2d(C,1,4,1,0,bias=False) on a (N,4,4,C_real) activation."""
    ks0, ks1, cin_t, _ = w.shape
    N = act.shape[0]
    cin = act.shape[-1]
    patches, _ = _im2col(act, ks0, 1, 0)                  # (N, 16*cin) bf16
    K = patches.shape[1]
    tile_r, rows_pad = _row_tiling(N)
    if rows_pad != N:
        patches = jnp.pad(patches, ((0, rows_pad - N), (0, 0)))
    n_tiles = rows_pad // tile_r
    w_emb = jnp.zeros((ks0, ks1, cin, 128), jnp.float32)
    w_emb = w_emb.at[:, :, :cin_t, :1].set(w)             # lane-dense 128-col out
    w_mat = w_emb.reshape(K, 128).astype(jnp.bfloat16)
    vmem = 2 * tile_r * K * 2 + 2 * K * 128 * 2 + 2 * tile_r * 128 * 4
    out = pl.pallas_call(
        _matmul_kernel,
        grid=(n_tiles,),
        in_specs=[pl.BlockSpec((tile_r, K), lambda i: (i, 0)),
                  pl.BlockSpec((K, 128), lambda i: (0, 0))],
        out_specs=pl.BlockSpec((tile_r, 128), lambda i: (i, 0)),
        out_shape=jax.ShapeDtypeStruct((rows_pad, 128), jnp.float32),
        compiler_params=_compiler_params(vmem),
        cost_estimate=pl.CostEstimate(
            flops=2 * rows_pad * K * 128, transcendentals=0,
            bytes_accessed=rows_pad * K * 2 + K * 128 * 2 + rows_pad * 128 * 4),
    )(patches, w_mat)
    # PyTorch: predictor(...).view(-1, 1).squeeze(1)  -> shape (N,)
    return out[:N, 0]


@jax.jit
def netd32_forward(x_nchw, params):
    x = jnp.transpose(x_nchw, (0, 2, 3, 1)).astype(jnp.bfloat16)   # NCHW->NHWC once
    nc = x.shape[-1]
    cpad = _round_up(nc, 8)                  # layer-1 K = 16*cpad is a mult. of 128
    if cpad != nc:
        x = jnp.pad(x, ((0, 0), (0, 0), (0, 0), (0, cpad - nc)))
    x = _conv_bn_lrelu(x, params["w1"], params["g1"], params["bt1"])
    x = _conv_bn_lrelu(x, params["w2"], params["g2"], params["bt2"])
    x = _conv_bn_lrelu(x, params["w3"], params["g3"], params["bt3"])
    return _final_conv(x, params["w4"])


# ------------------------------ init + reference -----------------------------
def init_params(key, nc, ndf):
    ks = jax.random.split(key, 10)
    w = lambda k, s: 0.02 * jax.random.normal(k, s, jnp.float32)   # DCGAN-style init
    p = {
        "w1": w(ks[0], (4, 4, nc, ndf)),
        "w2": w(ks[1], (4, 4, ndf, ndf * 2)),
        "w3": w(ks[2], (4, 4, ndf * 2, ndf * 4)),
        "w4": w(ks[3], (4, 4, ndf * 4, 1)),
        "g1": 1.0 + 0.1 * jax.random.normal(ks[4], (ndf,)),
        "g2": 1.0 + 0.1 * jax.random.normal(ks[5], (ndf * 2,)),
        "g3": 1.0 + 0.1 * jax.random.normal(ks[6], (ndf * 4,)),
        "bt1": 0.1 * jax.random.normal(ks[7], (ndf,)),
        "bt2": 0.1 * jax.random.normal(ks[8], (ndf * 2,)),
        "bt3": 0.1 * jax.random.normal(ks[9], (ndf * 4,)),
    }
    return jax.tree_util.tree_map(lambda a: a.astype(jnp.float32), p)


def _reference_forward(x_nchw, p):
    """Pure-JAX reference (lax.conv) mirroring the kernel's bf16 operand cast
    and bf16 conv intermediate (stats still taken from the f32 conv output)."""
    def conv(x_bf, w, s, pad):
        return lax.conv_general_dilated(
            x_bf, w.astype(jnp.bfloat16), (s, s), ((pad, pad), (pad, pad)),
            dimension_numbers=("NHWC", "HWIO", "NHWC"),
            preferred_element_type=jnp.float32)

    def bn_lrelu(y, g, bt):
        m = jnp.mean(y, axis=(0, 1, 2))
        v = jnp.maximum(jnp.mean(y * y, axis=(0, 1, 2)) - m * m, 0.0)
        scale = g * lax.rsqrt(v + EPS)
        shift = bt - m * scale
        yq = y.astype(jnp.bfloat16).astype(jnp.float32)   # bf16 intermediate
        z = yq * scale + shift
        return jnp.maximum(z, NEG_SLOPE * z).astype(jnp.bfloat16)

    x = jnp.transpose(x_nchw, (0, 2, 3, 1)).astype(jnp.bfloat16)
    x = bn_lrelu(conv(x, p["w1"], 2, 1), p["g1"], p["bt1"])
    x = bn_lrelu(conv(x, p["w2"], 2, 1), p["g2"], p["bt2"])
    x = bn_lrelu(conv(x, p["w3"], 2, 1), p["g3"], p["bt3"])
    x = conv(x, p["w4"], 1, 0)                 # (N, 1, 1, 1)
    return x.reshape(-1)


if __name__ == "__main__":
    nc, ndf, batch, spatial = 3, 8, 2, 32   # 32x32 input required by the 4x4 valid conv
    key = jax.random.PRNGKey(0)
    kx, kp = jax.random.split(key)
    x = jax.random.normal(kx, (batch, nc, spatial, spatial), jnp.float32)  # NCHW
    params = init_params(kp, nc, ndf)

    out = jax.block_until_ready(netd32_forward(x, params))
    assert out.shape == (batch,), f"unexpected output shape {out.shape}"

    ref = jax.block_until_ready(_reference_forward(x, params))
    assert jnp.allclose(out, ref, atol=1e-2, rtol=1e-2), (out, ref)

    print("KERNEL_OK")
</pallas_src>

<mosaic_0001>
module attributes {stable_mosaic.version = 11 : i64} {
  func.func @_conv_stats_kernel(%arg0: i32, %arg1: memref<256x128xbf16, #tpu.memory_space<vmem>>, %arg2: memref<128x128xbf16, #tpu.memory_space<vmem>>, %arg3: memref<256x128xbf16, #tpu.memory_space<vmem>>, %arg4: memref<1x2x128xf32, #tpu.memory_space<vmem>>) attributes {dimension_semantics = [#tpu.dimension_semantics<parallel>], iteration_bounds = array<i64: 2>, scalar_prefetch = 0 : i64, scratch_operands = 0 : i64, tpu.core_type = #tpu.core_type<tc>, window_params = [{transform_indices = @transform_0, window_bounds = array<i64: 256, 128>}, {pipeline_mode = #tpu.pipeline_mode<synchronous>, transform_indices = @transform_1, window_bounds = array<i64: 128, 128>}, {transform_indices = @transform_2, window_bounds = array<i64: 256, 128>}, {transform_indices = @transform_3, window_bounds = array<i64: 1, 2, 128>}]} {
    %c0 = arith.constant 0 : index
    %c0_0 = arith.constant 0 : index
    %0 = vector.load %arg1[%c0, %c0_0] : memref<256x128xbf16, #tpu.memory_space<vmem>>, vector<256x128xbf16>
    %c0_1 = arith.constant 0 : index
    %c0_2 = arith.constant 0 : index
    %1 = vector.load %arg2[%c0_1, %c0_2] : memref<128x128xbf16, #tpu.memory_space<vmem>>, vector<128x128xbf16>
    %cst = arith.constant dense<0.000000e+00> : vector<256x128xf32>
    %2 = tpu.matmul %0, %1, %cst {dimension_numbers = #tpu.dot_dimension_numbers<[1], [0], [0], [1], [0, 0, 1, 1], [], []>} : vector<256x128xbf16>, vector<128x128xbf16>, vector<256x128xf32> -> vector<256x128xf32>
    %cst_3 = arith.constant dense<0.000000e+00> : vector<128xf32>
    %3 = vector.multi_reduction <add>, %2, %cst_3 [0] : vector<256x128xf32> to vector<128xf32>
    %4 = vector.shape_cast %3 : vector<128xf32> to vector<1x128xf32>
    %5 = arith.mulf %2, %2 : vector<256x128xf32>
    %cst_4 = arith.constant dense<0.000000e+00> : vector<128xf32>
    %6 = vector.multi_reduction <add>, %5, %cst_4 [0] : vector<256x128xf32> to vector<128xf32>
    %7 = vector.shape_cast %6 : vector<128xf32> to vector<1x128xf32>
    %8 = tpu.concatenate %4, %7 in 0 : vector<1x128xf32>, vector<1x128xf32> -> vector<2x128xf32>
    %9 = vector.shape_cast %8 : vector<2x128xf32> to vector<1x2x128xf32>
    %c0_5 = arith.constant 0 : index
    %c0_6 = arith.constant 0 : index
    %c0_7 = arith.constant 0 : index
    %10 = vector.load %arg4[%c0_5, %c0_6, %c0_7] : memref<1x2x128xf32, #tpu.memory_space<vmem>>, vector<1x2x128xf32>
    tpu.vector_store %arg4[%c0_5, %c0_6, %c0_7], %9 {strides = array<i32>} : memref<1x2x128xf32, #tpu.memory_space<vmem>>, vector<1x2x128xf32>,
    %11 = arith.truncf %2 : vector<256x128xf32> to vector<256x128xbf16>
    %c0_8 = arith.constant 0 : index
    %c0_9 = arith.constant 0 : index
    %12 = vector.load %arg3[%c0_8, %c0_9] : memref<256x128xbf16, #tpu.memory_space<vmem>>, vector<256x128xbf16>
    tpu.vector_store %arg3[%c0_8, %c0_9], %11 {strides = array<i32>} : memref<256x128xbf16, #tpu.memory_space<vmem>>, vector<256x128xbf16>,
    return
  }
  func.func @transform_0(%arg0: i32) -> (i32, i32) {
    %c0_i32 = arith.constant 0 : i32
    %c0_i32_0 = arith.constant 0 : i32
    return %arg0, %c0_i32 : i32, i32
  }
  func.func @transform_1(%arg0: i32) -> (i32, i32) {
    %c0_i32 = arith.constant 0 : i32
    %c0_i32_0 = arith.constant 0 : i32
    %c0_i32_1 = arith.constant 0 : i32
    return %c0_i32, %c0_i32_0 : i32, i32
  }
  func.func @transform_2(%arg0: i32) -> (i32, i32) {
    %c0_i32 = arith.constant 0 : i32
    %c0_i32_0 = arith.constant 0 : i32
    return %arg0, %c0_i32 : i32, i32
  }
  func.func @transform_3(%arg0: i32) -> (i32, i32, i32) {
    %c0_i32 = arith.constant 0 : i32
    %c0_i32_0 = arith.constant 0 : i32
    %c0_i32_1 = arith.constant 0 : i32
    return %arg0, %c0_i32, %c0_i32_0 : i32, i32, i32
  }
}

module attributes {stable_mosaic.version = 11 : i64} {
  func.func @_bn_lrelu_kernel(%arg0: i32, %arg1: memref<256x128xbf16, #tpu.memory_space<vmem>>, %arg2: memref<1x128xf32, #tpu.memory_space<vmem>>, %arg3: memref<1x128xf32, #tpu.memory_space<vmem>>, %arg4: memref<256x128xbf16, #tpu.memory_space<vmem>>) attributes {dimension_semantics = [#tpu.dimension_semantics<parallel>], iteration_bounds = array<i64: 2>, scalar_prefetch = 0 : i64, scratch_operands = 0 : i64, tpu.core_type = #tpu.core_type<tc>, window_params = [{transform_indices = @transform_0, window_bounds = array<i64: 256, 128>}, {pipeline_mode = #tpu.pipeline_mode<synchronous>, transform_indices = @transform_1, window_bounds = array<i64: 1, 128>}, {pipeline_mode = #tpu.pipeline_mode<synchronous>, transform_indices = @transform_2, window_bounds = array<i64: 1, 128>}, {transform_indices = @transform_3, window_bounds = array<i64: 256, 128>}]} {
    %c0 = arith.constant 0 : index
    %c0_0 = arith.constant 0 : index
    %0 = vector.load %arg1[%c0, %c0_0] : memref<256x128xbf16, #tpu.memory_space<vmem>>, vector<256x128xbf16>
    %1 = arith.extf %0 : vector<256x128xbf16> to vector<256x128xf32>
    %c0_1 = arith.constant 0 : index
    %c0_2 = arith.constant 0 : index
    %2 = vector.load %arg2[%c0_1, %c0_2] : memref<1x128xf32, #tpu.memory_space<vmem>>, vector<1x128xf32>
    %3 = vector.broadcast %2 : vector<1x128xf32> to vector<256x128xf32>
    %4 = arith.mulf %1, %3 : vector<256x128xf32>
    %c0_3 = arith.constant 0 : index
    %c0_4 = arith.constant 0 : index
    %5 = vector.load %arg3[%c0_3, %c0_4] : memref<1x128xf32, #tpu.memory_space<vmem>>, vector<1x128xf32>
    %6 = vector.broadcast %5 : vector<1x128xf32> to vector<256x128xf32>
    %7 = arith.addf %4, %6 : vector<256x128xf32>
    %cst = arith.constant 2.000000e-01 : f32
    %8 = vector.broadcast %cst : f32 to vector<256x128xf32>
    %9 = arith.mulf %8, %7 : vector<256x128xf32>
    %10 = arith.maximumf %7, %9 : vector<256x128xf32>
    %11 = arith.truncf %10 : vector<256x128xf32> to vector<256x128xbf16>
    %c0_5 = arith.constant 0 : index
    %c0_6 = arith.constant 0 : index
    %12 = vector.load %arg4[%c0_5, %c0_6] : memref<256x128xbf16, #tpu.memory_space<vmem>>, vector<256x128xbf16>
    tpu.vector_store %arg4[%c0_5, %c0_6], %11 {strides = array<i32>} : memref<256x128xbf16, #tpu.memory_space<vmem>>, vector<256x128xbf16>,
    return
  }
  func.func @transform_0(%arg0: i32) -> (i32, i32) {
    %c0_i32 = arith.constant 0 : i32
    %c0_i32_0 = arith.constant 0 : i32
    return %arg0, %c0_i32 : i32, i32
  }
  func.func @transform_1(%arg0: i32) -> (i32, i32) {
    %c0_i32 = arith.constant 0 : i32
    %c0_i32_0 = arith.constant 0 : i32
    %c0_i32_1 = arith.constant 0 : i32
    return %c0_i32, %c0_i32_0 : i32, i32
  }
  func.func @transform_2(%arg0: i32) -> (i32, i32) {
    %c0_i32 = arith.constant 0 : i32
    %c0_i32_0 = arith.constant 0 : i32
    %c0_i32_1 = arith.constant 0 : i32
    return %c0_i32, %c0_i32_0 : i32, i32
  }
  func.func @transform_3(%arg0: i32) -> (i32, i32) {
    %c0_i32 = arith.constant 0 : i32
    %c0_i32_0 = arith.constant 0 : i32
    return %arg0, %c0_i32 : i32, i32
  }
}

module attributes {stable_mosaic.version = 11 : i64} {
  func.func @_conv_stats_kernel(%arg0: i32, %arg1: memref<64x128xbf16, #tpu.memory_space<vmem>>, %arg2: memref<128x128xbf16, #tpu.memory_space<vmem>>, %arg3: memref<64x128xbf16, #tpu.memory_space<vmem>>, %arg4: memref<1x2x128xf32, #tpu.memory_space<vmem>>) attributes {dimension_semantics = [#tpu.dimension_semantics<parallel>], iteration_bounds = array<i64: 2>, scalar_prefetch = 0 : i64, scratch_operands = 0 : i64, tpu.core_type = #tpu.core_type<tc>, window_params = [{transform_indices = @transform_0, window_bounds = array<i64: 64, 128>}, {pipeline_mode = #tpu.pipeline_mode<synchronous>, transform_indices = @transform_1, window_bounds = array<i64: 128, 128>}, {transform_indices = @transform_2, window_bounds = array<i64: 64, 128>}, {transform_indices = @transform_3, window_bounds = array<i64: 1, 2, 128>}]} {
    %c0 = arith.constant 0 : index
    %c0_0 = arith.constant 0 : index
    %0 = vector.load %arg1[%c0, %c0_0] : memref<64x128xbf16, #tpu.memory_space<vmem>>, vector<64x128xbf16>
    %c0_1 = arith.constant 0 : index
    %c0_2 = arith.constant 0 : index
    %1 = vector.load %arg2[%c0_1, %c0_2] : memref<128x128xbf16, #tpu.memory_space<vmem>>, vector<128x128xbf16>
    %cst = arith.constant dense<0.000000e+00> : vector<64x128xf32>
    %2 = tpu.matmul %0, %1, %cst {dimension_numbers = #tpu.dot_dimension_numbers<[1], [0], [0], [1], [0, 0, 1, 1], [], []>} : vector<64x128xbf16>, vector<128x128xbf16>, vector<64x128xf32> -> vector<64x128xf32>
    %cst_3 = arith.constant dense<0.000000e+00> : vector<128xf32>
    %3 = vector.multi_reduction <add>, %2, %cst_3 [0] : vector<64x128xf32> to vector<128xf32>
    %4 = vector.shape_cast %3 : vector<128xf32> to vector<1x128xf32>
    %5 = arith.mulf %2, %2 : vector<64x128xf32>
    %cst_4 = arith.constant dense<0.000000e+00> : vector<128xf32>
    %6 = vector.multi_reduction <add>, %5, %cst_4 [0] : vector<64x128xf32> to vector<128xf32>
    %7 = vector.shape_cast %6 : vector<128xf32> to vector<1x128xf32>
    %8 = tpu.concatenate %4, %7 in 0 : vector<1x128xf32>, vector<1x128xf32> -> vector<2x128xf32>
    %9 = vector.shape_cast %8 : vector<2x128xf32> to vector<1x2x128xf32>
    %c0_5 = arith.constant 0 : index
    %c0_6 = arith.constant 0 : index
    %c0_7 = arith.constant 0 : index
    %10 = vector.load %arg4[%c0_5, %c0_6, %c0_7] : memref<1x2x128xf32, #tpu.memory_space<vmem>>, vector<1x2x128xf32>
    tpu.vector_store %arg4[%c0_5, %c0_6, %c0_7], %9 {strides = array<i32>} : memref<1x2x128xf32, #tpu.memory_space<vmem>>, vector<1x2x128xf32>,
    %11 = arith.truncf %2 : vector<64x128xf32> to vector<64x128xbf16>
    %c0_8 = arith.constant 0 : index
    %c0_9 = arith.constant 0 : index
    %12 = vector.load %arg3[%c0_8, %c0_9] : memref<64x128xbf16, #tpu.memory_space<vmem>>, vector<64x128xbf16>
    tpu.vector_store %arg3[%c0_8, %c0_9], %11 {strides = array<i32>} : memref<64x128xbf16, #tpu.memory_space<vmem>>, vector<64x128xbf16>,
    return
  }
  func.func @transform_0(%arg0: i32) -> (i32, i32) {
    %c0_i32 = arith.constant 0 : i32
    %c0_i32_0 = arith.constant 0 : i32
    return %arg0, %c0_i32 : i32, i32
  }
  func.func @transform_1(%arg0: i32) -> (i32, i32) {
    %c0_i32 = arith.constant 0 : i32
    %c0_i32_0 = arith.constant 0 : i32
    %c0_i32_1 = arith.constant 0 : i32
    return %c0_i32, %c0_i32_0 : i32, i32
  }
  func.func @transform_2(%arg0: i32) -> (i32, i32) {
    %c0_i32 = arith.constant 0 : i32
    %c0_i32_0 = arith.constant 0 : i32
    return %arg0, %c0_i32 : i32, i32
  }
  func.func @transform_3(%arg0: i32) -> (i32, i32, i32) {
    %c0_i32 = arith.constant 0 : i32
    %c0_i32_0 = arith.constant 0 : i32
    %c0_i32_1 = arith.constant 0 : i32
    return %arg0, %c0_i32, %c0_i32_0 : i32, i32, i32
  }
}

module attributes {stable_mosaic.version = 11 : i64} {
  func.func @_bn_lrelu_kernel(%arg0: i32, %arg1: memref<64x128xbf16, #tpu.memory_space<vmem>>, %arg2: memref<1x128xf32, #tpu.memory_space<vmem>>, %arg3: memref<1x128xf32, #tpu.memory_space<vmem>>, %arg4: memref<64x128xbf16, #tpu.memory_space<vmem>>) attributes {dimension_semantics = [#tpu.dimension_semantics<parallel>], iteration_bounds = array<i64: 2>, scalar_prefetch = 0 : i64, scratch_operands = 0 : i64, tpu.core_type = #tpu.core_type<tc>, window_params = [{transform_indices = @transform_0, window_bounds = array<i64: 64, 128>}, {pipeline_mode = #tpu.pipeline_mode<synchronous>, transform_indices = @transform_1, window_bounds = array<i64: 1, 128>}, {pipeline_mode = #tpu.pipeline_mode<synchronous>, transform_indices = @transform_2, window_bounds = array<i64: 1, 128>}, {transform_indices = @transform_3, window_bounds = array<i64: 64, 128>}]} {
    %c0 = arith.constant 0 : index
    %c0_0 = arith.constant 0 : index
    %0 = vector.load %arg1[%c0, %c0_0] : memref<64x128xbf16, #tpu.memory_space<vmem>>, vector<64x128xbf16>
    %1 = arith.extf %0 : vector<64x128xbf16> to vector<64x128xf32>
    %c0_1 = arith.constant 0 : index
    %c0_2 = arith.constant 0 : index
    %2 = vector.load %arg2[%c0_1, %c0_2] : memref<1x128xf32, #tpu.memory_space<vmem>>, vector<1x128xf32>
    %3 = vector.broadcast %2 : vector<1x128xf32> to vector<64x128xf32>
    %4 = arith.mulf %1, %3 : vector<64x128xf32>
    %c0_3 = arith.constant 0 : index
    %c0_4 = arith.constant 0 : index
    %5 = vector.load %arg3[%c0_3, %c0_4] : memref<1x128xf32, #tpu.memory_space<vmem>>, vector<1x128xf32>
    %6 = vector.broadcast %5 : vector<1x128xf32> to vector<64x128xf32>
    %7 = arith.addf %4, %6 : vector<64x128xf32>
    %cst = arith.constant 2.000000e-01 : f32
    %8 = vector.broadcast %cst : f32 to vector<64x128xf32>
    %9 = arith.mulf %8, %7 : vector<64x128xf32>
    %10 = arith.maximumf %7, %9 : vector<64x128xf32>
    %11 = arith.truncf %10 : vector<64x128xf32> to vector<64x128xbf16>
    %c0_5 = arith.constant 0 : index
    %c0_6 = arith.constant 0 : index
    %12 = vector.load %arg4[%c0_5, %c0_6] : memref<64x128xbf16, #tpu.memory_space<vmem>>, vector<64x128xbf16>
    tpu.vector_store %arg4[%c0_5, %c0_6], %11 {strides = array<i32>} : memref<64x128xbf16, #tpu.memory_space<vmem>>, vector<64x128xbf16>,
    return
  }
  func.func @transform_0(%arg0: i32) -> (i32, i32) {
    %c0_i32 = arith.constant 0 : i32
    %c0_i32_0 = arith.constant 0 : i32
    return %arg0, %c0_i32 : i32, i32
  }
  func.func @transform_1(%arg0: i32) -> (i32, i32) {
    %c0_i32 = arith.constant 0 : i32
    %c0_i32_0 = arith.constant 0 : i32
    %c0_i32_1 = arith.constant 0 : i32
    return %c0_i32, %c0_i32_0 : i32, i32
  }
  func.func @transform_2(%arg0: i32) -> (i32, i32) {
    %c0_i32 = arith.constant 0 : i32
    %c0_i32_0 = arith.constant 0 : i32
    %c0_i32_1 = arith.constant 0 : i32
    return %c0_i32, %c0_i32_0 : i32, i32
  }
  func.func @transform_3(%arg0: i32) -> (i32, i32) {
    %c0_i32 = arith.constant 0 : i32
    %c0_i32_0 = arith.constant 0 : i32
    return %arg0, %c0_i32 : i32, i32
  }
}

module attributes {stable_mosaic.version = 11 : i64} {
  func.func @_conv_stats_kernel(%arg0: i32, %arg1: memref<16x256xbf16, #tpu.memory_space<vmem>>, %arg2: memref<256x128xbf16, #tpu.memory_space<vmem>>, %arg3: memref<16x128xbf16, #tpu.memory_space<vmem>>, %arg4: memref<1x2x128xf32, #tpu.memory_space<vmem>>) attributes {dimension_semantics = [#tpu.dimension_semantics<parallel>], iteration_bounds = array<i64: 2>, scalar_prefetch = 0 : i64, scratch_operands = 0 : i64, tpu.core_type = #tpu.core_type<tc>, window_params = [{transform_indices = @transform_0, window_bounds = array<i64: 16, 256>}, {pipeline_mode = #tpu.pipeline_mode<synchronous>, transform_indices = @transform_1, window_bounds = array<i64: 256, 128>}, {transform_indices = @transform_2, window_bounds = array<i64: 16, 128>}, {transform_indices = @transform_3, window_bounds = array<i64: 1, 2, 128>}]} {
    %c0 = arith.constant 0 : index
    %c0_0 = arith.constant 0 : index
    %0 = vector.load %arg1[%c0, %c0_0] : memref<16x256xbf16, #tpu.memory_space<vmem>>, vector<16x256xbf16>
    %c0_1 = arith.constant 0 : index
    %c0_2 = arith.constant 0 : index
    %1 = vector.load %arg2[%c0_1, %c0_2] : memref<256x128xbf16, #tpu.memory_space<vmem>>, vector<256x128xbf16>
    %cst = arith.constant dense<0.000000e+00> : vector<16x128xf32>
    %2 = tpu.matmul %0, %1, %cst {dimension_numbers = #tpu.dot_dimension_numbers<[1], [0], [0], [1], [0, 0, 1, 1], [], []>} : vector<16x256xbf16>, vector<256x128xbf16>, vector<16x128xf32> -> vector<16x128xf32>
    %cst_3 = arith.constant dense<0.000000e+00> : vector<128xf32>
    %3 = vector.multi_reduction <add>, %2, %cst_3 [0] : vector<16x128xf32> to vector<128xf32>
    %4 = vector.shape_cast %3 : vector<128xf32> to vector<1x128xf32>
    %5 = arith.mulf %2, %2 : vector<16x128xf32>
    %cst_4 = arith.constant dense<0.000000e+00> : vector<128xf32>
    %6 = vector.multi_reduction <add>, %5, %cst_4 [0] : vector<16x128xf32> to vector<128xf32>
    %7 = vector.shape_cast %6 : vector<128xf32> to vector<1x128xf32>
    %8 = tpu.concatenate %4, %7 in 0 : vector<1x128xf32>, vector<1x128xf32> -> vector<2x128xf32>
    %9 = vector.shape_cast %8 : vector<2x128xf32> to vector<1x2x128xf32>
    %c0_5 = arith.constant 0 : index
    %c0_6 = arith.constant 0 : index
    %c0_7 = arith.constant 0 : index
    %10 = vector.load %arg4[%c0_5, %c0_6, %c0_7] : memref<1x2x128xf32, #tpu.memory_space<vmem>>, vector<1x2x128xf32>
    tpu.vector_store %arg4[%c0_5, %c0_6, %c0_7], %9 {strides = array<i32>} : memref<1x2x128xf32, #tpu.memory_space<vmem>>, vector<1x2x128xf32>,
    %11 = arith.truncf %2 : vector<16x128xf32> to vector<16x128xbf16>
    %c0_8 = arith.constant 0 : index
    %c0_9 = arith.constant 0 : index
    %12 = vector.load %arg3[%c0_8, %c0_9] : memref<16x128xbf16, #tpu.memory_space<vmem>>, vector<16x128xbf16>
    tpu.vector_store %arg3[%c0_8, %c0_9], %11 {strides = array<i32>} : memref<16x128xbf16, #tpu.memory_space<vmem>>, vector<16x128xbf16>,
    return
  }
  func.func @transform_0(%arg0: i32) -> (i32, i32) {
    %c0_i32 = arith.constant 0 : i32
    %c0_i32_0 = arith.constant 0 : i32
    return %arg0, %c0_i32 : i32, i32
  }
  func.func @transform_1(%arg0: i32) -> (i32, i32) {
    %c0_i32 = arith.constant 0 : i32
    %c0_i32_0 = arith.constant 0 : i32
    %c0_i32_1 = arith.constant 0 : i32
    return %c0_i32, %c0_i32_0 : i32, i32
  }
  func.func @transform_2(%arg0: i32) -> (i32, i32) {
    %c0_i32 = arith.constant 0 : i32
    %c0_i32_0 = arith.constant 0 : i32
    return %arg0, %c0_i32 : i32, i32
  }
  func.func @transform_3(%arg0: i32) -> (i32, i32, i32) {
    %c0_i32 = arith.constant 0 : i32
    %c0_i32_0 = arith.constant 0 : i32
    %c0_i32_1 = arith.constant 0 : i32
    return %arg0, %c0_i32, %c0_i32_0 : i32, i32, i32
  }
}

module attributes {stable_mosaic.version = 11 : i64} {
  func.func @_bn_lrelu_kernel(%arg0: i32, %arg1: memref<16x128xbf16, #tpu.memory_space<vmem>>, %arg2: memref<1x128xf32, #tpu.memory_space<vmem>>, %arg3: memref<1x128xf32, #tpu.memory_space<vmem>>, %arg4: memref<16x128xbf16, #tpu.memory_space<vmem>>) attributes {dimension_semantics = [#tpu.dimension_semantics<parallel>], iteration_bounds = array<i64: 2>, scalar_prefetch = 0 : i64, scratch_operands = 0 : i64, tpu.core_type = #tpu.core_type<tc>, window_params = [{transform_indices = @transform_0, window_bounds = array<i64: 16, 128>}, {pipeline_mode = #tpu.pipeline_mode<synchronous>, transform_indices = @transform_1, window_bounds = array<i64: 1, 128>}, {pipeline_mode = #tpu.pipeline_mode<synchronous>, transform_indices = @transform_2, window_bounds = array<i64: 1, 128>}, {transform_indices = @transform_3, window_bounds = array<i64: 16, 128>}]} {
    %c0 = arith.constant 0 : index
    %c0_0 = arith.constant 0 : index
    %0 = vector.load %arg1[%c0, %c0_0] : memref<16x128xbf16, #tpu.memory_space<vmem>>, vector<16x128xbf16>
    %1 = arith.extf %0 : vector<16x128xbf16> to vector<16x128xf32>
    %c0_1 = arith.constant 0 : index
    %c0_2 = arith.constant 0 : index
    %2 = vector.load %arg2[%c0_1, %c0_2] : memref<1x128xf32, #tpu.memory_space<vmem>>, vector<1x128xf32>
    %3 = vector.broadcast %2 : vector<1x128xf32> to vector<16x128xf32>
    %4 = arith.mulf %1, %3 : vector<16x128xf32>
    %c0_3 = arith.constant 0 : index
    %c0_4 = arith.constant 0 : index
    %5 = vector.load %arg3[%c0_3, %c0_4] : memref<1x128xf32, #tpu.memory_space<vmem>>, vector<1x128xf32>
    %6 = vector.broadcast %5 : vector<1x128xf32> to vector<16x128xf32>
    %7 = arith.addf %4, %6 : vector<16x128xf32>
    %cst = arith.constant 2.000000e-01 : f32
    %8 = vector.broadcast %cst : f32 to vector<16x128xf32>
    %9 = arith.mulf %8, %7 : vector<16x128xf32>
    %10 = arith.maximumf %7, %9 : vector<16x128xf32>
    %11 = arith.truncf %10 : vector<16x128xf32> to vector<16x128xbf16>
    %c0_5 = arith.constant 0 : index
    %c0_6 = arith.constant 0 : index
    %12 = vector.load %arg4[%c0_5, %c0_6] : memref<16x128xbf16, #tpu.memory_space<vmem>>, vector<16x128xbf16>
    tpu.vector_store %arg4[%c0_5, %c0_6], %11 {strides = array<i32>} : memref<16x128xbf16, #tpu.memory_space<vmem>>, vector<16x128xbf16>,
    return
  }
  func.func @transform_0(%arg0: i32) -> (i32, i32) {
    %c0_i32 = arith.constant 0 : i32
    %c0_i32_0 = arith.constant 0 : i32
    return %arg0, %c0_i32 : i32, i32
  }
  func.func @transform_1(%arg0: i32) -> (i32, i32) {
    %c0_i32 = arith.constant 0 : i32
    %c0_i32_0 = arith.constant 0 : i32
    %c0_i32_1 = arith.constant 0 : i32
    return %c0_i32, %c0_i32_0 : i32, i32
  }
  func.func @transform_2(%arg0: i32) -> (i32, i32) {
    %c0_i32 = arith.constant 0 : i32
    %c0_i32_0 = arith.constant 0 : i32
    %c0_i32_1 = arith.constant 0 : i32
    return %c0_i32, %c0_i32_0 : i32, i32
  }
  func.func @transform_3(%arg0: i32) -> (i32, i32) {
    %c0_i32 = arith.constant 0 : i32
    %c0_i32_0 = arith.constant 0 : i32
    return %arg0, %c0_i32 : i32, i32
  }
}

module attributes {stable_mosaic.version = 11 : i64} {
  func.func @_matmul_kernel(%arg0: i32, %arg1: memref<8x512xbf16, #tpu.memory_space<vmem>>, %arg2: memref<512x128xbf16, #tpu.memory_space<vmem>>, %arg3: memref<8x128xf32, #tpu.memory_space<vmem>>) attributes {dimension_semantics = [#tpu.dimension_semantics<parallel>], iteration_bounds = array<i64: 1>, scalar_prefetch = 0 : i64, scratch_operands = 0 : i64, tpu.core_type = #tpu.core_type<tc>, window_params = [{transform_indices = @transform_0, window_bounds = array<i64: 8, 512>}, {pipeline_mode = #tpu.pipeline_mode<synchronous>, transform_indices = @transform_1, window_bounds = array<i64: 512, 128>}, {transform_indices = @transform_2, window_bounds = array<i64: 8, 128>}]} {
    %c0 = arith.constant 0 : index
    %c0_0 = arith.constant 0 : index
    %0 = vector.load %arg1[%c0, %c0_0] : memref<8x512xbf16, #tpu.memory_space<vmem>>, vector<8x512xbf16>
    %c0_1 = arith.constant 0 : index
    %c0_2 = arith.constant 0 : index
    %1 = vector.load %arg2[%c0_1, %c0_2] : memref<512x128xbf16, #tpu.memory_space<vmem>>, vector<512x128xbf16>
    %cst = arith.constant dense<0.000000e+00> : vector<8x128xf32>
    %2 = tpu.matmul %0, %1, %cst {dimension_numbers = #tpu.dot_dimension_numbers<[1], [0], [0], [1], [0, 0, 1, 1], [], []>} : vector<8x512xbf16>, vector<512x128xbf16>, vector<8x128xf32> -> vector<8x128xf32>
    %c0_3 = arith.constant 0 : index
    %c0_4 = arith.constant 0 : index
    %3 = vector.load %arg3[%c0_3, %c0_4] : memref<8x128xf32, #tpu.memory_space<vmem>>, vector<8x128xf32>
    tpu.vector_store %arg3[%c0_3, %c0_4], %2 {strides = array<i32>} : memref<8x128xf32, #tpu.memory_space<vmem>>, vector<8x128xf32>,
    return
  }
  func.func @transform_0(%arg0: i32) -> (i32, i32) {
    %c0_i32 = arith.constant 0 : i32
    %c0_i32_0 = arith.constant 0 : i32
    return %arg0, %c0_i32 : i32, i32
  }
  func.func @transform_1(%arg0: i32) -> (i32, i32) {
    %c0_i32 = arith.constant 0 : i32
    %c0_i32_0 = arith.constant 0 : i32
    %c0_i32_1 = arith.constant 0 : i32
    return %c0_i32, %c0_i32_0 : i32, i32
  }
  func.func @transform_2(%arg0: i32) -> (i32, i32) {
    %c0_i32 = arith.constant 0 : i32
    %c0_i32_0 = arith.constant 0 : i32
    return %arg0, %c0_i32 : i32, i32
  }
}

</mosaic_0001>

<llo_original>
// kernel: netd32_forward.8
$region0: #{netd32_forward.8}
  #allocation0 [shape = 'u32[]', space=smem, size = 0x4, offset = 0x4, fixed_abs, tag = 'smem constant byte address 0x4 - core index']
  #allocation1 [shape = 'u32[144,128]{1,0:T(1,128)}', space=vmem, size = 0x12000, scoped, tag = 'internal scratch']
  %s0 = inlined_call_operand.vmem [shape: bf16[512,128], index: 0, kind: input, shape index: {}]
  %s1 = inlined_call_operand.vmem [shape: f32[1,128], index: 1, kind: input, shape index: {}]
  %s2 = inlined_call_operand.vmem [shape: f32[1,128], index: 2, kind: input, shape index: {}]
  %s3 = inlined_call_operand.vmem [shape: bf16[512,128], index: 3, kind: output, shape index: {}]
  %s4 = sld [smem:[#allocation0]]
  $region45: #{netd32_forward.8} parent=0
    _
  %s6 = ssub.s32 1, %s4
  %s7 = scalar_select 0, %s6, %s4
  loop: start=0, step=1, limit=4
  $region2: #{netd32_forward.8} parent=0 // loop_pre_header
    _
  $region3: #{netd32_forward.8} parent=0 // loop_header
    %s9 = sphi 0, %s13
    %p10 = scmp.ge.s32.totalorder %s9, 4
    %s19 = sphi 0, %s21
    %s22 = sphi 0, %s19
    %s23 = sphi 0, %s22
    %s39 = sphi 0, %s23
    %s43 = sphi 0, %s43
    %s45 = sphi 0, %s43
    %s46 = sphi 0, %s45
    %s60 = sphi 0, %s46
    %s64 = sphi 0, %s64
    %s66 = sphi 0, %s64
    %s67 = sphi 0, %s66
    %s81 = sphi 0, %s67
    %s87 = sphi 0, %s89
    %s90 = sphi 0, %s87
    %s91 = sphi 0, %s90
    %s107 = sphi 0, %s91
  $region4: #{netd32_forward.8} parent=0 // loop_header_branch
    %12 = sbr.rel (%p10) target = $region8
  $region5: #{netd32_forward.8} parent=0 // loop_body
    %s14 = ssub.s32 %s9, 1
    %s15 = ssub.s32 %s9, 2
    %s16 = sadd.s32 %s9, 1
    %s17 = ssub.s32 %s9, %s16
    %p18 = scmp.eq.s32.totalorder %s17, 0
    %s20 = sadd.s32 %s19, 1
    %s21 = scalar_select %p18, %s19, %s20
    %p24 = pneg %p18
    %p25 = scmp.eq.s32.totalorder %s9, 1
    %p26 = por %p24, %p25
    %p27 = scmp.ne.s32.totalorder %s19, %s22
    %p28 = scmp.eq.s32.totalorder %s9, 0
    %p29 = por %p27, %p28
    %p30 = scmp.ne.s32.totalorder %s19, %s22
    %p31 = scmp.eq.s32.totalorder %s14, 1
    %p32 = por %p30, %p31
    %p33 = scmp.ne.s32.totalorder %s22, %s23
    %p34 = scmp.eq.s32.totalorder %s14, 0
    %p35 = por %p33, %p34
    %p36 = scmp.ne.s32.totalorder %s22, %s23
    %p37 = scmp.eq.s32.totalorder %s15, 1
    %p38 = por %p36, %p37
    %p40 = scmp.ne.s32.totalorder %s23, %s39
    %p41 = scmp.eq.s32.totalorder %s15, 0
    %p42 = por %p40, %p41
    %s44 = sadd.s32 %s43, 1
    %p47 = scmp.eq.s32.totalorder %s9, 1
    %p48 = scmp.ne.s32.totalorder %s43, %s45
    %p49 = scmp.eq.s32.totalorder %s9, 0
    %p50 = por %p48, %p49
    %p51 = scmp.ne.s32.totalorder %s43, %s45
    %p52 = scmp.eq.s32.totalorder %s14, 1
    %p53 = por %p51, %p52
    %p54 = scmp.ne.s32.totalorder %s45, %s46
    %p55 = scmp.eq.s32.totalorder %s14, 0
    %p56 = por %p54, %p55
    %p57 = scmp.ne.s32.totalorder %s45, %s46
    %p58 = scmp.eq.s32.totalorder %s15, 1
    %p59 = por %p57, %p58
    %p61 = scmp.ne.s32.totalorder %s46, %s60
    %p62 = scmp.eq.s32.totalorder %s15, 0
    %p63 = por %p61, %p62
    %s65 = sadd.s32 %s64, 1
    %p68 = scmp.eq.s32.totalorder %s9, 1
    %p69 = scmp.ne.s32.totalorder %s64, %s66
    %p70 = scmp.eq.s32.totalorder %s9, 0
    %p71 = por %p69, %p70
    %p72 = scmp.ne.s32.totalorder %s64, %s66
    %p73 = scmp.eq.s32.totalorder %s14, 1
    %p74 = por %p72, %p73
    %p75 = scmp.ne.s32.totalorder %s66, %s67
    %p76 = scmp.eq.s32.totalorder %s14, 0
    %p77 = por %p75, %p76
    %p78 = scmp.ne.s32.totalorder %s66, %s67
    %p79 = scmp.eq.s32.totalorder %s15, 1
    %p80 = por %p78, %p79
    %p82 = scmp.ne.s32.totalorder %s67, %s81
    %p83 = scmp.eq.s32.totalorder %s15, 0
    %p84 = por %p82, %p83
    %s85 = ssub.s32 %s9, %s16
    %p86 = scmp.eq.s32.totalorder %s85, 0
    %s88 = sadd.s32 %s87, 1
    %s89 = scalar_select %p86, %s87, %s88
    %p92 = pneg %p86
    %p93 = scmp.eq.s32.totalorder %s9, 1
    %p94 = por %p92, %p93
    %p95 = scmp.ne.s32.totalorder %s87, %s90
    %p96 = scmp.eq.s32.totalorder %s9, 0
    %p97 = por %p95, %p96
    %p98 = scmp.ne.s32.totalorder %s87, %s90
    %p99 = scmp.eq.s32.totalorder %s14, 1
    %p100 = por %p98, %p99
    %p101 = scmp.ne.s32.totalorder %s90, %s91
    %p102 = scmp.eq.s32.totalorder %s14, 0
    %p103 = por %p101, %p102
    %p104 = scmp.ne.s32.totalorder %s90, %s91
    %p105 = scmp.eq.s32.totalorder %s15, 1
    %p106 = por %p104, %p105
    %p108 = scmp.ne.s32.totalorder %s91, %s107
    %p109 = scmp.eq.s32.totalorder %s15, 0
    %p110 = por %p108, %p109
    %p111 = scmp.le.s32.totalorder 1, %s9
    %p112 = scmp.lt.s32.totalorder %s9, 3
    %p113 = pnand %p111, %p112
    %p114 = pneg %p113
    // Predicated region
    $region9: #{netd32_forward.8} parent=5 // pred_check
      _
    $region10: #{netd32_forward.8} parent=5 // pred_check_branch
      %116 = sbr.rel (%p113) target = $region12
    $region11: #{netd32_forward.8} parent=5 // pred_region
      %s117 = ssub.s32 %s9, 1
      // Predicated region
      $region13: #{netd32_forward.8} parent=11 // pred_check
        %p118 = pneg %p56
      $region14: #{netd32_forward.8} parent=11 // pred_check_branch
        %120 = sbr.rel (%p118) target = $region16
      $region15: #{netd32_forward.8} parent=11 // pred_region
        _
      $region16: #{netd32_forward.8} parent=11 // pred_fallthru
        _
      // Predicated region
      $region17: #{netd32_forward.8} parent=11 // pred_check
        %p121 = pneg %p77
      $region18: #{netd32_forward.8} parent=11 // pred_check_branch
        %123 = sbr.rel (%p121) target = $region20
      $region19: #{netd32_forward.8} parent=11 // pred_region
        _
      $region20: #{netd32_forward.8} parent=11 // pred_fallthru
        _
    $region12: #{netd32_forward.8} parent=5 // pred_fallthru
      _
    %p124 = scmp.lt.s32.totalorder %s9, 2
    // Predicated region
    $region21: #{netd32_forward.8} parent=5 // pred_check
      %p125 = pneg %p124
    $region22: #{netd32_forward.8} parent=5 // pred_check_branch
      %127 = sbr.rel (%p125) target = $region24
    $region23: #{netd32_forward.8} parent=5 // pred_region
      // Predicated region
      $region25: #{netd32_forward.8} parent=23 // pred_check
        %p128 = pneg %p29
      $region26: #{netd32_forward.8} parent=23 // pred_check_branch
        %130 = sbr.rel (%p128) target = $region28
      $region27: #{netd32_forward.8} parent=23 // pred_region
        %s131 = smul.u32 32, %s9
        %p132 = scmp.lt.s32.totalorder %s131, 63
        %s133 = scalar_select %p132, %s131, 63
        %s134 = smul.addr %s133, 4
        %s135 = scalar_lea.vmem %s0, %s134
        %s136 = smul.u32 32, %s9
      $region28: #{netd32_forward.8} parent=23 // pred_fallthru
        _
    $region24: #{netd32_forward.8} parent=5 // pred_fallthru
      _
    %p137 = scmp.le.s32.totalorder 1, %s9
    %p138 = scmp.lt.s32.totalorder %s9, 3
    %p139 = pnand %p137, %p138
    %p140 = pneg %p139
    // Predicated region
    $region29: #{netd32_forward.8} parent=5 // pred_check
      _
    $region30: #{netd32_forward.8} parent=5 // pred_check_branch
      %142 = sbr.rel (%p139) target = $region32
    $region31: #{netd32_forward.8} parent=5 // pred_region
      %s143 = ssub.s32 %s9, 1
      %s144 = smul.u32 32, %s14
      %p145 = scmp.lt.s32.totalorder %s144, 63
      %s146 = scalar_select %p145, %s144, 63
      %s147 = smul.addr %s146, 4
      %s148 = scalar_lea.vmem %s0, %s147
      %p149 = pneg %p35
      %p150 = pneg %p32
      %p151 = pneg %p56
      %p152 = pneg %p53
      %p153 = pneg %p77
      %p154 = pneg %p74
      %p155 = pneg %p103
      %p156 = pneg %p100
      %s157 = smul.u32 32, %s14
      %p158 = scmp.lt.s32.totalorder %s157, 63
      %s159 = scalar_select %p158, %s157, 63
      %s160 = smul.addr %s159, 4
      %s161 = scalar_lea.vmem %s3, %s160
      %s162 = smul.u32 32, %s14
      %p163 = scmp.lt.s32.totalorder %s162, 63
      %s164 = scalar_select %p163, %s162, 63
      %s165 = smul.addr %s164, 4
      %s166 = scalar_lea.vmem %s0, %s165
      %s167 = smul.u32 32, %s14
      %s168 = smul.u32 32, %s14
      %p169 = scmp.lt.s32.totalorder %s168, 63
      %s170 = scalar_select %p169, %s168, 63
      %s171 = smul.addr %s170, 4
      %s172 = scalar_lea.vmem %s3, %s171
      %s173 = smul.u32 32, %s14
      %v174 = vld [vmem:[%s166] sm:$0xf]
      %v175 = vld [vmem:[%s166 + $0x4] sm:$0xf]
      %v176 = vld [vmem:[%s166 + $0x8] sm:$0xf]
      %v177 = vld [vmem:[%s166 + $0xc] sm:$0xf]
      %v178 = vld [vmem:[%s166 + $0x10] sm:$0xf]
      %v179 = vld [vmem:[%s166 + $0x14] sm:$0xf]
      %v180 = vld [vmem:[%s166 + $0x18] sm:$0xf]
      %v181 = vld [vmem:[%s166 + $0x1c] sm:$0xf]
      %v182 = vld [vmem:[%s166 + $0x20] sm:$0xf]
      %v183 = vld [vmem:[%s166 + $0x24] sm:$0xf]
      %v184 = vld [vmem:[%s166 + $0x28] sm:$0xf]
      %v185 = vld [vmem:[%s166 + $0x2c] sm:$0xf]
      %v186 = vld [vmem:[%s166 + $0x30] sm:$0xf]
      %v187 = vld [vmem:[%s166 + $0x34] sm:$0xf]
      %v188 = vld [vmem:[%s166 + $0x38] sm:$0xf]
      %v189 = vld [vmem:[%s166 + $0x3c] sm:$0xf]
      %v190 = vld [vmem:[%s166 + $0x40] sm:$0xf]
      %v191 = vld [vmem:[%s166 + $0x44] sm:$0xf]
      %v192 = vld [vmem:[%s166 + $0x48] sm:$0xf]
      %v193 = vld [vmem:[%s166 + $0x4c] sm:$0xf]
      %v194 = vld [vmem:[%s166 + $0x50] sm:$0xf]
      %v195 = vld [vmem:[%s166 + $0x54] sm:$0xf]
      %v196 = vld [vmem:[%s166 + $0x58] sm:$0xf]
      %v197 = vld [vmem:[%s166 + $0x5c] sm:$0xf]
      %v198 = vld [vmem:[%s166 + $0x60] sm:$0xf]
      %v199 = vld [vmem:[%s166 + $0x64] sm:$0xf]
      %v200 = vld [vmem:[%s166 + $0x68] sm:$0xf]
      %v201 = vld [vmem:[%s166 + $0x6c] sm:$0xf]
      %v202 = vld [vmem:[%s166 + $0x70] sm:$0xf]
      %v203 = vld [vmem:[%s166 + $0x74] sm:$0xf]
      %v204 = vld [vmem:[%s166 + $0x78] sm:$0xf]
      %v205 = vld [vmem:[%s166 + $0x7c] sm:$0xf]
      %v206 = vunpack.c.l.bf16 %v174
      %v207 = vunpack.c.l.bf16 %v175
      %v208 = vunpack.c.l.bf16 %v176
      %v209 = vunpack.c.l.bf16 %v177
      %v210 = vunpack.c.l.bf16 %v178
      %v211 = vunpack.c.l.bf16 %v179
      %v212 = vunpack.c.l.bf16 %v180
      %v213 = vunpack.c.l.bf16 %v181
      %v214 = vunpack.c.l.bf16 %v182
      %v215 = vunpack.c.l.bf16 %v183
      %v216 = vunpack.c.l.bf16 %v184
      %v217 = vunpack.c.l.bf16 %v185
      %v218 = vunpack.c.l.bf16 %v186
      %v219 = vunpack.c.l.bf16 %v187
      %v220 = vunpack.c.l.bf16 %v188
      %v221 = vunpack.c.l.bf16 %v189
      %v222 = vunpack.c.l.bf16 %v190
      %v223 = vunpack.c.l.bf16 %v191
      %v224 = vunpack.c.l.bf16 %v192
      %v225 = vunpack.c.l.bf16 %v193
      %v226 = vunpack.c.l.bf16 %v194
      %v227 = vunpack.c.l.bf16 %v195
      %v228 = vunpack.c.l.bf16 %v196
      %v229 = vunpack.c.l.bf16 %v197
      %v230 = vunpack.c.l.bf16 %v198
      %v231 = vunpack.c.l.bf16 %v199
      %v232 = vunpack.c.l.bf16 %v200
      %v233 = vunpack.c.l.bf16 %v201
      %v234 = vunpack.c.l.bf16 %v202
      %v235 = vunpack.c.l.bf16 %v203
      %v236 = vunpack.c.l.bf16 %v204
      %v237 = vunpack.c.l.bf16 %v205
      %v238 = vld [vmem:[%s1] sm:$0x1]
      %v240 = vlaneseq
      %v241 = vshrl.u32 %v240, 7
      %v242 = vsub.s32 0, %v241
      %v243 = vrot.slane %v238, %v242
      %v245 = vmul.f32 %v206, %v243
      %v246 = vmul.f32 %v207, %v243
      %v247 = vmul.f32 %v208, %v243
      %v248 = vmul.f32 %v209, %v243
      %v249 = vmul.f32 %v210, %v243
      %v250 = vmul.f32 %v211, %v243
      %v251 = vmul.f32 %v212, %v243
      %v252 = vmul.f32 %v213, %v243
      %v253 = vmul.f32 %v214, %v243
      %v254 = vmul.f32 %v215, %v243
      %v255 = vmul.f32 %v216, %v243
      %v256 = vmul.f32 %v217, %v243
      %v257 = vmul.f32 %v218, %v243
      %v258 = vmul.f32 %v219, %v243
      %v259 = vmul.f32 %v220, %v243
      %v260 = vmul.f32 %v221, %v243
      %v261 = vmul.f32 %v222, %v243
      %v262 = vmul.f32 %v223, %v243
      %v263 = vmul.f32 %v224, %v243
      %v264 = vmul.f32 %v225, %v243
      %v265 = vmul.f32 %v226, %v243
      %v266 = vmul.f32 %v227, %v243
      %v267 = vmul.f32 %v228, %v243
      %v268 = vmul.f32 %v229, %v243
      %v269 = vmul.f32 %v230, %v243
      %v270 = vmul.f32 %v231, %v243
      %v271 = vmul.f32 %v232, %v243
      %v272 = vmul.f32 %v233, %v243
      %v273 = vmul.f32 %v234, %v243
      %v274 = vmul.f32 %v235, %v243
      %v275 = vmul.f32 %v236, %v243
      %v276 = vmul.f32 %v237, %v243
      %v277 = vld [vmem:[%s2] sm:$0x1]
      %v279 = vlaneseq
      %v280 = vshrl.u32 %v279, 7
      %v281 = vsub.s32 0, %v280
      %v282 = vrot.slane %v277, %v281
      %v284 = vadd.f32 %v245, %v282
      %v285 = vadd.f32 %v246, %v282
      %v286 = vadd.f32 %v247, %v282
      %v287 = vadd.f32 %v248, %v282
      %v288 = vadd.f32 %v249, %v282
      %v289 = vadd.f32 %v250, %v282
      %v290 = vadd.f32 %v251, %v282
      %v291 = vadd.f32 %v252, %v282
      %v292 = vadd.f32 %v253, %v282
      %v293 = vadd.f32 %v254, %v282
      %v294 = vadd.f32 %v255, %v282
      %v295 = vadd.f32 %v256, %v282
      %v296 = vadd.f32 %v257, %v282
      %v297 = vadd.f32 %v258, %v282
      %v298 = vadd.f32 %v259, %v282
      %v299 = vadd.f32 %v260, %v282
      %v300 = vadd.f32 %v261, %v282
      %v301 = vadd.f32 %v262, %v282
      %v302 = vadd.f32 %v263, %v282
      %v303 = vadd.f32 %v264, %v282
      %v304 = vadd.f32 %v265, %v282
      %v305 = vadd.f32 %v266, %v282
      %v306 = vadd.f32 %v267, %v282
      %v307 = vadd.f32 %v268, %v282
      %v308 = vadd.f32 %v269, %v282
      %v309 = vadd.f32 %v270, %v282
      %v310 = vadd.f32 %v271, %v282
      %v311 = vadd.f32 %v272, %v282
      %v312 = vadd.f32 %v273, %v282
      %v313 = vadd.f32 %v274, %v282
      %v314 = vadd.f32 %v275, %v282
      %v315 = vadd.f32 %v276, %v282
      %v316 = vmul.f32 %v284, 0.2
      %v317 = vmul.f32 %v285, 0.2
      %v318 = vmul.f32 %v286, 0.2
      %v319 = vmul.f32 %v287, 0.2
      %v320 = vmul.f32 %v288, 0.2
      %v321 = vmul.f32 %v289, 0.2
      %v322 = vmul.f32 %v290, 0.2
      %v323 = vmul.f32 %v291, 0.2
      %v324 = vmul.f32 %v292, 0.2
      %v325 = vmul.f32 %v293, 0.2
      %v326 = vmul.f32 %v294, 0.2
      %v327 = vmul.f32 %v295, 0.2
      %v328 = vmul.f32 %v296, 0.2
      %v329 = vmul.f32 %v297, 0.2
      %v330 = vmul.f32 %v298, 0.2
      %v331 = vmul.f32 %v299, 0.2
      %v332 = vmul.f32 %v300, 0.2
      %v333 = vmul.f32 %v301, 0.2
      %v334 = vmul.f32 %v302, 0.2
      %v335 = vmul.f32 %v303, 0.2
      %v336 = vmul.f32 %v304, 0.2
      %v337 = vmul.f32 %v305, 0.2
      %v338 = vmul.f32 %v306, 0.2
      %v339 = vmul.f32 %v307, 0.2
      %v340 = vmul.f32 %v308, 0.2
      %v341 = vmul.f32 %v309, 0.2
      %v342 = vmul.f32 %v310, 0.2
      %v343 = vmul.f32 %v311, 0.2
      %v344 = vmul.f32 %v312, 0.2
      %v345 = vmul.f32 %v313, 0.2
      %v346 = vmul.f32 %v314, 0.2
      %v347 = vmul.f32 %v315, 0.2
      %v348 = vmax.f32 %v284, %v316
      %v349 = vmax.f32 %v285, %v317
      %v350 = vmax.f32 %v286, %v318
      %v351 = vmax.f32 %v287, %v319
      %v352 = vmax.f32 %v288, %v320
      %v353 = vmax.f32 %v289, %v321
      %v354 = vmax.f32 %v290, %v322
      %v355 = vmax.f32 %v291, %v323
      %v356 = vmax.f32 %v292, %v324
      %v357 = vmax.f32 %v293, %v325
      %v358 = vmax.f32 %v294, %v326
      %v359 = vmax.f32 %v295, %v327
      %v360 = vmax.f32 %v296, %v328
      %v361 = vmax.f32 %v297, %v329
      %v362 = vmax.f32 %v298, %v330
      %v363 = vmax.f32 %v299, %v331
      %v364 = vmax.f32 %v300, %v332
      %v365 = vmax.f32 %v301, %v333
      %v366 = vmax.f32 %v302, %v334
      %v367 = vmax.f32 %v303, %v335
      %v368 = vmax.f32 %v304, %v336
      %v369 = vmax.f32 %v305, %v337
      %v370 = vmax.f32 %v306, %v338
      %v371 = vmax.f32 %v307, %v339
      %v372 = vmax.f32 %v308, %v340
      %v373 = vmax.f32 %v309, %v341
      %v374 = vmax.f32 %v310, %v342
      %v375 = vmax.f32 %v311, %v343
      %v376 = vmax.f32 %v312, %v344
      %v377 = vmax.f32 %v313, %v345
      %v378 = vmax.f32 %v314, %v346
      %v379 = vmax.f32 %v315, %v347
      %v380 = vpack.c.bf16 %v349, %v348
      %v381 = vpack.c.bf16 %v351, %v350
      %v382 = vpack.c.bf16 %v353, %v352
      %v383 = vpack.c.bf16 %v355, %v354
      %v384 = vpack.c.bf16 %v357, %v356
      %v385 = vpack.c.bf16 %v359, %v358
      %v386 = vpack.c.bf16 %v361, %v360
      %v387 = vpack.c.bf16 %v363, %v362
      %v388 = vpack.c.bf16 %v365, %v364
      %v389 = vpack.c.bf16 %v367, %v366
      %v390 = vpack.c.bf16 %v369, %v368
      %v391 = vpack.c.bf16 %v371, %v370
      %v392 = vpack.c.bf16 %v373, %v372
      %v393 = vpack.c.bf16 %v375, %v374
      %v394 = vpack.c.bf16 %v377, %v376
      %v395 = vpack.c.bf16 %v379, %v378
      %v412 = vunpack.c.l.b16 %v380
      %v413 = vunpack.c.h.b16 %v380
      %v414 = vunpack.c.l.b16 %v381
      %v415 = vunpack.c.h.b16 %v381
      %v416 = vunpack.c.l.b16 %v382
      %v417 = vunpack.c.h.b16 %v382
      %v418 = vunpack.c.l.b16 %v383
      %v419 = vunpack.c.h.b16 %v383
      %v420 = vunpack.c.l.b16 %v384
      %v421 = vunpack.c.h.b16 %v384
      %v422 = vunpack.c.l.b16 %v385
      %v423 = vunpack.c.h.b16 %v385
      %v424 = vunpack.c.l.b16 %v386
      %v425 = vunpack.c.h.b16 %v386
      %v426 = vunpack.c.l.b16 %v387
      %v427 = vunpack.c.h.b16 %v387
      %v428 = vunpack.c.l.b16 %v388
      %v429 = vunpack.c.h.b16 %v388
      %v430 = vunpack.c.l.b16 %v389
      %v431 = vunpack.c.h.b16 %v389
      %v432 = vunpack.c.l.b16 %v390
      %v433 = vunpack.c.h.b16 %v390
      %v434 = vunpack.c.l.b16 %v391
      %v435 = vunpack.c.h.b16 %v391
      %v436 = vunpack.c.l.b16 %v392
      %v437 = vunpack.c.h.b16 %v392
      %v438 = vunpack.c.l.b16 %v393
      %v439 = vunpack.c.h.b16 %v393
      %v440 = vunpack.c.l.b16 %v394
      %v441 = vunpack.c.h.b16 %v394
      %v442 = vunpack.c.l.b16 %v395
      %v443 = vunpack.c.h.b16 %v395
      %v444 = vpack.c.b16 %v412, %v412
      %v445 = vpack.c.b16 %v413, %v413
      %v446 = vpack.c.b16 %v414, %v414
      %v447 = vpack.c.b16 %v415, %v415
      %v448 = vpack.c.b16 %v416, %v416
      %v449 = vpack.c.b16 %v417, %v417
      %v450 = vpack.c.b16 %v418, %v418
      %v451 = vpack.c.b16 %v419, %v419
      %v452 = vpack.c.b16 %v420, %v420
      %v453 = vpack.c.b16 %v421, %v421
      %v454 = vpack.c.b16 %v422, %v422
      %v455 = vpack.c.b16 %v423, %v423
      %v456 = vpack.c.b16 %v424, %v424
      %v457 = vpack.c.b16 %v425, %v425
      %v458 = vpack.c.b16 %v426, %v426
      %v459 = vpack.c.b16 %v427, %v427
      %v460 = vpack.c.b16 %v428, %v428
      %v461 = vpack.c.b16 %v429, %v429
      %v462 = vpack.c.b16 %v430, %v430
      %v463 = vpack.c.b16 %v431, %v431
      %v464 = vpack.c.b16 %v432, %v432
      %v465 = vpack.c.b16 %v433, %v433
      %v466 = vpack.c.b16 %v434, %v434
      %v467 = vpack.c.b16 %v435, %v435
      %v468 = vpack.c.b16 %v436, %v436
      %v469 = vpack.c.b16 %v437, %v437
      %v470 = vpack.c.b16 %v438, %v438
      %v471 = vpack.c.b16 %v439, %v439
      %v472 = vpack.c.b16 %v440, %v440
      %v473 = vpack.c.b16 %v441, %v441
      %v474 = vpack.c.b16 %v442, %v442
      %v475 = vpack.c.b16 %v443, %v443
      %508 = vst [vmem:[%s172] sm:$0xf] %v444
      %509 = vst [vmem:[%s172 + $0x4] sm:$0xf] %v445
      %510 = vst [vmem:[%s172 + $0x8] sm:$0xf] %v446
      %511 = vst [vmem:[%s172 + $0xc] sm:$0xf] %v447
      %512 = vst [vmem:[%s172 + $0x10] sm:$0xf] %v448
      %513 = vst [vmem:[%s172 + $0x14] sm:$0xf] %v449
      %514 = vst [vmem:[%s172 + $0x18] sm:$0xf] %v450
      %515 = vst [vmem:[%s172 + $0x1c] sm:$0xf] %v451
      %516 = vst [vmem:[%s172 + $0x20] sm:$0xf] %v452
      %517 = vst [vmem:[%s172 + $0x24] sm:$0xf] %v453
      %518 = vst [vmem:[%s172 + $0x28] sm:$0xf] %v454
      %519 = vst [vmem:[%s172 + $0x2c] sm:$0xf] %v455
      %520 = vst [vmem:[%s172 + $0x30] sm:$0xf] %v456
      %521 = vst [vmem:[%s172 + $0x34] sm:$0xf] %v457
      %522 = vst [vmem:[%s172 + $0x38] sm:$0xf] %v458
      %523 = vst [vmem:[%s172 + $0x3c] sm:$0xf] %v459
      %524 = vst [vmem:[%s172 + $0x40] sm:$0xf] %v460
      %525 = vst [vmem:[%s172 + $0x44] sm:$0xf] %v461
      %526 = vst [vmem:[%s172 + $0x48] sm:$0xf] %v462
      %527 = vst [vmem:[%s172 + $0x4c] sm:$0xf] %v463
      %528 = vst [vmem:[%s172 + $0x50] sm:$0xf] %v464
      %529 = vst [vmem:[%s172 + $0x54] sm:$0xf] %v465
      %530 = vst [vmem:[%s172 + $0x58] sm:$0xf] %v466
      %531 = vst [vmem:[%s172 + $0x5c] sm:$0xf] %v467
      %532 = vst [vmem:[%s172 + $0x60] sm:$0xf] %v468
      %533 = vst [vmem:[%s172 + $0x64] sm:$0xf] %v469
      %534 = vst [vmem:[%s172 + $0x68] sm:$0xf] %v470
      %535 = vst [vmem:[%s172 + $0x6c] sm:$0xf] %v471
      %536 = vst [vmem:[%s172 + $0x70] sm:$0xf] %v472
      %537 = vst [vmem:[%s172 + $0x74] sm:$0xf] %v473
      %538 = vst [vmem:[%s172 + $0x78] sm:$0xf] %v474
      %539 = vst [vmem:[%s172 + $0x7c] sm:$0xf] %v475
      %s540 = smul.u32 32, %s14
      %p541 = scmp.lt.s32.totalorder %s540, 63
      %s542 = scalar_select %p541, %s540, 63
      %s543 = smul.addr %s542, 4
      %s544 = scalar_lea.vmem %s3, %s543
      // Predicated region
      $region33: #{netd32_forward.8} parent=31 // pred_check
        %p545 = pneg %p100
      $region34: #{netd32_forward.8} parent=31 // pred_check_branch
        %547 = sbr.rel (%p545) target = $region36
      $region35: #{netd32_forward.8} parent=31 // pred_region
        %s548 = smul.u32 32, %s14
      $region36: #{netd32_forward.8} parent=31 // pred_fallthru
        _
    $region32: #{netd32_forward.8} parent=5 // pred_fallthru
      _
    %p549 = scmp.le.s32.totalorder 2, %s9
    // Predicated region
    $region37: #{netd32_forward.8} parent=5 // pred_check
      %p550 = pneg %p549
    $region38: #{netd32_forward.8} parent=5 // pred_check_branch
      %552 = sbr.rel (%p550) target = $region40
    $region39: #{netd32_forward.8} parent=5 // pred_region
      %s553 = ssub.s32 %s9, 2
      // Predicated region
      $region41: #{netd32_forward.8} parent=39 // pred_check
        %p554 = pneg %p106
      $region42: #{netd32_forward.8} parent=39 // pred_check_branch
        %556 = sbr.rel (%p554) target = $region44
      $region43: #{netd32_forward.8} parent=39 // pred_region
        %s557 = smul.u32 32, %s15
        %p558 = scmp.lt.s32.totalorder %s557, 63
        %s559 = scalar_select %p558, %s557, 63
        %s560 = smul.addr %s559, 4
        %s561 = scalar_lea.vmem %s3, %s560
      $region44: #{netd32_forward.8} parent=39 // pred_fallthru
        _
    $region40: #{netd32_forward.8} parent=5 // pred_fallthru
      _
  $region6: #{netd32_forward.8} parent=0 // loop_footer
    %s13 = sadd.s32 1, %s9
  $region7: #{netd32_forward.8} parent=0 // loop_footer_branch
    %8 = sbr.rel target = $region3
  $region8: #{netd32_forward.8} parent=0 // loop_exit
    _

// kernel: netd32_forward.7
$region0: #{netd32_forward.7}
  #allocation0 [shape = 'u32[]', space=smem, size = 0x4, offset = 0x4, fixed_abs, tag = 'smem constant byte address 0x4 - core index']
  #allocation1 [shape = 'u32[144,128]{1,0:T(1,128)}', space=vmem, size = 0x12000, scoped, tag = 'internal scratch']
  %s0 = inlined_call_operand.vmem [shape: bf16[512,128], index: 0, kind: input, shape index: {}]
  %s1 = inlined_call_operand.vmem [shape: bf16[128,128], index: 1, kind: input, shape index: {}]
  %s2 = inlined_call_operand.vmem [shape: bf16[512,128], index: 2, kind: output, shape index: {0}]
  %s3 = inlined_call_operand.vmem [shape: f32[2,2,128], index: 3, kind: output, shape index: {1}]
  %4 = xla_tuple %s2, %s3
  %s5 = sld [smem:[#allocation0]]
  $region49: #{netd32_forward.7} parent=0
    _
  %s7 = ssub.s32 1, %s5
  %s8 = scalar_select 0, %s7, %s5
  loop: start=0, step=1, limit=4
  $region2: #{netd32_forward.7} parent=0 // loop_pre_header
    _
  $region3: #{netd32_forward.7} parent=0 // loop_header
    %s10 = sphi 0, %s14
    %p11 = scmp.ge.s32.totalorder %s10, 4
    %s20 = sphi 0, %s22
    %s23 = sphi 0, %s20
    %s24 = sphi 0, %s23
    %s40 = sphi 0, %s24
    %s44 = sphi 0, %s44
    %s46 = sphi 0, %s44
    %s47 = sphi 0, %s46
    %s61 = sphi 0, %s47
    %s67 = sphi 0, %s69
    %s70 = sphi 0, %s67
    %s71 = sphi 0, %s70
    %s87 = sphi 0, %s71
    %s93 = sphi 0, %s95
    %s96 = sphi 0, %s93
    %s97 = sphi 0, %s96
    %s113 = sphi 0, %s97
  $region4: #{netd32_forward.7} parent=0 // loop_header_branch
    %13 = sbr.rel (%p11) target = $region8
  $region5: #{netd32_forward.7} parent=0 // loop_body
    %s15 = ssub.s32 %s10, 1
    %s16 = ssub.s32 %s10, 2
    %s17 = sadd.s32 %s10, 1
    %s18 = ssub.s32 %s10, %s17
    %p19 = scmp.eq.s32.totalorder %s18, 0
    %s21 = sadd.s32 %s20, 1
    %s22 = scalar_select %p19, %s20, %s21
    %p25 = pneg %p19
    %p26 = scmp.eq.s32.totalorder %s10, 1
    %p27 = por %p25, %p26
    %p28 = scmp.ne.s32.totalorder %s20, %s23
    %p29 = scmp.eq.s32.totalorder %s10, 0
    %p30 = por %p28, %p29
    %p31 = scmp.ne.s32.totalorder %s20, %s23
    %p32 = scmp.eq.s32.totalorder %s15, 1
    %p33 = por %p31, %p32
    %p34 = scmp.ne.s32.totalorder %s23, %s24
    %p35 = scmp.eq.s32.totalorder %s15, 0
    %p36 = por %p34, %p35
    %p37 = scmp.ne.s32.totalorder %s23, %s24
    %p38 = scmp.eq.s32.totalorder %s16, 1
    %p39 = por %p37, %p38
    %p41 = scmp.ne.s32.totalorder %s24, %s40
    %p42 = scmp.eq.s32.totalorder %s16, 0
    %p43 = por %p41, %p42
    %s45 = sadd.s32 %s44, 1
    %p48 = scmp.eq.s32.totalorder %s10, 1
    %p49 = scmp.ne.s32.totalorder %s44, %s46
    %p50 = scmp.eq.s32.totalorder %s10, 0
    %p51 = por %p49, %p50
    %p52 = scmp.ne.s32.totalorder %s44, %s46
    %p53 = scmp.eq.s32.totalorder %s15, 1
    %p54 = por %p52, %p53
    %p55 = scmp.ne.s32.totalorder %s46, %s47
    %p56 = scmp.eq.s32.totalorder %s15, 0
    %p57 = por %p55, %p56
    %p58 = scmp.ne.s32.totalorder %s46, %s47
    %p59 = scmp.eq.s32.totalorder %s16, 1
    %p60 = por %p58, %p59
    %p62 = scmp.ne.s32.totalorder %s47, %s61
    %p63 = scmp.eq.s32.totalorder %s16, 0
    %p64 = por %p62, %p63
    %s65 = ssub.s32 %s10, %s17
    %p66 = scmp.eq.s32.totalorder %s65, 0
    %s68 = sadd.s32 %s67, 1
    %s69 = scalar_select %p66, %s67, %s68
    %p72 = pneg %p66
    %p73 = scmp.eq.s32.totalorder %s10, 1
    %p74 = por %p72, %p73
    %p75 = scmp.ne.s32.totalorder %s67, %s70
    %p76 = scmp.eq.s32.totalorder %s10, 0
    %p77 = por %p75, %p76
    %p78 = scmp.ne.s32.totalorder %s67, %s70
    %p79 = scmp.eq.s32.totalorder %s15, 1
    %p80 = por %p78, %p79
    %p81 = scmp.ne.s32.totalorder %s70, %s71
    %p82 = scmp.eq.s32.totalorder %s15, 0
    %p83 = por %p81, %p82
    %p84 = scmp.ne.s32.totalorder %s70, %s71
    %p85 = scmp.eq.s32.totalorder %s16, 1
    %p86 = por %p84, %p85
    %p88 = scmp.ne.s32.totalorder %s71, %s87
    %p89 = scmp.eq.s32.totalorder %s16, 0
    %p90 = por %p88, %p89
    %s91 = ssub.s32 %s10, %s17
    %p92 = scmp.eq.s32.totalorder %s91, 0
    %s94 = sadd.s32 %s93, 1
    %s95 = scalar_select %p92, %s93, %s94
    %p98 = pneg %p92
    %p99 = scmp.eq.s32.totalorder %s10, 1
    %p100 = por %p98, %p99
    %p101 = scmp.ne.s32.totalorder %s93, %s96
    %p102 = scmp.eq.s32.totalorder %s10, 0
    %p103 = por %p101, %p102
    %p104 = scmp.ne.s32.totalorder %s93, %s96
    %p105 = scmp.eq.s32.totalorder %s15, 1
    %p106 = por %p104, %p105
    %p107 = scmp.ne.s32.totalorder %s96, %s97
    %p108 = scmp.eq.s32.totalorder %s15, 0
    %p109 = por %p107, %p108
    %p110 = scmp.ne.s32.totalorder %s96, %s97
    %p111 = scmp.eq.s32.totalorder %s16, 1
    %p112 = por %p110, %p111
    %p114 = scmp.ne.s32.totalorder %s97, %s113
    %p115 = scmp.eq.s32.totalorder %s16, 0
    %p116 = por %p114, %p115
    %p117 = scmp.le.s32.totalorder 1, %s10
    %p118 = scmp.lt.s32.totalorder %s10, 3
    %p119 = pnand %p117, %p118
    %p120 = pneg %p119
    // Predicated region
    $region9: #{netd32_forward.7} parent=5 // pred_check
      _
    $region10: #{netd32_forward.7} parent=5 // pred_check_branch
      %122 = sbr.rel (%p119) target = $region12
    $region11: #{netd32_forward.7} parent=5 // pred_region
      %s123 = ssub.s32 %s10, 1
      // Predicated region
      $region13: #{netd32_forward.7} parent=11 // pred_check
        %p124 = pneg %p57
      $region14: #{netd32_forward.7} parent=11 // pred_check_branch
        %126 = sbr.rel (%p124) target = $region16
      $region15: #{netd32_forward.7} parent=11 // pred_region
        _
      $region16: #{netd32_forward.7} parent=11 // pred_fallthru
        _
    $region12: #{netd32_forward.7} parent=5 // pred_fallthru
      _
    %p127 = scmp.lt.s32.totalorder %s10, 2
    // Predicated region
    $region17: #{netd32_forward.7} parent=5 // pred_check
      %p128 = pneg %p127
    $region18: #{netd32_forward.7} parent=5 // pred_check_branch
      %130 = sbr.rel (%p128) target = $region20
    $region19: #{netd32_forward.7} parent=5 // pred_region
      // Predicated region
      $region21: #{netd32_forward.7} parent=19 // pred_check
        %p131 = pneg %p30
      $region22: #{netd32_forward.7} parent=19 // pred_check_branch
        %133 = sbr.rel (%p131) target = $region24
      $region23: #{netd32_forward.7} parent=19 // pred_region
        %s134 = smul.u32 32, %s10
        %p135 = scmp.lt.s32.totalorder %s134, 63
        %s136 = scalar_select %p135, %s134, 63
        %s137 = smul.addr %s136, 4
        %s138 = scalar_lea.vmem %s0, %s137
        %s139 = smul.u32 32, %s10
      $region24: #{netd32_forward.7} parent=19 // pred_fallthru
        _
    $region20: #{netd32_forward.7} parent=5 // pred_fallthru
      _
    %p140 = scmp.le.s32.totalorder 1, %s10
    %p141 = scmp.lt.s32.totalorder %s10, 3
    %p142 = pnand %p140, %p141
    %p143 = pneg %p142
    // Predicated region
    $region25: #{netd32_forward.7} parent=5 // pred_check
      _
    $region26: #{netd32_forward.7} parent=5 // pred_check_branch
      %145 = sbr.rel (%p142) target = $region28
    $region27: #{netd32_forward.7} parent=5 // pred_region
      %s146 = ssub.s32 %s10, 1
      %s147 = smul.u32 32, %s15
      %p148 = scmp.lt.s32.totalorder %s147, 63
      %s149 = scalar_select %p148, %s147, 63
      %s150 = smul.addr %s149, 4
      %s151 = scalar_lea.vmem %s0, %s150
      %p152 = pneg %p36
      %p153 = pneg %p33
      %p154 = pneg %p57
      %p155 = pneg %p54
      %p156 = pneg %p83
      %p157 = pneg %p80
      %s158 = smul.u32 32, %s15
      %p159 = scmp.lt.s32.totalorder %s158, 63
      %s160 = scalar_select %p159, %s158, 63
      %s161 = smul.addr %s160, 4
      %s162 = scalar_lea.vmem %s2, %s161
      %p163 = pneg %p109
      %p164 = pneg %p106
      %p165 = scmp.lt.s32.totalorder %s15, 1
      %s166 = scalar_select %p165, %s15, 1
      %s167 = smul.addr %s166, 2
      %s168 = scalar_lea.vmem %s3, %s167
      %s169 = smul.u32 32, %s15
      %p170 = scmp.lt.s32.totalorder %s169, 63
      %s171 = scalar_select %p170, %s169, 63
      %s172 = smul.addr %s171, 4
      %s173 = scalar_lea.vmem %s0, %s172
      %s174 = smul.u32 32, %s15
      %s175 = smul.u32 32, %s15
      %p176 = scmp.lt.s32.totalorder %s175, 63
      %s177 = scalar_select %p176, %s175, 63
      %s178 = smul.addr %s177, 4
      %s179 = scalar_lea.vmem %s2, %s178
      %s180 = smul.u32 32, %s15
      %p181 = scmp.lt.s32.totalorder %s15, 1
      %s182 = scalar_select %p181, %s15, 1
      %s183 = smul.addr %s182, 2
      %s184 = scalar_lea.vmem %s3, %s183
      %v186 = vld [vmem:[%s173] sm:$0xf]
      %v187 = vld [vmem:[%s173 + $0x4] sm:$0xf]
      %v188 = vld [vmem:[%s173 + $0x8] sm:$0xf]
      %v189 = vld [vmem:[%s173 + $0xc] sm:$0xf]
      %v190 = vld [vmem:[%s173 + $0x10] sm:$0xf]
      %v191 = vld [vmem:[%s173 + $0x14] sm:$0xf]
      %v192 = vld [vmem:[%s173 + $0x18] sm:$0xf]
      %v193 = vld [vmem:[%s173 + $0x1c] sm:$0xf]
      %v194 = vld [vmem:[%s173 + $0x20] sm:$0xf]
      %v195 = vld [vmem:[%s173 + $0x24] sm:$0xf]
      %v196 = vld [vmem:[%s173 + $0x28] sm:$0xf]
      %v197 = vld [vmem:[%s173 + $0x2c] sm:$0xf]
      %v198 = vld [vmem:[%s173 + $0x30] sm:$0xf]
      %v199 = vld [vmem:[%s173 + $0x34] sm:$0xf]
      %v200 = vld [vmem:[%s173 + $0x38] sm:$0xf]
      %v201 = vld [vmem:[%s173 + $0x3c] sm:$0xf]
      %v202 = vld [vmem:[%s173 + $0x40] sm:$0xf]
      %v203 = vld [vmem:[%s173 + $0x44] sm:$0xf]
      %v204 = vld [vmem:[%s173 + $0x48] sm:$0xf]
      %v205 = vld [vmem:[%s173 + $0x4c] sm:$0xf]
      %v206 = vld [vmem:[%s173 + $0x50] sm:$0xf]
      %v207 = vld [vmem:[%s173 + $0x54] sm:$0xf]
      %v208 = vld [vmem:[%s173 + $0x58] sm:$0xf]
      %v209 = vld [vmem:[%s173 + $0x5c] sm:$0xf]
      %v210 = vld [vmem:[%s173 + $0x60] sm:$0xf]
      %v211 = vld [vmem:[%s173 + $0x64] sm:$0xf]
      %v212 = vld [vmem:[%s173 + $0x68] sm:$0xf]
      %v213 = vld [vmem:[%s173 + $0x6c] sm:$0xf]
      %v214 = vld [vmem:[%s173 + $0x70] sm:$0xf]
      %v215 = vld [vmem:[%s173 + $0x74] sm:$0xf]
      %v216 = vld [vmem:[%s173 + $0x78] sm:$0xf]
      %v217 = vld [vmem:[%s173 + $0x7c] sm:$0xf]
      %v218 = vld [vmem:[%s1] sm:$0xf]
      %v219 = vld [vmem:[%s1 + $0x4] sm:$0xf]
      %v220 = vld [vmem:[%s1 + $0x8] sm:$0xf]
      %v221 = vld [vmem:[%s1 + $0xc] sm:$0xf]
      %v222 = vld [vmem:[%s1 + $0x10] sm:$0xf]
      %v223 = vld [vmem:[%s1 + $0x14] sm:$0xf]
      %v224 = vld [vmem:[%s1 + $0x18] sm:$0xf]
      %v225 = vld [vmem:[%s1 + $0x1c] sm:$0xf]
      %v226 = vld [vmem:[%s1 + $0x20] sm:$0xf]
      %v227 = vld [vmem:[%s1 + $0x24] sm:$0xf]
      %v228 = vld [vmem:[%s1 + $0x28] sm:$0xf]
      %v229 = vld [vmem:[%s1 + $0x2c] sm:$0xf]
      %v230 = vld [vmem:[%s1 + $0x30] sm:$0xf]
      %v231 = vld [vmem:[%s1 + $0x34] sm:$0xf]
      %v232 = vld [vmem:[%s1 + $0x38] sm:$0xf]
      %v233 = vld [vmem:[%s1 + $0x3c] sm:$0xf]
      %v266 = vunpack.c.l.b16 %v186
      %v267 = vunpack.c.l.b16 %v187
      %v268 = vunpack.c.l.b16 %v188
      %v269 = vunpack.c.l.b16 %v189
      %v270 = vunpack.c.l.b16 %v190
      %v271 = vunpack.c.l.b16 %v191
      %v272 = vunpack.c.l.b16 %v192
      %v273 = vunpack.c.l.b16 %v193
      %v274 = vunpack.c.l.b16 %v194
      %v275 = vunpack.c.l.b16 %v195
      %v276 = vunpack.c.l.b16 %v196
      %v277 = vunpack.c.l.b16 %v197
      %v278 = vunpack.c.l.b16 %v198
      %v279 = vunpack.c.l.b16 %v199
      %v280 = vunpack.c.l.b16 %v200
      %v281 = vunpack.c.l.b16 %v201
      %v282 = vunpack.c.l.b16 %v202
      %v283 = vunpack.c.l.b16 %v203
      %v284 = vunpack.c.l.b16 %v204
      %v285 = vunpack.c.l.b16 %v205
      %v286 = vunpack.c.l.b16 %v206
      %v287 = vunpack.c.l.b16 %v207
      %v288 = vunpack.c.l.b16 %v208
      %v289 = vunpack.c.l.b16 %v209
      %v290 = vunpack.c.l.b16 %v210
      %v291 = vunpack.c.l.b16 %v211
      %v292 = vunpack.c.l.b16 %v212
      %v293 = vunpack.c.l.b16 %v213
      %v294 = vunpack.c.l.b16 %v214
      %v295 = vunpack.c.l.b16 %v215
      %v296 = vunpack.c.l.b16 %v216
      %v297 = vunpack.c.l.b16 %v217
      %v298 = vpack.c.b16 %v267, %v266
      %v299 = vpack.c.b16 %v269, %v268
      %v300 = vpack.c.b16 %v271, %v270
      %v301 = vpack.c.b16 %v273, %v272
      %v302 = vpack.c.b16 %v275, %v274
      %v303 = vpack.c.b16 %v277, %v276
      %v304 = vpack.c.b16 %v279, %v278
      %v305 = vpack.c.b16 %v281, %v280
      %v306 = vpack.c.b16 %v283, %v282
      %v307 = vpack.c.b16 %v285, %v284
      %v308 = vpack.c.b16 %v287, %v286
      %v309 = vpack.c.b16 %v289, %v288
      %v310 = vpack.c.b16 %v291, %v290
      %v311 = vpack.c.b16 %v293, %v292
      %v312 = vpack.c.b16 %v295, %v294
      %v313 = vpack.c.b16 %v297, %v296
      %v346 = vunpack.c.l.b16 %v218
      %v347 = vunpack.c.l.b16 %v219
      %v348 = vunpack.c.l.b16 %v220
      %v349 = vunpack.c.l.b16 %v221
      %v350 = vunpack.c.l.b16 %v222
      %v351 = vunpack.c.l.b16 %v223
      %v352 = vunpack.c.l.b16 %v224
      %v353 = vunpack.c.l.b16 %v225
      %v354 = vunpack.c.l.b16 %v226
      %v355 = vunpack.c.l.b16 %v227
      %v356 = vunpack.c.l.b16 %v228
      %v357 = vunpack.c.l.b16 %v229
      %v358 = vunpack.c.l.b16 %v230
      %v359 = vunpack.c.l.b16 %v231
      %v360 = vunpack.c.l.b16 %v232
      %v361 = vunpack.c.l.b16 %v233
      %v362 = vpack.c.b16 %v347, %v346
      %v363 = vpack.c.b16 %v349, %v348
      %v364 = vpack.c.b16 %v351, %v350
      %v365 = vpack.c.b16 %v353, %v352
      %v366 = vpack.c.b16 %v355, %v354
      %v367 = vpack.c.b16 %v357, %v356
      %v368 = vpack.c.b16 %v359, %v358
      %v369 = vpack.c.b16 %v361, %v360
      %378 = vmatprep.subr.bf16.mxu0 0
      %379 = vmatpush1.bf16.msra.mxu0 %v369
      %380 = vmatprep.subr.bf16.mxu0 0
      %381 = vmatpush1.bf16.msra.mxu0 %v368
      %382 = vmatprep.subr.bf16.mxu0 0
      %383 = vmatpush1.bf16.msra.mxu0 %v367
      %384 = vmatprep.subr.bf16.mxu0 0
      %385 = vmatpush1.bf16.msra.mxu0 %v366
      %386 = vmatprep.subr.bf16.mxu0 0
      %387 = vmatpush1.bf16.msra.mxu0 %v365
      %388 = vmatprep.subr.bf16.mxu0 0
      %389 = vmatpush1.bf16.msra.mxu0 %v364
      %390 = vmatprep.subr.bf16.mxu0 0
      %391 = vmatpush1.bf16.msra.mxu0 %v363
      %392 = vmatprep.subr.bf16.mxu0 0
      %393 = vmatpush1.bf16.msra.mxu0 %v362
      %394 = vmatprep.subr.bf16.mxu0 0
      %395 = vmatpush2.bf16.msra.mxu0 0
      %396 = vmatprep.subr.bf16.mxu0 0
      %397 = vmatpush2.bf16.msra.mxu0 0
      %398 = vmatprep.subr.bf16.mxu0 0
      %399 = vmatpush2.bf16.msra.mxu0 0
      %400 = vmatprep.subr.bf16.mxu0 0
      %401 = vmatpush2.bf16.msra.mxu0 0
      %402 = vmatprep.subr.bf16.mxu0 0
      %403 = vmatpush2.bf16.msra.mxu0 0
      %404 = vmatprep.subr.bf16.mxu0 0
      %405 = vmatpush2.bf16.msra.mxu0 0
      %406 = vmatprep.subr.bf16.mxu0 0
      %407 = vmatpush2.bf16.msra.mxu0 0
      %408 = vmatprep.subr.bf16.mxu0 0
      %409 = vmatpush2.bf16.msra.mxu0 0
      %410 = vmatprep.mubr.bf16.mxu0 0
      %411 = vmatmul.mubr.bf16.gmra.mxu0 %v298
      %v412 = vpop.f32.mrf.mxu0
      %v413 = vadd.f32 0.0, %v412
      %v414 = vpop.f32.mrf.mxu0
      %v415 = vpop.f32.mrf.mxu0
      %v416 = vadd.f32 0.0, %v415
      %v417 = vpop.f32.mrf.mxu0
      %418 = vmatprep.mubr.bf16.mxu0 0
      %419 = vmatmul.mubr.bf16.gmra.mxu0 %v299
      %v420 = vpop.f32.mrf.mxu0
      %v421 = vadd.f32 0.0, %v420
      %v422 = vpop.f32.mrf.mxu0
      %v423 = vpop.f32.mrf.mxu0
      %v424 = vadd.f32 0.0, %v423
      %v425 = vpop.f32.mrf.mxu0
      %426 = vmatprep.mubr.bf16.mxu0 0
      %427 = vmatmul.mubr.bf16.gmra.mxu0 %v300
      %v428 = vpop.f32.mrf.mxu0
      %v429 = vadd.f32 0.0, %v428
      %v430 = vpop.f32.mrf.mxu0
      %v431 = vpop.f32.mrf.mxu0
      %v432 = vadd.f32 0.0, %v431
      %v433 = vpop.f32.mrf.mxu0
      %434 = vmatprep.mubr.bf16.mxu0 0
      %435 = vmatmul.mubr.bf16.gmra.mxu0 %v301
      %v436 = vpop.f32.mrf.mxu0
      %v437 = vadd.f32 0.0, %v436
      %v438 = vpop.f32.mrf.mxu0
      %v439 = vpop.f32.mrf.mxu0
      %v440 = vadd.f32 0.0, %v439
      %v441 = vpop.f32.mrf.mxu0
      %442 = vmatprep.mubr.bf16.mxu0 0
      %443 = vmatmul.mubr.bf16.gmra.mxu0 %v302
      %v444 = vpop.f32.mrf.mxu0
      %v445 = vadd.f32 0.0, %v444
      %v446 = vpop.f32.mrf.mxu0
      %v447 = vpop.f32.mrf.mxu0
      %v448 = vadd.f32 0.0, %v447
      %v449 = vpop.f32.mrf.mxu0
      %450 = vmatprep.mubr.bf16.mxu0 0
      %451 = vmatmul.mubr.bf16.gmra.mxu0 %v303
      %v452 = vpop.f32.mrf.mxu0
      %v453 = vadd.f32 0.0, %v452
      %v454 = vpop.f32.mrf.mxu0
      %v455 = vpop.f32.mrf.mxu0
      %v456 = vadd.f32 0.0, %v455
      %v457 = vpop.f32.mrf.mxu0
      %458 = vmatprep.mubr.bf16.mxu0 0
      %459 = vmatmul.mubr.bf16.gmra.mxu0 %v304
      %v460 = vpop.f32.mrf.mxu0
      %v461 = vadd.f32 0.0, %v460
      %v462 = vpop.f32.mrf.mxu0
      %v463 = vpop.f32.mrf.mxu0
      %v464 = vadd.f32 0.0, %v463
      %v465 = vpop.f32.mrf.mxu0
      %466 = vmatprep.mubr.bf16.mxu0 0
      %467 = vmatmul.mubr.bf16.gmra.mxu0 %v305
      %v468 = vpop.f32.mrf.mxu0
      %v469 = vadd.f32 0.0, %v468
      %v470 = vpop.f32.mrf.mxu0
      %v471 = vpop.f32.mrf.mxu0
      %v472 = vadd.f32 0.0, %v471
      %v473 = vpop.f32.mrf.mxu0
      %474 = vmatprep.mubr.bf16.mxu0 0
      %475 = vmatmul.mubr.bf16.gmra.mxu0 %v306
      %v476 = vpop.f32.mrf.mxu0
      %v477 = vadd.f32 0.0, %v476
      %v478 = vpop.f32.mrf.mxu0
      %v479 = vpop.f32.mrf.mxu0
      %v480 = vadd.f32 0.0, %v479
      %v481 = vpop.f32.mrf.mxu0
      %482 = vmatprep.mubr.bf16.mxu0 0
      %483 = vmatmul.mubr.bf16.gmra.mxu0 %v307
      %v484 = vpop.f32.mrf.mxu0
      %v485 = vadd.f32 0.0, %v484
      %v486 = vpop.f32.mrf.mxu0
      %v487 = vpop.f32.mrf.mxu0
      %v488 = vadd.f32 0.0, %v487
      %v489 = vpop.f32.mrf.mxu0
      %490 = vmatprep.mubr.bf16.mxu0 0
      %491 = vmatmul.mubr.bf16.gmra.mxu0 %v308
      %v492 = vpop.f32.mrf.mxu0
      %v493 = vadd.f32 0.0, %v492
      %v494 = vpop.f32.mrf.mxu0
      %v495 = vpop.f32.mrf.mxu0
      %v496 = vadd.f32 0.0, %v495
      %v497 = vpop.f32.mrf.mxu0
      %498 = vmatprep.mubr.bf16.mxu0 0
      %499 = vmatmul.mubr.bf16.gmra.mxu0 %v309
      %v500 = vpop.f32.mrf.mxu0
      %v501 = vadd.f32 0.0, %v500
      %v502 = vpop.f32.mrf.mxu0
      %v503 = vpop.f32.mrf.mxu0
      %v504 = vadd.f32 0.0, %v503
      %v505 = vpop.f32.mrf.mxu0
      %506 = vmatprep.mubr.bf16.mxu0 0
      %507 = vmatmul.mubr.bf16.gmra.mxu0 %v310
      %v508 = vpop.f32.mrf.mxu0
      %v509 = vadd.f32 0.0, %v508
      %v510 = vpop.f32.mrf.mxu0
      %v511 = vpop.f32.mrf.mxu0
      %v512 = vadd.f32 0.0, %v511
      %v513 = vpop.f32.mrf.mxu0
      %514 = vmatprep.mubr.bf16.mxu0 0
      %515 = vmatmul.mubr.bf16.gmra.mxu0 %v311
      %v516 = vpop.f32.mrf.mxu0
      %v517 = vadd.f32 0.0, %v516
      %v518 = vpop.f32.mrf.mxu0
      %v519 = vpop.f32.mrf.mxu0
      %v520 = vadd.f32 0.0, %v519
      %v521 = vpop.f32.mrf.mxu0
      %522 = vmatprep.mubr.bf16.mxu0 0
      %523 = vmatmul.mubr.bf16.gmra.mxu0 %v312
      %v524 = vpop.f32.mrf.mxu0
      %v525 = vadd.f32 0.0, %v524
      %v526 = vpop.f32.mrf.mxu0
      %v527 = vpop.f32.mrf.mxu0
      %v528 = vadd.f32 0.0, %v527
      %v529 = vpop.f32.mrf.mxu0
      %530 = vmatprep.mubr.bf16.mxu0 0
      %531 = vmatmul.mubr.bf16.gmra.mxu0 %v313
      %v532 = vpop.f32.mrf.mxu0
      %v533 = vadd.f32 0.0, %v532
      %v534 = vpop.f32.mrf.mxu0
      %v535 = vpop.f32.mrf.mxu0
      %v536 = vadd.f32 0.0, %v535
      %v537 = vpop.f32.mrf.mxu0
      %538 = vdwg.mxu0
      %v539 = vadd.f32 %v413, %v416
      %v540 = vadd.f32 %v539, %v421
      %v541 = vadd.f32 %v540, %v424
      %v542 = vadd.f32 %v541, %v429
      %v543 = vadd.f32 %v542, %v432
      %v544 = vadd.f32 %v543, %v437
      %v545 = vadd.f32 %v544, %v440
      %v546 = vadd.f32 %v545, %v445
      %v547 = vadd.f32 %v546, %v448
      %v548 = vadd.f32 %v547, %v453
      %v549 = vadd.f32 %v548, %v456
      %v550 = vadd.f32 %v549, %v461
      %v551 = vadd.f32 %v550, %v464
      %v552 = vadd.f32 %v551, %v469
      %v553 = vadd.f32 %v552, %v472
      %v554 = vadd.f32 %v553, %v477
      %v555 = vadd.f32 %v554, %v480
      %v556 = vadd.f32 %v555, %v485
      %v557 = vadd.f32 %v556, %v488
      %v558 = vadd.f32 %v557, %v493
      %v559 = vadd.f32 %v558, %v496
      %v560 = vadd.f32 %v559, %v501
      %v561 = vadd.f32 %v560, %v504
      %v562 = vadd.f32 %v561, %v509
      %v563 = vadd.f32 %v562, %v512
      %v564 = vadd.f32 %v563, %v517
      %v565 = vadd.f32 %v564, %v520
      %v566 = vadd.f32 %v565, %v525
      %v567 = vadd.f32 %v566, %v528
      %v568 = vadd.f32 %v567, %v533
      %v569 = vadd.f32 %v568, %v536
      %v570 = vrot.slane %v569, 4
      %v571 = vadd.f32 %v569, %v570
      %v572 = vrot.slane %v571, 2
      %v573 = vadd.f32 %v571, %v572
      %v574 = vrot.slane %v573, 1
      %v575 = vadd.f32 %v573, %v574
      %v576 = vmul.f32 %v413, %v413
      %v577 = vmul.f32 %v416, %v416
      %v578 = vmul.f32 %v421, %v421
      %v579 = vmul.f32 %v424, %v424
      %v580 = vmul.f32 %v429, %v429
      %v581 = vmul.f32 %v432, %v432
      %v582 = vmul.f32 %v437, %v437
      %v583 = vmul.f32 %v440, %v440
      %v584 = vmul.f32 %v445, %v445
      %v585 = vmul.f32 %v448, %v448
      %v586 = vmul.f32 %v453, %v453
      %v587 = vmul.f32 %v456, %v456
      %v588 = vmul.f32 %v461, %v461
      %v589 = vmul.f32 %v464, %v464
      %v590 = vmul.f32 %v469, %v469
      %v591 = vmul.f32 %v472, %v472
      %v592 = vmul.f32 %v477, %v477
      %v593 = vmul.f32 %v480, %v480
      %v594 = vmul.f32 %v485, %v485
      %v595 = vmul.f32 %v488, %v488
      %v596 = vmul.f32 %v493, %v493
      %v597 = vmul.f32 %v496, %v496
      %v598 = vmul.f32 %v501, %v501
      %v599 = vmul.f32 %v504, %v504
      %v600 = vmul.f32 %v509, %v509
      %v601 = vmul.f32 %v512, %v512
      %v602 = vmul.f32 %v517, %v517
      %v603 = vmul.f32 %v520, %v520
      %v604 = vmul.f32 %v525, %v525
      %v605 = vmul.f32 %v528, %v528
      %v606 = vmul.f32 %v533, %v533
      %v607 = vmul.f32 %v536, %v536
      %v608 = vadd.f32 %v576, %v577
      %v609 = vadd.f32 %v608, %v578
      %v610 = vadd.f32 %v609, %v579
      %v611 = vadd.f32 %v610, %v580
      %v612 = vadd.f32 %v611, %v581
      %v613 = vadd.f32 %v612, %v582
      %v614 = vadd.f32 %v613, %v583
      %v615 = vadd.f32 %v614, %v584
      %v616 = vadd.f32 %v615, %v585
      %v617 = vadd.f32 %v616, %v586
      %v618 = vadd.f32 %v617, %v587
      %v619 = vadd.f32 %v618, %v588
      %v620 = vadd.f32 %v619, %v589
      %v621 = vadd.f32 %v620, %v590
      %v622 = vadd.f32 %v621, %v591
      %v623 = vadd.f32 %v622, %v592
      %v624 = vadd.f32 %v623, %v593
      %v625 = vadd.f32 %v624, %v594
      %v626 = vadd.f32 %v625, %v595
      %v627 = vadd.f32 %v626, %v596
      %v628 = vadd.f32 %v627, %v597
      %v629 = vadd.f32 %v628, %v598
      %v630 = vadd.f32 %v629, %v599
      %v631 = vadd.f32 %v630, %v600
      %v632 = vadd.f32 %v631, %v601
      %v633 = vadd.f32 %v632, %v602
      %v634 = vadd.f32 %v633, %v603
      %v635 = vadd.f32 %v634, %v604
      %v636 = vadd.f32 %v635, %v605
      %v637 = vadd.f32 %v636, %v606
      %v638 = vadd.f32 %v637, %v607
      %v639 = vrot.slane %v638, 4
      %v640 = vadd.f32 %v638, %v639
      %v641 = vrot.slane %v640, 2
      %v642 = vadd.f32 %v640, %v641
      %v643 = vrot.slane %v642, 1
      %v644 = vadd.f32 %v642, %v643
      %vm645 = vcmask 1040384
      %v646 = vsel %vm645, %v575, %v644
      %647 = vst [vmem:[%s184] sm:$0x3] %v646
      %v648 = vpack.c.bf16 %v416, %v413
      %v649 = vpack.c.bf16 %v424, %v421
      %v650 = vpack.c.bf16 %v432, %v429
      %v651 = vpack.c.bf16 %v440, %v437
      %v652 = vpack.c.bf16 %v448, %v445
      %v653 = vpack.c.bf16 %v456, %v453
      %v654 = vpack.c.bf16 %v464, %v461
      %v655 = vpack.c.bf16 %v472, %v469
      %v656 = vpack.c.bf16 %v480, %v477
      %v657 = vpack.c.bf16 %v488, %v485
      %v658 = vpack.c.bf16 %v496, %v493
      %v659 = vpack.c.bf16 %v504, %v501
      %v660 = vpack.c.bf16 %v512, %v509
      %v661 = vpack.c.bf16 %v520, %v517
      %v662 = vpack.c.bf16 %v528, %v525
      %v663 = vpack.c.bf16 %v536, %v533
      %v680 = vunpack.c.l.b16 %v648
      %v681 = vunpack.c.h.b16 %v648
      %v682 = vunpack.c.l.b16 %v649
      %v683 = vunpack.c.h.b16 %v649
      %v684 = vunpack.c.l.b16 %v650
      %v685 = vunpack.c.h.b16 %v650
      %v686 = vunpack.c.l.b16 %v651
      %v687 = vunpack.c.h.b16 %v651
      %v688 = vunpack.c.l.b16 %v652
      %v689 = vunpack.c.h.b16 %v652
      %v690 = vunpack.c.l.b16 %v653
      %v691 = vunpack.c.h.b16 %v653
      %v692 = vunpack.c.l.b16 %v654
      %v693 = vunpack.c.h.b16 %v654
      %v694 = vunpack.c.l.b16 %v655
      %v695 = vunpack.c.h.b16 %v655
      %v696 = vunpack.c.l.b16 %v656
      %v697 = vunpack.c.h.b16 %v656
      %v698 = vunpack.c.l.b16 %v657
      %v699 = vunpack.c.h.b16 %v657
      %v700 = vunpack.c.l.b16 %v658
      %v701 = vunpack.c.h.b16 %v658
      %v702 = vunpack.c.l.b16 %v659
      %v703 = vunpack.c.h.b16 %v659
      %v704 = vunpack.c.l.b16 %v660
      %v705 = vunpack.c.h.b16 %v660
      %v706 = vunpack.c.l.b16 %v661
      %v707 = vunpack.c.h.b16 %v661
      %v708 = vunpack.c.l.b16 %v662
      %v709 = vunpack.c.h.b16 %v662
      %v710 = vunpack.c.l.b16 %v663
      %v711 = vunpack.c.h.b16 %v663
      %v712 = vpack.c.b16 %v680, %v680
      %v713 = vpack.c.b16 %v681, %v681
      %v714 = vpack.c.b16 %v682, %v682
      %v715 = vpack.c.b16 %v683, %v683
      %v716 = vpack.c.b16 %v684, %v684
      %v717 = vpack.c.b16 %v685, %v685
      %v718 = vpack.c.b16 %v686, %v686
      %v719 = vpack.c.b16 %v687, %v687
      %v720 = vpack.c.b16 %v688, %v688
      %v721 = vpack.c.b16 %v689, %v689
      %v722 = vpack.c.b16 %v690, %v690
      %v723 = vpack.c.b16 %v691, %v691
      %v724 = vpack.c.b16 %v692, %v692
      %v725 = vpack.c.b16 %v693, %v693
      %v726 = vpack.c.b16 %v694, %v694
      %v727 = vpack.c.b16 %v695, %v695
      %v728 = vpack.c.b16 %v696, %v696
      %v729 = vpack.c.b16 %v697, %v697
      %v730 = vpack.c.b16 %v698, %v698
      %v731 = vpack.c.b16 %v699, %v699
      %v732 = vpack.c.b16 %v700, %v700
      %v733 = vpack.c.b16 %v701, %v701
      %v734 = vpack.c.b16 %v702, %v702
      %v735 = vpack.c.b16 %v703, %v703
      %v736 = vpack.c.b16 %v704, %v704
      %v737 = vpack.c.b16 %v705, %v705
      %v738 = vpack.c.b16 %v706, %v706
      %v739 = vpack.c.b16 %v707, %v707
      %v740 = vpack.c.b16 %v708, %v708
      %v741 = vpack.c.b16 %v709, %v709
      %v742 = vpack.c.b16 %v710, %v710
      %v743 = vpack.c.b16 %v711, %v711
      %776 = vst [vmem:[%s179] sm:$0xf] %v712
      %777 = vst [vmem:[%s179 + $0x4] sm:$0xf] %v713
      %778 = vst [vmem:[%s179 + $0x8] sm:$0xf] %v714
      %779 = vst [vmem:[%s179 + $0xc] sm:$0xf] %v715
      %780 = vst [vmem:[%s179 + $0x10] sm:$0xf] %v716
      %781 = vst [vmem:[%s179 + $0x14] sm:$0xf] %v717
      %782 = vst [vmem:[%s179 + $0x18] sm:$0xf] %v718
      %783 = vst [vmem:[%s179 + $0x1c] sm:$0xf] %v719
      %784 = vst [vmem:[%s179 + $0x20] sm:$0xf] %v720
      %785 = vst [vmem:[%s179 + $0x24] sm:$0xf] %v721
      %786 = vst [vmem:[%s179 + $0x28] sm:$0xf] %v722
      %787 = vst [vmem:[%s179 + $0x2c] sm:$0xf] %v723
      %788 = vst [vmem:[%s179 + $0x30] sm:$0xf] %v724
      %789 = vst [vmem:[%s179 + $0x34] sm:$0xf] %v725
      %790 = vst [vmem:[%s179 + $0x38] sm:$0xf] %v726
      %791 = vst [vmem:[%s179 + $0x3c] sm:$0xf] %v727
      %792 = vst [vmem:[%s179 + $0x40] sm:$0xf] %v728
      %793 = vst [vmem:[%s179 + $0x44] sm:$0xf] %v729
      %794 = vst [vmem:[%s179 + $0x48] sm:$0xf] %v730
      %795 = vst [vmem:[%s179 + $0x4c] sm:$0xf] %v731
      %796 = vst [vmem:[%s179 + $0x50] sm:$0xf] %v732
      %797 = vst [vmem:[%s179 + $0x54] sm:$0xf] %v733
      %798 = vst [vmem:[%s179 + $0x58] sm:$0xf] %v734
      %799 = vst [vmem:[%s179 + $0x5c] sm:$0xf] %v735
      %800 = vst [vmem:[%s179 + $0x60] sm:$0xf] %v736
      %801 = vst [vmem:[%s179 + $0x64] sm:$0xf] %v737
      %802 = vst [vmem:[%s179 + $0x68] sm:$0xf] %v738
      %803 = vst [vmem:[%s179 + $0x6c] sm:$0xf] %v739
      %804 = vst [vmem:[%s179 + $0x70] sm:$0xf] %v740
      %805 = vst [vmem:[%s179 + $0x74] sm:$0xf] %v741
      %806 = vst [vmem:[%s179 + $0x78] sm:$0xf] %v742
      %807 = vst [vmem:[%s179 + $0x7c] sm:$0xf] %v743
      %s808 = smul.u32 32, %s15
      %p809 = scmp.lt.s32.totalorder %s808, 63
      %s810 = scalar_select %p809, %s808, 63
      %s811 = smul.addr %s810, 4
      %s812 = scalar_lea.vmem %s2, %s811
      %p813 = scmp.lt.s32.totalorder %s15, 1
      %s814 = scalar_select %p813, %s15, 1
      %s815 = smul.addr %s814, 2
      %s816 = scalar_lea.vmem %s3, %s815
      // Predicated region
      $region29: #{netd32_forward.7} parent=27 // pred_check
        %p817 = pneg %p80
      $region30: #{netd32_forward.7} parent=27 // pred_check_branch
        %819 = sbr.rel (%p817) target = $region32
      $region31: #{netd32_forward.7} parent=27 // pred_region
        %s820 = smul.u32 32, %s15
      $region32: #{netd32_forward.7} parent=27 // pred_fallthru
        _
      // Predicated region
      $region33: #{netd32_forward.7} parent=27 // pred_check
        %p821 = pneg %p106
      $region34: #{netd32_forward.7} parent=27 // pred_check_branch
        %823 = sbr.rel (%p821) target = $region36
      $region35: #{netd32_forward.7} parent=27 // pred_region
        _
      $region36: #{netd32_forward.7} parent=27 // pred_fallthru
        _
    $region28: #{netd32_forward.7} parent=5 // pred_fallthru
      _
    %p824 = scmp.le.s32.totalorder 2, %s10
    // Predicated region
    $region37: #{netd32_forward.7} parent=5 // pred_check
      %p825 = pneg %p824
    $region38: #{netd32_forward.7} parent=5 // pred_check_branch
      %827 = sbr.rel (%p825) target = $region40
    $region39: #{netd32_forward.7} parent=5 // pred_region
      %s828 = ssub.s32 %s10, 2
      // Predicated region
      $region41: #{netd32_forward.7} parent=39 // pred_check
        %p829 = pneg %p86
      $region42: #{netd32_forward.7} parent=39 // pred_check_branch
        %831 = sbr.rel (%p829) target = $region44
      $region43: #{netd32_forward.7} parent=39 // pred_region
        %s832 = smul.u32 32, %s16
        %p833 = scmp.lt.s32.totalorder %s832, 63
        %s834 = scalar_select %p833, %s832, 63
        %s835 = smul.addr %s834, 4
        %s836 = scalar_lea.vmem %s2, %s835
      $region44: #{netd32_forward.7} parent=39 // pred_fallthru
        _
      // Predicated region
      $region45: #{netd32_forward.7} parent=39 // pred_check
        %p837 = pneg %p112
      $region46: #{netd32_forward.7} parent=39 // pred_check_branch
        %839 = sbr.rel (%p837) target = $region48
      $region47: #{netd32_forward.7} parent=39 // pred_region
        %p840 = scmp.lt.s32.totalorder %s16, 1
        %s841 = scalar_select %p840, %s16, 1
        %s842 = smul.addr %s841, 2
        %s843 = scalar_lea.vmem %s3, %s842
      $region48: #{netd32_forward.7} parent=39 // pred_fallthru
        _
    $region40: #{netd32_forward.7} parent=5 // pred_fallthru
      _
  $region6: #{netd32_forward.7} parent=0 // loop_footer
    %s14 = sadd.s32 1, %s10
  $region7: #{netd32_forward.7} parent=0 // loop_footer_branch
    %9 = sbr.rel target = $region3
  $region8: #{netd32_forward.7} parent=0 // loop_exit
    _

// kernel: netd32_forward.9
$region0: #{netd32_forward.9}
  #allocation0 [shape = 'u32[]', space=smem, size = 0x4, offset = 0x4, fixed_abs, tag = 'smem constant byte address 0x4 - core index']
  #allocation1 [shape = 'u32[144,128]{1,0:T(1,128)}', space=vmem, size = 0x12000, scoped, tag = 'internal scratch']
  %s0 = inlined_call_operand.vmem [shape: bf16[128,128], index: 0, kind: input, shape index: {}]
  %s1 = inlined_call_operand.vmem [shape: bf16[128,128], index: 1, kind: input, shape index: {}]
  %s2 = inlined_call_operand.vmem [shape: bf16[128,128], index: 2, kind: output, shape index: {0}]
  %s3 = inlined_call_operand.vmem [shape: f32[2,2,128], index: 3, kind: output, shape index: {1}]
  %4 = xla_tuple %s2, %s3
  %s5 = sld [smem:[#allocation0]]
  $region49: #{netd32_forward.9} parent=0
    _
  %s7 = ssub.s32 1, %s5
  %s8 = scalar_select 0, %s7, %s5
  loop: start=0, step=1, limit=4
  $region2: #{netd32_forward.9} parent=0 // loop_pre_header
    _
  $region3: #{netd32_forward.9} parent=0 // loop_header
    %s10 = sphi 0, %s14
    %p11 = scmp.ge.s32.totalorder %s10, 4
    %s20 = sphi 0, %s22
    %s23 = sphi 0, %s20
    %s24 = sphi 0, %s23
    %s40 = sphi 0, %s24
    %s44 = sphi 0, %s44
    %s46 = sphi 0, %s44
    %s47 = sphi 0, %s46
    %s61 = sphi 0, %s47
    %s67 = sphi 0, %s69
    %s70 = sphi 0, %s67
    %s71 = sphi 0, %s70
    %s87 = sphi 0, %s71
    %s93 = sphi 0, %s95
    %s96 = sphi 0, %s93
    %s97 = sphi 0, %s96
    %s113 = sphi 0, %s97
  $region4: #{netd32_forward.9} parent=0 // loop_header_branch
    %13 = sbr.rel (%p11) target = $region8
  $region5: #{netd32_forward.9} parent=0 // loop_body
    %s15 = ssub.s32 %s10, 1
    %s16 = ssub.s32 %s10, 2
    %s17 = sadd.s32 %s10, 1
    %s18 = ssub.s32 %s10, %s17
    %p19 = scmp.eq.s32.totalorder %s18, 0
    %s21 = sadd.s32 %s20, 1
    %s22 = scalar_select %p19, %s20, %s21
    %p25 = pneg %p19
    %p26 = scmp.eq.s32.totalorder %s10, 1
    %p27 = por %p25, %p26
    %p28 = scmp.ne.s32.totalorder %s20, %s23
    %p29 = scmp.eq.s32.totalorder %s10, 0
    %p30 = por %p28, %p29
    %p31 = scmp.ne.s32.totalorder %s20, %s23
    %p32 = scmp.eq.s32.totalorder %s15, 1
    %p33 = por %p31, %p32
    %p34 = scmp.ne.s32.totalorder %s23, %s24
    %p35 = scmp.eq.s32.totalorder %s15, 0
    %p36 = por %p34, %p35
    %p37 = scmp.ne.s32.totalorder %s23, %s24
    %p38 = scmp.eq.s32.totalorder %s16, 1
    %p39 = por %p37, %p38
    %p41 = scmp.ne.s32.totalorder %s24, %s40
    %p42 = scmp.eq.s32.totalorder %s16, 0
    %p43 = por %p41, %p42
    %s45 = sadd.s32 %s44, 1
    %p48 = scmp.eq.s32.totalorder %s10, 1
    %p49 = scmp.ne.s32.totalorder %s44, %s46
    %p50 = scmp.eq.s32.totalorder %s10, 0
    %p51 = por %p49, %p50
    %p52 = scmp.ne.s32.totalorder %s44, %s46
    %p53 = scmp.eq.s32.totalorder %s15, 1
    %p54 = por %p52, %p53
    %p55 = scmp.ne.s32.totalorder %s46, %s47
    %p56 = scmp.eq.s32.totalorder %s15, 0
    %p57 = por %p55, %p56
    %p58 = scmp.ne.s32.totalorder %s46, %s47
    %p59 = scmp.eq.s32.totalorder %s16, 1
    %p60 = por %p58, %p59
    %p62 = scmp.ne.s32.totalorder %s47, %s61
    %p63 = scmp.eq.s32.totalorder %s16, 0
    %p64 = por %p62, %p63
    %s65 = ssub.s32 %s10, %s17
    %p66 = scmp.eq.s32.totalorder %s65, 0
    %s68 = sadd.s32 %s67, 1
    %s69 = scalar_select %p66, %s67, %s68
    %p72 = pneg %p66
    %p73 = scmp.eq.s32.totalorder %s10, 1
    %p74 = por %p72, %p73
    %p75 = scmp.ne.s32.totalorder %s67, %s70
    %p76 = scmp.eq.s32.totalorder %s10, 0
    %p77 = por %p75, %p76
    %p78 = scmp.ne.s32.totalorder %s67, %s70
    %p79 = scmp.eq.s32.totalorder %s15, 1
    %p80 = por %p78, %p79
    %p81 = scmp.ne.s32.totalorder %s70, %s71
    %p82 = scmp.eq.s32.totalorder %s15, 0
    %p83 = por %p81, %p82
    %p84 = scmp.ne.s32.totalorder %s70, %s71
    %p85 = scmp.eq.s32.totalorder %s16, 1
    %p86 = por %p84, %p85
    %p88 = scmp.ne.s32.totalorder %s71, %s87
    %p89 = scmp.eq.s32.totalorder %s16, 0
    %p90 = por %p88, %p89
    %s91 = ssub.s32 %s10, %s17
    %p92 = scmp.eq.s32.totalorder %s91, 0
    %s94 = sadd.s32 %s93, 1
    %s95 = scalar_select %p92, %s93, %s94
    %p98 = pneg %p92
    %p99 = scmp.eq.s32.totalorder %s10, 1
    %p100 = por %p98, %p99
    %p101 = scmp.ne.s32.totalorder %s93, %s96
    %p102 = scmp.eq.s32.totalorder %s10, 0
    %p103 = por %p101, %p102
    %p104 = scmp.ne.s32.totalorder %s93, %s96
    %p105 = scmp.eq.s32.totalorder %s15, 1
    %p106 = por %p104, %p105
    %p107 = scmp.ne.s32.totalorder %s96, %s97
    %p108 = scmp.eq.s32.totalorder %s15, 0
    %p109 = por %p107, %p108
    %p110 = scmp.ne.s32.totalorder %s96, %s97
    %p111 = scmp.eq.s32.totalorder %s16, 1
    %p112 = por %p110, %p111
    %p114 = scmp.ne.s32.totalorder %s97, %s113
    %p115 = scmp.eq.s32.totalorder %s16, 0
    %p116 = por %p114, %p115
    %p117 = scmp.le.s32.totalorder 1, %s10
    %p118 = scmp.lt.s32.totalorder %s10, 3
    %p119 = pnand %p117, %p118
    %p120 = pneg %p119
    // Predicated region
    $region9: #{netd32_forward.9} parent=5 // pred_check
      _
    $region10: #{netd32_forward.9} parent=5 // pred_check_branch
      %122 = sbr.rel (%p119) target = $region12
    $region11: #{netd32_forward.9} parent=5 // pred_region
      %s123 = ssub.s32 %s10, 1
      // Predicated region
      $region13: #{netd32_forward.9} parent=11 // pred_check
        %p124 = pneg %p57
      $region14: #{netd32_forward.9} parent=11 // pred_check_branch
        %126 = sbr.rel (%p124) target = $region16
      $region15: #{netd32_forward.9} parent=11 // pred_region
        _
      $region16: #{netd32_forward.9} parent=11 // pred_fallthru
        _
    $region12: #{netd32_forward.9} parent=5 // pred_fallthru
      _
    %p127 = scmp.lt.s32.totalorder %s10, 2
    // Predicated region
    $region17: #{netd32_forward.9} parent=5 // pred_check
      %p128 = pneg %p127
    $region18: #{netd32_forward.9} parent=5 // pred_check_branch
      %130 = sbr.rel (%p128) target = $region20
    $region19: #{netd32_forward.9} parent=5 // pred_region
      // Predicated region
      $region21: #{netd32_forward.9} parent=19 // pred_check
        %p131 = pneg %p30
      $region22: #{netd32_forward.9} parent=19 // pred_check_branch
        %133 = sbr.rel (%p131) target = $region24
      $region23: #{netd32_forward.9} parent=19 // pred_region
        %s134 = smul.u32 8, %s10
        %p135 = scmp.lt.s32.totalorder %s134, 15
        %s136 = scalar_select %p135, %s134, 15
        %s137 = smul.addr %s136, 4
        %s138 = scalar_lea.vmem %s0, %s137
        %s139 = smul.u32 8, %s10
      $region24: #{netd32_forward.9} parent=19 // pred_fallthru
        _
    $region20: #{netd32_forward.9} parent=5 // pred_fallthru
      _
    %p140 = scmp.le.s32.totalorder 1, %s10
    %p141 = scmp.lt.s32.totalorder %s10, 3
    %p142 = pnand %p140, %p141
    %p143 = pneg %p142
    // Predicated region
    $region25: #{netd32_forward.9} parent=5 // pred_check
      _
    $region26: #{netd32_forward.9} parent=5 // pred_check_branch
      %145 = sbr.rel (%p142) target = $region28
    $region27: #{netd32_forward.9} parent=5 // pred_region
      %s146 = ssub.s32 %s10, 1
      %s147 = smul.u32 8, %s15
      %p148 = scmp.lt.s32.totalorder %s147, 15
      %s149 = scalar_select %p148, %s147, 15
      %s150 = smul.addr %s149, 4
      %s151 = scalar_lea.vmem %s0, %s150
      %p152 = pneg %p36
      %p153 = pneg %p33
      %p154 = pneg %p57
      %p155 = pneg %p54
      %p156 = pneg %p83
      %p157 = pneg %p80
      %s158 = smul.u32 8, %s15
      %p159 = scmp.lt.s32.totalorder %s158, 15
      %s160 = scalar_select %p159, %s158, 15
      %s161 = smul.addr %s160, 4
      %s162 = scalar_lea.vmem %s2, %s161
      %p163 = pneg %p109
      %p164 = pneg %p106
      %p165 = scmp.lt.s32.totalorder %s15, 1
      %s166 = scalar_select %p165, %s15, 1
      %s167 = smul.addr %s166, 2
      %s168 = scalar_lea.vmem %s3, %s167
      %s169 = smul.u32 8, %s15
      %p170 = scmp.lt.s32.totalorder %s169, 15
      %s171 = scalar_select %p170, %s169, 15
      %s172 = smul.addr %s171, 4
      %s173 = scalar_lea.vmem %s0, %s172
      %s174 = smul.u32 8, %s15
      %s175 = smul.u32 8, %s15
      %p176 = scmp.lt.s32.totalorder %s175, 15
      %s177 = scalar_select %p176, %s175, 15
      %s178 = smul.addr %s177, 4
      %s179 = scalar_lea.vmem %s2, %s178
      %s180 = smul.u32 8, %s15
      %p181 = scmp.lt.s32.totalorder %s15, 1
      %s182 = scalar_select %p181, %s15, 1
      %s183 = smul.addr %s182, 2
      %s184 = scalar_lea.vmem %s3, %s183
      %v186 = vld [vmem:[%s173] sm:$0xf]
      %v187 = vld [vmem:[%s173 + $0x4] sm:$0xf]
      %v188 = vld [vmem:[%s173 + $0x8] sm:$0xf]
      %v189 = vld [vmem:[%s173 + $0xc] sm:$0xf]
      %v190 = vld [vmem:[%s173 + $0x10] sm:$0xf]
      %v191 = vld [vmem:[%s173 + $0x14] sm:$0xf]
      %v192 = vld [vmem:[%s173 + $0x18] sm:$0xf]
      %v193 = vld [vmem:[%s173 + $0x1c] sm:$0xf]
      %v194 = vld [vmem:[%s1] sm:$0xf]
      %v195 = vld [vmem:[%s1 + $0x4] sm:$0xf]
      %v196 = vld [vmem:[%s1 + $0x8] sm:$0xf]
      %v197 = vld [vmem:[%s1 + $0xc] sm:$0xf]
      %v198 = vld [vmem:[%s1 + $0x10] sm:$0xf]
      %v199 = vld [vmem:[%s1 + $0x14] sm:$0xf]
      %v200 = vld [vmem:[%s1 + $0x18] sm:$0xf]
      %v201 = vld [vmem:[%s1 + $0x1c] sm:$0xf]
      %v202 = vld [vmem:[%s1 + $0x20] sm:$0xf]
      %v203 = vld [vmem:[%s1 + $0x24] sm:$0xf]
      %v204 = vld [vmem:[%s1 + $0x28] sm:$0xf]
      %v205 = vld [vmem:[%s1 + $0x2c] sm:$0xf]
      %v206 = vld [vmem:[%s1 + $0x30] sm:$0xf]
      %v207 = vld [vmem:[%s1 + $0x34] sm:$0xf]
      %v208 = vld [vmem:[%s1 + $0x38] sm:$0xf]
      %v209 = vld [vmem:[%s1 + $0x3c] sm:$0xf]
      %v218 = vunpack.c.l.b16 %v186
      %v219 = vunpack.c.l.b16 %v187
      %v220 = vunpack.c.l.b16 %v188
      %v221 = vunpack.c.l.b16 %v189
      %v222 = vunpack.c.l.b16 %v190
      %v223 = vunpack.c.l.b16 %v191
      %v224 = vunpack.c.l.b16 %v192
      %v225 = vunpack.c.l.b16 %v193
      %v226 = vpack.c.b16 %v219, %v218
      %v227 = vpack.c.b16 %v221, %v220
      %v228 = vpack.c.b16 %v223, %v222
      %v229 = vpack.c.b16 %v225, %v224
      %v250 = vunpack.c.l.b16 %v194
      %v251 = vunpack.c.l.b16 %v195
      %v252 = vunpack.c.l.b16 %v196
      %v253 = vunpack.c.l.b16 %v197
      %v254 = vunpack.c.l.b16 %v198
      %v255 = vunpack.c.l.b16 %v199
      %v256 = vunpack.c.l.b16 %v200
      %v257 = vunpack.c.l.b16 %v201
      %v258 = vunpack.c.l.b16 %v202
      %v259 = vunpack.c.l.b16 %v203
      %v260 = vunpack.c.l.b16 %v204
      %v261 = vunpack.c.l.b16 %v205
      %v262 = vunpack.c.l.b16 %v206
      %v263 = vunpack.c.l.b16 %v207
      %v264 = vunpack.c.l.b16 %v208
      %v265 = vunpack.c.l.b16 %v209
      %v266 = vpack.c.b16 %v251, %v250
      %v267 = vpack.c.b16 %v253, %v252
      %v268 = vpack.c.b16 %v255, %v254
      %v269 = vpack.c.b16 %v257, %v256
      %v270 = vpack.c.b16 %v259, %v258
      %v271 = vpack.c.b16 %v261, %v260
      %v272 = vpack.c.b16 %v263, %v262
      %v273 = vpack.c.b16 %v265, %v264
      %282 = vmatprep.subr.bf16.mxu0 0
      %283 = vmatpush1.bf16.msra.mxu0 %v273
      %284 = vmatprep.subr.bf16.mxu0 0
      %285 = vmatpush1.bf16.msra.mxu0 %v272
      %286 = vmatprep.subr.bf16.mxu0 0
      %287 = vmatpush1.bf16.msra.mxu0 %v271
      %288 = vmatprep.subr.bf16.mxu0 0
      %289 = vmatpush1.bf16.msra.mxu0 %v270
      %290 = vmatprep.subr.bf16.mxu0 0
      %291 = vmatpush1.bf16.msra.mxu0 %v269
      %292 = vmatprep.subr.bf16.mxu0 0
      %293 = vmatpush1.bf16.msra.mxu0 %v268
      %294 = vmatprep.subr.bf16.mxu0 0
      %295 = vmatpush1.bf16.msra.mxu0 %v267
      %296 = vmatprep.subr.bf16.mxu0 0
      %297 = vmatpush1.bf16.msra.mxu0 %v266
      %298 = vmatprep.subr.bf16.mxu0 0
      %299 = vmatpush2.bf16.msra.mxu0 0
      %300 = vmatprep.subr.bf16.mxu0 0
      %301 = vmatpush2.bf16.msra.mxu0 0
      %302 = vmatprep.subr.bf16.mxu0 0
      %303 = vmatpush2.bf16.msra.mxu0 0
      %304 = vmatprep.subr.bf16.mxu0 0
      %305 = vmatpush2.bf16.msra.mxu0 0
      %306 = vmatprep.subr.bf16.mxu0 0
      %307 = vmatpush2.bf16.msra.mxu0 0
      %308 = vmatprep.subr.bf16.mxu0 0
      %309 = vmatpush2.bf16.msra.mxu0 0
      %310 = vmatprep.subr.bf16.mxu0 0
      %311 = vmatpush2.bf16.msra.mxu0 0
      %312 = vmatprep.subr.bf16.mxu0 0
      %313 = vmatpush2.bf16.msra.mxu0 0
      %314 = vmatprep.mubr.bf16.mxu0 0
      %315 = vmatmul.mubr.bf16.gmra.mxu0 %v226
      %v316 = vpop.f32.mrf.mxu0
      %v317 = vadd.f32 0.0, %v316
      %v318 = vpop.f32.mrf.mxu0
      %v319 = vpop.f32.mrf.mxu0
      %v320 = vadd.f32 0.0, %v319
      %v321 = vpop.f32.mrf.mxu0
      %322 = vmatprep.mubr.bf16.mxu0 0
      %323 = vmatmul.mubr.bf16.gmra.mxu0 %v227
      %v324 = vpop.f32.mrf.mxu0
      %v325 = vadd.f32 0.0, %v324
      %v326 = vpop.f32.mrf.mxu0
      %v327 = vpop.f32.mrf.mxu0
      %v328 = vadd.f32 0.0, %v327
      %v329 = vpop.f32.mrf.mxu0
      %330 = vmatprep.mubr.bf16.mxu0 0
      %331 = vmatmul.mubr.bf16.gmra.mxu0 %v228
      %v332 = vpop.f32.mrf.mxu0
      %v333 = vadd.f32 0.0, %v332
      %v334 = vpop.f32.mrf.mxu0
      %v335 = vpop.f32.mrf.mxu0
      %v336 = vadd.f32 0.0, %v335
      %v337 = vpop.f32.mrf.mxu0
      %338 = vmatprep.mubr.bf16.mxu0 0
      %339 = vmatmul.mubr.bf16.gmra.mxu0 %v229
      %v340 = vpop.f32.mrf.mxu0
      %v341 = vadd.f32 0.0, %v340
      %v342 = vpop.f32.mrf.mxu0
      %v343 = vpop.f32.mrf.mxu0
      %v344 = vadd.f32 0.0, %v343
      %v345 = vpop.f32.mrf.mxu0
      %346 = vdwg.mxu0
      %v347 = vadd.f32 %v317, %v320
      %v348 = vadd.f32 %v347, %v325
      %v349 = vadd.f32 %v348, %v328
      %v350 = vadd.f32 %v349, %v333
      %v351 = vadd.f32 %v350, %v336
      %v352 = vadd.f32 %v351, %v341
      %v353 = vadd.f32 %v352, %v344
      %v354 = vrot.slane %v353, 4
      %v355 = vadd.f32 %v353, %v354
      %v356 = vrot.slane %v355, 2
      %v357 = vadd.f32 %v355, %v356
      %v358 = vrot.slane %v357, 1
      %v359 = vadd.f32 %v357, %v358
      %v360 = vmul.f32 %v317, %v317
      %v361 = vmul.f32 %v320, %v320
      %v362 = vmul.f32 %v325, %v325
      %v363 = vmul.f32 %v328, %v328
      %v364 = vmul.f32 %v333, %v333
      %v365 = vmul.f32 %v336, %v336
      %v366 = vmul.f32 %v341, %v341
      %v367 = vmul.f32 %v344, %v344
      %v368 = vadd.f32 %v360, %v361
      %v369 = vadd.f32 %v368, %v362
      %v370 = vadd.f32 %v369, %v363
      %v371 = vadd.f32 %v370, %v364
      %v372 = vadd.f32 %v371, %v365
      %v373 = vadd.f32 %v372, %v366
      %v374 = vadd.f32 %v373, %v367
      %v375 = vrot.slane %v374, 4
      %v376 = vadd.f32 %v374, %v375
      %v377 = vrot.slane %v376, 2
      %v378 = vadd.f32 %v376, %v377
      %v379 = vrot.slane %v378, 1
      %v380 = vadd.f32 %v378, %v379
      %vm381 = vcmask 1040384
      %v382 = vsel %vm381, %v359, %v380
      %383 = vst [vmem:[%s184] sm:$0x3] %v382
      %v384 = vpack.c.bf16 %v320, %v317
      %v385 = vpack.c.bf16 %v328, %v325
      %v386 = vpack.c.bf16 %v336, %v333
      %v387 = vpack.c.bf16 %v344, %v341
      %v392 = vunpack.c.l.b16 %v384
      %v393 = vunpack.c.h.b16 %v384
      %v394 = vunpack.c.l.b16 %v385
      %v395 = vunpack.c.h.b16 %v385
      %v396 = vunpack.c.l.b16 %v386
      %v397 = vunpack.c.h.b16 %v386
      %v398 = vunpack.c.l.b16 %v387
      %v399 = vunpack.c.h.b16 %v387
      %v400 = vpack.c.b16 %v392, %v392
      %v401 = vpack.c.b16 %v393, %v393
      %v402 = vpack.c.b16 %v394, %v394
      %v403 = vpack.c.b16 %v395, %v395
      %v404 = vpack.c.b16 %v396, %v396
      %v405 = vpack.c.b16 %v397, %v397
      %v406 = vpack.c.b16 %v398, %v398
      %v407 = vpack.c.b16 %v399, %v399
      %416 = vst [vmem:[%s179] sm:$0xf] %v400
      %417 = vst [vmem:[%s179 + $0x4] sm:$0xf] %v401
      %418 = vst [vmem:[%s179 + $0x8] sm:$0xf] %v402
      %419 = vst [vmem:[%s179 + $0xc] sm:$0xf] %v403
      %420 = vst [vmem:[%s179 + $0x10] sm:$0xf] %v404
      %421 = vst [vmem:[%s179 + $0x14] sm:$0xf] %v405
      %422 = vst [vmem:[%s179 + $0x18] sm:$0xf] %v406
      %423 = vst [vmem:[%s179 + $0x1c] sm:$0xf] %v407
      %s424 = smul.u32 8, %s15
      %p425 = scmp.lt.s32.totalorder %s424, 15
      %s426 = scalar_select %p425, %s424, 15
      %s427 = smul.addr %s426, 4
      %s428 = scalar_lea.vmem %s2, %s427
      %p429 = scmp.lt.s32.totalorder %s15, 1
      %s430 = scalar_select %p429, %s15, 1
      %s431 = smul.addr %s430, 2
      %s432 = scalar_lea.vmem %s3, %s431
      // Predicated region
      $region29: #{netd32_forward.9} parent=27 // pred_check
        %p433 = pneg %p80
      $region30: #{netd32_forward.9} parent=27 // pred_check_branch
        %435 = sbr.rel (%p433) target = $region32
      $region31: #{netd32_forward.9} parent=27 // pred_region
        %s436 = smul.u32 8, %s15
      $region32: #{netd32_forward.9} parent=27 // pred_fallthru
        _
      // Predicated region
      $region33: #{netd32_forward.9} parent=27 // pred_check
        %p437 = pneg %p106
      $region34: #{netd32_forward.9} parent=27 // pred_check_branch
        %439 = sbr.rel (%p437) target = $region36
      $region35: #{netd32_forward.9} parent=27 // pred_region
        _
      $region36: #{netd32_forward.9} parent=27 // pred_fallthru
        _
    $region28: #{netd32_forward.9} parent=5 // pred_fallthru
      _
    %p440 = scmp.le.s32.totalorder 2, %s10
    // Predicated region
    $region37: #{netd32_forward.9} parent=5 // pred_check
      %p441 = pneg %p440
    $region38: #{netd32_forward.9} parent=5 // pred_check_branch
      %443 = sbr.rel (%p441) target = $region40
    $region39: #{netd32_forward.9} parent=5 // pred_region
      %s444 = ssub.s32 %s10, 2
      // Predicated region
      $region41: #{netd32_forward.9} parent=39 // pred_check
        %p445 = pneg %p86
      $region42: #{netd32_forward.9} parent=39 // pred_check_branch
        %447 = sbr.rel (%p445) target = $region44
      $region43: #{netd32_forward.9} parent=39 // pred_region
        %s448 = smul.u32 8, %s16
        %p449 = scmp.lt.s32.totalorder %s448, 15
        %s450 = scalar_select %p449, %s448, 15
        %s451 = smul.addr %s450, 4
        %s452 = scalar_lea.vmem %s2, %s451
      $region44: #{netd32_forward.9} parent=39 // pred_fallthru
        _
      // Predicated region
      $region45: #{netd32_forward.9} parent=39 // pred_check
        %p453 = pneg %p112
      $region46: #{netd32_forward.9} parent=39 // pred_check_branch
        %455 = sbr.rel (%p453) target = $region48
      $region47: #{netd32_forward.9} parent=39 // pred_region
        %p456 = scmp.lt.s32.totalorder %s16, 1
        %s457 = scalar_select %p456, %s16, 1
        %s458 = smul.addr %s457, 2
        %s459 = scalar_lea.vmem %s3, %s458
      $region48: #{netd32_forward.9} parent=39 // pred_fallthru
        _
    $region40: #{netd32_forward.9} parent=5 // pred_fallthru
      _
  $region6: #{netd32_forward.9} parent=0 // loop_footer
    %s14 = sadd.s32 1, %s10
  $region7: #{netd32_forward.9} parent=0 // loop_footer_branch
    %9 = sbr.rel target = $region3
  $region8: #{netd32_forward.9} parent=0 // loop_exit
    _

// kernel: netd32_forward.10
$region0: #{netd32_forward.10}
  #allocation0 [shape = 'u32[]', space=smem, size = 0x4, offset = 0x4, fixed_abs, tag = 'smem constant byte address 0x4 - core index']
  #allocation1 [shape = 'u32[144,128]{1,0:T(1,128)}', space=vmem, size = 0x12000, scoped, tag = 'internal scratch']
  %s0 = inlined_call_operand.vmem [shape: bf16[128,128], index: 0, kind: input, shape index: {}]
  %s1 = inlined_call_operand.vmem [shape: f32[1,128], index: 1, kind: input, shape index: {}]
  %s2 = inlined_call_operand.vmem [shape: f32[1,128], index: 2, kind: input, shape index: {}]
  %s3 = inlined_call_operand.vmem [shape: bf16[128,128], index: 3, kind: output, shape index: {}]
  %s4 = sld [smem:[#allocation0]]
  $region45: #{netd32_forward.10} parent=0
    _
  %s6 = ssub.s32 1, %s4
  %s7 = scalar_select 0, %s6, %s4
  loop: start=0, step=1, limit=4
  $region2: #{netd32_forward.10} parent=0 // loop_pre_header
    _
  $region3: #{netd32_forward.10} parent=0 // loop_header
    %s9 = sphi 0, %s13
    %p10 = scmp.ge.s32.totalorder %s9, 4
    %s19 = sphi 0, %s21
    %s22 = sphi 0, %s19
    %s23 = sphi 0, %s22
    %s39 = sphi 0, %s23
    %s43 = sphi 0, %s43
    %s45 = sphi 0, %s43
    %s46 = sphi 0, %s45
    %s60 = sphi 0, %s46
    %s64 = sphi 0, %s64
    %s66 = sphi 0, %s64
    %s67 = sphi 0, %s66
    %s81 = sphi 0, %s67
    %s87 = sphi 0, %s89
    %s90 = sphi 0, %s87
    %s91 = sphi 0, %s90
    %s107 = sphi 0, %s91
  $region4: #{netd32_forward.10} parent=0 // loop_header_branch
    %12 = sbr.rel (%p10) target = $region8
  $region5: #{netd32_forward.10} parent=0 // loop_body
    %s14 = ssub.s32 %s9, 1
    %s15 = ssub.s32 %s9, 2
    %s16 = sadd.s32 %s9, 1
    %s17 = ssub.s32 %s9, %s16
    %p18 = scmp.eq.s32.totalorder %s17, 0
    %s20 = sadd.s32 %s19, 1
    %s21 = scalar_select %p18, %s19, %s20
    %p24 = pneg %p18
    %p25 = scmp.eq.s32.totalorder %s9, 1
    %p26 = por %p24, %p25
    %p27 = scmp.ne.s32.totalorder %s19, %s22
    %p28 = scmp.eq.s32.totalorder %s9, 0
    %p29 = por %p27, %p28
    %p30 = scmp.ne.s32.totalorder %s19, %s22
    %p31 = scmp.eq.s32.totalorder %s14, 1
    %p32 = por %p30, %p31
    %p33 = scmp.ne.s32.totalorder %s22, %s23
    %p34 = scmp.eq.s32.totalorder %s14, 0
    %p35 = por %p33, %p34
    %p36 = scmp.ne.s32.totalorder %s22, %s23
    %p37 = scmp.eq.s32.totalorder %s15, 1
    %p38 = por %p36, %p37
    %p40 = scmp.ne.s32.totalorder %s23, %s39
    %p41 = scmp.eq.s32.totalorder %s15, 0
    %p42 = por %p40, %p41
    %s44 = sadd.s32 %s43, 1
    %p47 = scmp.eq.s32.totalorder %s9, 1
    %p48 = scmp.ne.s32.totalorder %s43, %s45
    %p49 = scmp.eq.s32.totalorder %s9, 0
    %p50 = por %p48, %p49
    %p51 = scmp.ne.s32.totalorder %s43, %s45
    %p52 = scmp.eq.s32.totalorder %s14, 1
    %p53 = por %p51, %p52
    %p54 = scmp.ne.s32.totalorder %s45, %s46
    %p55 = scmp.eq.s32.totalorder %s14, 0
    %p56 = por %p54, %p55
    %p57 = scmp.ne.s32.totalorder %s45, %s46
    %p58 = scmp.eq.s32.totalorder %s15, 1
    %p59 = por %p57, %p58
    %p61 = scmp.ne.s32.totalorder %s46, %s60
    %p62 = scmp.eq.s32.totalorder %s15, 0
    %p63 = por %p61, %p62
    %s65 = sadd.s32 %s64, 1
    %p68 = scmp.eq.s32.totalorder %s9, 1
    %p69 = scmp.ne.s32.totalorder %s64, %s66
    %p70 = scmp.eq.s32.totalorder %s9, 0
    %p71 = por %p69, %p70
    %p72 = scmp.ne.s32.totalorder %s64, %s66
    %p73 = scmp.eq.s32.totalorder %s14, 1
    %p74 = por %p72, %p73
    %p75 = scmp.ne.s32.totalorder %s66, %s67
    %p76 = scmp.eq.s32.totalorder %s14, 0
    %p77 = por %p75, %p76
    %p78 = scmp.ne.s32.totalorder %s66, %s67
    %p79 = scmp.eq.s32.totalorder %s15, 1
    %p80 = por %p78, %p79
    %p82 = scmp.ne.s32.totalorder %s67, %s81
    %p83 = scmp.eq.s32.totalorder %s15, 0
    %p84 = por %p82, %p83
    %s85 = ssub.s32 %s9, %s16
    %p86 = scmp.eq.s32.totalorder %s85, 0
    %s88 = sadd.s32 %s87, 1
    %s89 = scalar_select %p86, %s87, %s88
    %p92 = pneg %p86
    %p93 = scmp.eq.s32.totalorder %s9, 1
    %p94 = por %p92, %p93
    %p95 = scmp.ne.s32.totalorder %s87, %s90
    %p96 = scmp.eq.s32.totalorder %s9, 0
    %p97 = por %p95, %p96
    %p98 = scmp.ne.s32.totalorder %s87, %s90
    %p99 = scmp.eq.s32.totalorder %s14, 1
    %p100 = por %p98, %p99
    %p101 = scmp.ne.s32.totalorder %s90, %s91
    %p102 = scmp.eq.s32.totalorder %s14, 0
    %p103 = por %p101, %p102
    %p104 = scmp.ne.s32.totalorder %s90, %s91
    %p105 = scmp.eq.s32.totalorder %s15, 1
    %p106 = por %p104, %p105
    %p108 = scmp.ne.s32.totalorder %s91, %s107
    %p109 = scmp.eq.s32.totalorder %s15, 0
    %p110 = por %p108, %p109
    %p111 = scmp.le.s32.totalorder 1, %s9
    %p112 = scmp.lt.s32.totalorder %s9, 3
    %p113 = pnand %p111, %p112
    %p114 = pneg %p113
    // Predicated region
    $region9: #{netd32_forward.10} parent=5 // pred_check
      _
    $region10: #{netd32_forward.10} parent=5 // pred_check_branch
      %116 = sbr.rel (%p113) target = $region12
    $region11: #{netd32_forward.10} parent=5 // pred_region
      %s117 = ssub.s32 %s9, 1
      // Predicated region
      $region13: #{netd32_forward.10} parent=11 // pred_check
        %p118 = pneg %p56
      $region14: #{netd32_forward.10} parent=11 // pred_check_branch
        %120 = sbr.rel (%p118) target = $region16
      $region15: #{netd32_forward.10} parent=11 // pred_region
        _
      $region16: #{netd32_forward.10} parent=11 // pred_fallthru
        _
      // Predicated region
      $region17: #{netd32_forward.10} parent=11 // pred_check
        %p121 = pneg %p77
      $region18: #{netd32_forward.10} parent=11 // pred_check_branch
        %123 = sbr.rel (%p121) target = $region20
      $region19: #{netd32_forward.10} parent=11 // pred_region
        _
      $region20: #{netd32_forward.10} parent=11 // pred_fallthru
        _
    $region12: #{netd32_forward.10} parent=5 // pred_fallthru
      _
    %p124 = scmp.lt.s32.totalorder %s9, 2
    // Predicated region
    $region21: #{netd32_forward.10} parent=5 // pred_check
      %p125 = pneg %p124
    $region22: #{netd32_forward.10} parent=5 // pred_check_branch
      %127 = sbr.rel (%p125) target = $region24
    $region23: #{netd32_forward.10} parent=5 // pred_region
      // Predicated region
      $region25: #{netd32_forward.10} parent=23 // pred_check
        %p128 = pneg %p29
      $region26: #{netd32_forward.10} parent=23 // pred_check_branch
        %130 = sbr.rel (%p128) target = $region28
      $region27: #{netd32_forward.10} parent=23 // pred_region
        %s131 = smul.u32 8, %s9
        %p132 = scmp.lt.s32.totalorder %s131, 15
        %s133 = scalar_select %p132, %s131, 15
        %s134 = smul.addr %s133, 4
        %s135 = scalar_lea.vmem %s0, %s134
        %s136 = smul.u32 8, %s9
      $region28: #{netd32_forward.10} parent=23 // pred_fallthru
        _
    $region24: #{netd32_forward.10} parent=5 // pred_fallthru
      _
    %p137 = scmp.le.s32.totalorder 1, %s9
    %p138 = scmp.lt.s32.totalorder %s9, 3
    %p139 = pnand %p137, %p138
    %p140 = pneg %p139
    // Predicated region
    $region29: #{netd32_forward.10} parent=5 // pred_check
      _
    $region30: #{netd32_forward.10} parent=5 // pred_check_branch
      %142 = sbr.rel (%p139) target = $region32
    $region31: #{netd32_forward.10} parent=5 // pred_region
      %s143 = ssub.s32 %s9, 1
      %s144 = smul.u32 8, %s14
      %p145 = scmp.lt.s32.totalorder %s144, 15
      %s146 = scalar_select %p145, %s144, 15
      %s147 = smul.addr %s146, 4
      %s148 = scalar_lea.vmem %s0, %s147
      %p149 = pneg %p35
      %p150 = pneg %p32
      %p151 = pneg %p56
      %p152 = pneg %p53
      %p153 = pneg %p77
      %p154 = pneg %p74
      %p155 = pneg %p103
      %p156 = pneg %p100
      %s157 = smul.u32 8, %s14
      %p158 = scmp.lt.s32.totalorder %s157, 15
      %s159 = scalar_select %p158, %s157, 15
      %s160 = smul.addr %s159, 4
      %s161 = scalar_lea.vmem %s3, %s160
      %s162 = smul.u32 8, %s14
      %p163 = scmp.lt.s32.totalorder %s162, 15
      %s164 = scalar_select %p163, %s162, 15
      %s165 = smul.addr %s164, 4
      %s166 = scalar_lea.vmem %s0, %s165
      %s167 = smul.u32 8, %s14
      %s168 = smul.u32 8, %s14
      %p169 = scmp.lt.s32.totalorder %s168, 15
      %s170 = scalar_select %p169, %s168, 15
      %s171 = smul.addr %s170, 4
      %s172 = scalar_lea.vmem %s3, %s171
      %s173 = smul.u32 8, %s14
      %v174 = vld [vmem:[%s166] sm:$0xf]
      %v175 = vld [vmem:[%s166 + $0x4] sm:$0xf]
      %v176 = vld [vmem:[%s166 + $0x8] sm:$0xf]
      %v177 = vld [vmem:[%s166 + $0xc] sm:$0xf]
      %v178 = vld [vmem:[%s166 + $0x10] sm:$0xf]
      %v179 = vld [vmem:[%s166 + $0x14] sm:$0xf]
      %v180 = vld [vmem:[%s166 + $0x18] sm:$0xf]
      %v181 = vld [vmem:[%s166 + $0x1c] sm:$0xf]
      %v182 = vunpack.c.l.bf16 %v174
      %v183 = vunpack.c.l.bf16 %v175
      %v184 = vunpack.c.l.bf16 %v176
      %v185 = vunpack.c.l.bf16 %v177
      %v186 = vunpack.c.l.bf16 %v178
      %v187 = vunpack.c.l.bf16 %v179
      %v188 = vunpack.c.l.bf16 %v180
      %v189 = vunpack.c.l.bf16 %v181
      %v190 = vld [vmem:[%s1] sm:$0x1]
      %v192 = vlaneseq
      %v193 = vshrl.u32 %v192, 7
      %v194 = vsub.s32 0, %v193
      %v195 = vrot.slane %v190, %v194
      %v197 = vmul.f32 %v182, %v195
      %v198 = vmul.f32 %v183, %v195
      %v199 = vmul.f32 %v184, %v195
      %v200 = vmul.f32 %v185, %v195
      %v201 = vmul.f32 %v186, %v195
      %v202 = vmul.f32 %v187, %v195
      %v203 = vmul.f32 %v188, %v195
      %v204 = vmul.f32 %v189, %v195
      %v205 = vld [vmem:[%s2] sm:$0x1]
      %v207 = vlaneseq
      %v208 = vshrl.u32 %v207, 7
      %v209 = vsub.s32 0, %v208
      %v210 = vrot.slane %v205, %v209
      %v212 = vadd.f32 %v197, %v210
      %v213 = vadd.f32 %v198, %v210
      %v214 = vadd.f32 %v199, %v210
      %v215 = vadd.f32 %v200, %v210
      %v216 = vadd.f32 %v201, %v210
      %v217 = vadd.f32 %v202, %v210
      %v218 = vadd.f32 %v203, %v210
      %v219 = vadd.f32 %v204, %v210
      %v220 = vmul.f32 %v212, 0.2
      %v221 = vmul.f32 %v213, 0.2
      %v222 = vmul.f32 %v214, 0.2
      %v223 = vmul.f32 %v215, 0.2
      %v224 = vmul.f32 %v216, 0.2
      %v225 = vmul.f32 %v217, 0.2
      %v226 = vmul.f32 %v218, 0.2
      %v227 = vmul.f32 %v219, 0.2
      %v228 = vmax.f32 %v212, %v220
      %v229 = vmax.f32 %v213, %v221
      %v230 = vmax.f32 %v214, %v222
      %v231 = vmax.f32 %v215, %v223
      %v232 = vmax.f32 %v216, %v224
      %v233 = vmax.f32 %v217, %v225
      %v234 = vmax.f32 %v218, %v226
      %v235 = vmax.f32 %v219, %v227
      %v236 = vpack.c.bf16 %v229, %v228
      %v237 = vpack.c.bf16 %v231, %v230
      %v238 = vpack.c.bf16 %v233, %v232
      %v239 = vpack.c.bf16 %v235, %v234
      %v244 = vunpack.c.l.b16 %v236
      %v245 = vunpack.c.h.b16 %v236
      %v246 = vunpack.c.l.b16 %v237
      %v247 = vunpack.c.h.b16 %v237
      %v248 = vunpack.c.l.b16 %v238
      %v249 = vunpack.c.h.b16 %v238
      %v250 = vunpack.c.l.b16 %v239
      %v251 = vunpack.c.h.b16 %v239
      %v252 = vpack.c.b16 %v244, %v244
      %v253 = vpack.c.b16 %v245, %v245
      %v254 = vpack.c.b16 %v246, %v246
      %v255 = vpack.c.b16 %v247, %v247
      %v256 = vpack.c.b16 %v248, %v248
      %v257 = vpack.c.b16 %v249, %v249
      %v258 = vpack.c.b16 %v250, %v250
      %v259 = vpack.c.b16 %v251, %v251
      %268 = vst [vmem:[%s172] sm:$0xf] %v252
      %269 = vst [vmem:[%s172 + $0x4] sm:$0xf] %v253
      %270 = vst [vmem:[%s172 + $0x8] sm:$0xf] %v254
      %271 = vst [vmem:[%s172 + $0xc] sm:$0xf] %v255
      %272 = vst [vmem:[%s172 + $0x10] sm:$0xf] %v256
      %273 = vst [vmem:[%s172 + $0x14] sm:$0xf] %v257
      %274 = vst [vmem:[%s172 + $0x18] sm:$0xf] %v258
      %275 = vst [vmem:[%s172 + $0x1c] sm:$0xf] %v259
      %s276 = smul.u32 8, %s14
      %p277 = scmp.lt.s32.totalorder %s276, 15
      %s278 = scalar_select %p277, %s276, 15
      %s279 = smul.addr %s278, 4
      %s280 = scalar_lea.vmem %s3, %s279
      // Predicated region
      $region33: #{netd32_forward.10} parent=31 // pred_check
        %p281 = pneg %p100
      $region34: #{netd32_forward.10} parent=31 // pred_check_branch
        %283 = sbr.rel (%p281) target = $region36
      $region35: #{netd32_forward.10} parent=31 // pred_region
        %s284 = smul.u32 8, %s14
      $region36: #{netd32_forward.10} parent=31 // pred_fallthru
        _
    $region32: #{netd32_forward.10} parent=5 // pred_fallthru
      _
    %p285 = scmp.le.s32.totalorder 2, %s9
    // Predicated region
    $region37: #{netd32_forward.10} parent=5 // pred_check
      %p286 = pneg %p285
    $region38: #{netd32_forward.10} parent=5 // pred_check_branch
      %288 = sbr.rel (%p286) target = $region40
    $region39: #{netd32_forward.10} parent=5 // pred_region
      %s289 = ssub.s32 %s9, 2
      // Predicated region
      $region41: #{netd32_forward.10} parent=39 // pred_check
        %p290 = pneg %p106
      $region42: #{netd32_forward.10} parent=39 // pred_check_branch
        %292 = sbr.rel (%p290) target = $region44
      $region43: #{netd32_forward.10} parent=39 // pred_region
        %s293 = smul.u32 8, %s15
        %p294 = scmp.lt.s32.totalorder %s293, 15
        %s295 = scalar_select %p294, %s293, 15
        %s296 = smul.addr %s295, 4
        %s297 = scalar_lea.vmem %s3, %s296
      $region44: #{netd32_forward.10} parent=39 // pred_fallthru
        _
    $region40: #{netd32_forward.10} parent=5 // pred_fallthru
      _
  $region6: #{netd32_forward.10} parent=0 // loop_footer
    %s13 = sadd.s32 1, %s9
  $region7: #{netd32_forward.10} parent=0 // loop_footer_branch
    %8 = sbr.rel target = $region3
  $region8: #{netd32_forward.10} parent=0 // loop_exit
    _

// kernel: netd32_forward.11
$region0: #{netd32_forward.11}
  #allocation0 [shape = 'u32[]', space=smem, size = 0x4, offset = 0x4, fixed_abs, tag = 'smem constant byte address 0x4 - core index']
  #allocation1 [shape = 'u32[144,128]{1,0:T(1,128)}', space=vmem, size = 0x12000, scoped, tag = 'internal scratch']
  %s0 = inlined_call_operand.vmem [shape: bf16[32,256], index: 0, kind: input, shape index: {}]
  %s1 = inlined_call_operand.vmem [shape: bf16[256,128], index: 1, kind: input, shape index: {}]
  %s2 = inlined_call_operand.vmem [shape: bf16[32,128], index: 2, kind: output, shape index: {0}]
  %s3 = inlined_call_operand.vmem [shape: f32[2,2,128], index: 3, kind: output, shape index: {1}]
  %4 = xla_tuple %s2, %s3
  %s5 = sld [smem:[#allocation0]]
  $region49: #{netd32_forward.11} parent=0
    _
  %s7 = ssub.s32 1, %s5
  %s8 = scalar_select 0, %s7, %s5
  loop: start=0, step=1, limit=4
  $region2: #{netd32_forward.11} parent=0 // loop_pre_header
    _
  $region3: #{netd32_forward.11} parent=0 // loop_header
    %s10 = sphi 0, %s14
    %p11 = scmp.ge.s32.totalorder %s10, 4
    %s20 = sphi 0, %s22
    %s23 = sphi 0, %s20
    %s24 = sphi 0, %s23
    %s40 = sphi 0, %s24
    %s44 = sphi 0, %s44
    %s46 = sphi 0, %s44
    %s47 = sphi 0, %s46
    %s61 = sphi 0, %s47
    %s67 = sphi 0, %s69
    %s70 = sphi 0, %s67
    %s71 = sphi 0, %s70
    %s87 = sphi 0, %s71
    %s93 = sphi 0, %s95
    %s96 = sphi 0, %s93
    %s97 = sphi 0, %s96
    %s113 = sphi 0, %s97
  $region4: #{netd32_forward.11} parent=0 // loop_header_branch
    %13 = sbr.rel (%p11) target = $region8
  $region5: #{netd32_forward.11} parent=0 // loop_body
    %s15 = ssub.s32 %s10, 1
    %s16 = ssub.s32 %s10, 2
    %s17 = sadd.s32 %s10, 1
    %s18 = ssub.s32 %s10, %s17
    %p19 = scmp.eq.s32.totalorder %s18, 0
    %s21 = sadd.s32 %s20, 1
    %s22 = scalar_select %p19, %s20, %s21
    %p25 = pneg %p19
    %p26 = scmp.eq.s32.totalorder %s10, 1
    %p27 = por %p25, %p26
    %p28 = scmp.ne.s32.totalorder %s20, %s23
    %p29 = scmp.eq.s32.totalorder %s10, 0
    %p30 = por %p28, %p29
    %p31 = scmp.ne.s32.totalorder %s20, %s23
    %p32 = scmp.eq.s32.totalorder %s15, 1
    %p33 = por %p31, %p32
    %p34 = scmp.ne.s32.totalorder %s23, %s24
    %p35 = scmp.eq.s32.totalorder %s15, 0
    %p36 = por %p34, %p35
    %p37 = scmp.ne.s32.totalorder %s23, %s24
    %p38 = scmp.eq.s32.totalorder %s16, 1
    %p39 = por %p37, %p38
    %p41 = scmp.ne.s32.totalorder %s24, %s40
    %p42 = scmp.eq.s32.totalorder %s16, 0
    %p43 = por %p41, %p42
    %s45 = sadd.s32 %s44, 1
    %p48 = scmp.eq.s32.totalorder %s10, 1
    %p49 = scmp.ne.s32.totalorder %s44, %s46
    %p50 = scmp.eq.s32.totalorder %s10, 0
    %p51 = por %p49, %p50
    %p52 = scmp.ne.s32.totalorder %s44, %s46
    %p53 = scmp.eq.s32.totalorder %s15, 1
    %p54 = por %p52, %p53
    %p55 = scmp.ne.s32.totalorder %s46, %s47
    %p56 = scmp.eq.s32.totalorder %s15, 0
    %p57 = por %p55, %p56
    %p58 = scmp.ne.s32.totalorder %s46, %s47
    %p59 = scmp.eq.s32.totalorder %s16, 1
    %p60 = por %p58, %p59
    %p62 = scmp.ne.s32.totalorder %s47, %s61
    %p63 = scmp.eq.s32.totalorder %s16, 0
    %p64 = por %p62, %p63
    %s65 = ssub.s32 %s10, %s17
    %p66 = scmp.eq.s32.totalorder %s65, 0
    %s68 = sadd.s32 %s67, 1
    %s69 = scalar_select %p66, %s67, %s68
    %p72 = pneg %p66
    %p73 = scmp.eq.s32.totalorder %s10, 1
    %p74 = por %p72, %p73
    %p75 = scmp.ne.s32.totalorder %s67, %s70
    %p76 = scmp.eq.s32.totalorder %s10, 0
    %p77 = por %p75, %p76
    %p78 = scmp.ne.s32.totalorder %s67, %s70
    %p79 = scmp.eq.s32.totalorder %s15, 1
    %p80 = por %p78, %p79
    %p81 = scmp.ne.s32.totalorder %s70, %s71
    %p82 = scmp.eq.s32.totalorder %s15, 0
    %p83 = por %p81, %p82
    %p84 = scmp.ne.s32.totalorder %s70, %s71
    %p85 = scmp.eq.s32.totalorder %s16, 1
    %p86 = por %p84, %p85
    %p88 = scmp.ne.s32.totalorder %s71, %s87
    %p89 = scmp.eq.s32.totalorder %s16, 0
    %p90 = por %p88, %p89
    %s91 = ssub.s32 %s10, %s17
    %p92 = scmp.eq.s32.totalorder %s91, 0
    %s94 = sadd.s32 %s93, 1
    %s95 = scalar_select %p92, %s93, %s94
    %p98 = pneg %p92
    %p99 = scmp.eq.s32.totalorder %s10, 1
    %p100 = por %p98, %p99
    %p101 = scmp.ne.s32.totalorder %s93, %s96
    %p102 = scmp.eq.s32.totalorder %s10, 0
    %p103 = por %p101, %p102
    %p104 = scmp.ne.s32.totalorder %s93, %s96
    %p105 = scmp.eq.s32.totalorder %s15, 1
    %p106 = por %p104, %p105
    %p107 = scmp.ne.s32.totalorder %s96, %s97
    %p108 = scmp.eq.s32.totalorder %s15, 0
    %p109 = por %p107, %p108
    %p110 = scmp.ne.s32.totalorder %s96, %s97
    %p111 = scmp.eq.s32.totalorder %s16, 1
    %p112 = por %p110, %p111
    %p114 = scmp.ne.s32.totalorder %s97, %s113
    %p115 = scmp.eq.s32.totalorder %s16, 0
    %p116 = por %p114, %p115
    %p117 = scmp.le.s32.totalorder 1, %s10
    %p118 = scmp.lt.s32.totalorder %s10, 3
    %p119 = pnand %p117, %p118
    %p120 = pneg %p119
    // Predicated region
    $region9: #{netd32_forward.11} parent=5 // pred_check
      _
    $region10: #{netd32_forward.11} parent=5 // pred_check_branch
      %122 = sbr.rel (%p119) target = $region12
    $region11: #{netd32_forward.11} parent=5 // pred_region
      %s123 = ssub.s32 %s10, 1
      // Predicated region
      $region13: #{netd32_forward.11} parent=11 // pred_check
        %p124 = pneg %p57
      $region14: #{netd32_forward.11} parent=11 // pred_check_branch
        %126 = sbr.rel (%p124) target = $region16
      $region15: #{netd32_forward.11} parent=11 // pred_region
        _
      $region16: #{netd32_forward.11} parent=11 // pred_fallthru
        _
    $region12: #{netd32_forward.11} parent=5 // pred_fallthru
      _
    %p127 = scmp.lt.s32.totalorder %s10, 2
    // Predicated region
    $region17: #{netd32_forward.11} parent=5 // pred_check
      %p128 = pneg %p127
    $region18: #{netd32_forward.11} parent=5 // pred_check_branch
      %130 = sbr.rel (%p128) target = $region20
    $region19: #{netd32_forward.11} parent=5 // pred_region
      // Predicated region
      $region21: #{netd32_forward.11} parent=19 // pred_check
        %p131 = pneg %p30
      $region22: #{netd32_forward.11} parent=19 // pred_check_branch
        %133 = sbr.rel (%p131) target = $region24
      $region23: #{netd32_forward.11} parent=19 // pred_region
        %s134 = smul.u32 2, %s10
        %p135 = scmp.lt.s32.totalorder %s134, 3
        %s136 = scalar_select %p135, %s134, 3
        %s137 = smul.addr %s136, 2
        %s138 = smul.addr %s137, 4
        %s139 = scalar_lea.vmem %s0, %s138
        %s140 = smul.u32 2, %s10
      $region24: #{netd32_forward.11} parent=19 // pred_fallthru
        _
    $region20: #{netd32_forward.11} parent=5 // pred_fallthru
      _
    %p141 = scmp.le.s32.totalorder 1, %s10
    %p142 = scmp.lt.s32.totalorder %s10, 3
    %p143 = pnand %p141, %p142
    %p144 = pneg %p143
    // Predicated region
    $region25: #{netd32_forward.11} parent=5 // pred_check
      _
    $region26: #{netd32_forward.11} parent=5 // pred_check_branch
      %146 = sbr.rel (%p143) target = $region28
    $region27: #{netd32_forward.11} parent=5 // pred_region
      %s147 = ssub.s32 %s10, 1
      %s148 = smul.u32 2, %s15
      %p149 = scmp.lt.s32.totalorder %s148, 3
      %s150 = scalar_select %p149, %s148, 3
      %s151 = smul.addr %s150, 2
      %s152 = smul.addr %s151, 4
      %s153 = scalar_lea.vmem %s0, %s152
      %p154 = pneg %p36
      %p155 = pneg %p33
      %p156 = pneg %p57
      %p157 = pneg %p54
      %p158 = pneg %p83
      %p159 = pneg %p80
      %s160 = smul.u32 2, %s15
      %p161 = scmp.lt.s32.totalorder %s160, 3
      %s162 = scalar_select %p161, %s160, 3
      %s163 = smul.addr %s162, 4
      %s164 = scalar_lea.vmem %s2, %s163
      %p165 = pneg %p109
      %p166 = pneg %p106
      %p167 = scmp.lt.s32.totalorder %s15, 1
      %s168 = scalar_select %p167, %s15, 1
      %s169 = smul.addr %s168, 2
      %s170 = scalar_lea.vmem %s3, %s169
      %s171 = smul.u32 2, %s15
      %p172 = scmp.lt.s32.totalorder %s171, 3
      %s173 = scalar_select %p172, %s171, 3
      %s174 = smul.addr %s173, 2
      %s175 = smul.addr %s174, 4
      %s176 = scalar_lea.vmem %s0, %s175
      %s177 = smul.u32 2, %s15
      %s178 = smul.u32 2, %s15
      %p179 = scmp.lt.s32.totalorder %s178, 3
      %s180 = scalar_select %p179, %s178, 3
      %s181 = smul.addr %s180, 4
      %s182 = scalar_lea.vmem %s2, %s181
      %s183 = smul.u32 2, %s15
      %p184 = scmp.lt.s32.totalorder %s15, 1
      %s185 = scalar_select %p184, %s15, 1
      %s186 = smul.addr %s185, 2
      %s187 = scalar_lea.vmem %s3, %s186
      %v189 = vld [vmem:[%s176] sm:$0xff]
      %v190 = vld [vmem:[%s176 + $0x8] sm:$0xff]
      %v191 = vld [vmem:[%s1] sm:$0xf]
      %v192 = vld [vmem:[%s1 + $0x4] sm:$0xf]
      %v193 = vld [vmem:[%s1 + $0x8] sm:$0xf]
      %v194 = vld [vmem:[%s1 + $0xc] sm:$0xf]
      %v195 = vld [vmem:[%s1 + $0x10] sm:$0xf]
      %v196 = vld [vmem:[%s1 + $0x14] sm:$0xf]
      %v197 = vld [vmem:[%s1 + $0x18] sm:$0xf]
      %v198 = vld [vmem:[%s1 + $0x1c] sm:$0xf]
      %v199 = vld [vmem:[%s1 + $0x20] sm:$0xf]
      %v200 = vld [vmem:[%s1 + $0x24] sm:$0xf]
      %v201 = vld [vmem:[%s1 + $0x28] sm:$0xf]
      %v202 = vld [vmem:[%s1 + $0x2c] sm:$0xf]
      %v203 = vld [vmem:[%s1 + $0x30] sm:$0xf]
      %v204 = vld [vmem:[%s1 + $0x34] sm:$0xf]
      %v205 = vld [vmem:[%s1 + $0x38] sm:$0xf]
      %v206 = vld [vmem:[%s1 + $0x3c] sm:$0xf]
      %v207 = vld [vmem:[%s1 + $0x40] sm:$0xf]
      %v208 = vld [vmem:[%s1 + $0x44] sm:$0xf]
      %v209 = vld [vmem:[%s1 + $0x48] sm:$0xf]
      %v210 = vld [vmem:[%s1 + $0x4c] sm:$0xf]
      %v211 = vld [vmem:[%s1 + $0x50] sm:$0xf]
      %v212 = vld [vmem:[%s1 + $0x54] sm:$0xf]
      %v213 = vld [vmem:[%s1 + $0x58] sm:$0xf]
      %v214 = vld [vmem:[%s1 + $0x5c] sm:$0xf]
      %v215 = vld [vmem:[%s1 + $0x60] sm:$0xf]
      %v216 = vld [vmem:[%s1 + $0x64] sm:$0xf]
      %v217 = vld [vmem:[%s1 + $0x68] sm:$0xf]
      %v218 = vld [vmem:[%s1 + $0x6c] sm:$0xf]
      %v219 = vld [vmem:[%s1 + $0x70] sm:$0xf]
      %v220 = vld [vmem:[%s1 + $0x74] sm:$0xf]
      %v221 = vld [vmem:[%s1 + $0x78] sm:$0xf]
      %v222 = vld [vmem:[%s1 + $0x7c] sm:$0xf]
      %v225 = vunpack.c.l.b16 %v189
      %v226 = vunpack.c.h.b16 %v189
      %v227 = vunpack.c.l.b16 %v190
      %v228 = vunpack.c.h.b16 %v190
      %v229 = vpack.c.b16 %v227, %v225
      %v230 = vpack.c.b16 %v228, %v226
      %v265 = vunpack.c.l.b16 %v191
      %v266 = vunpack.c.l.b16 %v192
      %v267 = vunpack.c.l.b16 %v193
      %v268 = vunpack.c.l.b16 %v194
      %v269 = vunpack.c.l.b16 %v195
      %v270 = vunpack.c.l.b16 %v196
      %v271 = vunpack.c.l.b16 %v197
      %v272 = vunpack.c.l.b16 %v198
      %v273 = vunpack.c.l.b16 %v199
      %v274 = vunpack.c.l.b16 %v200
      %v275 = vunpack.c.l.b16 %v201
      %v276 = vunpack.c.l.b16 %v202
      %v277 = vunpack.c.l.b16 %v203
      %v278 = vunpack.c.l.b16 %v204
      %v279 = vunpack.c.l.b16 %v205
      %v280 = vunpack.c.l.b16 %v206
      %v281 = vunpack.c.l.b16 %v207
      %v282 = vunpack.c.l.b16 %v208
      %v283 = vunpack.c.l.b16 %v209
      %v284 = vunpack.c.l.b16 %v210
      %v285 = vunpack.c.l.b16 %v211
      %v286 = vunpack.c.l.b16 %v212
      %v287 = vunpack.c.l.b16 %v213
      %v288 = vunpack.c.l.b16 %v214
      %v289 = vunpack.c.l.b16 %v215
      %v290 = vunpack.c.l.b16 %v216
      %v291 = vunpack.c.l.b16 %v217
      %v292 = vunpack.c.l.b16 %v218
      %v293 = vunpack.c.l.b16 %v219
      %v294 = vunpack.c.l.b16 %v220
      %v295 = vunpack.c.l.b16 %v221
      %v296 = vunpack.c.l.b16 %v222
      %v297 = vpack.c.b16 %v266, %v265
      %v298 = vpack.c.b16 %v268, %v267
      %v299 = vpack.c.b16 %v270, %v269
      %v300 = vpack.c.b16 %v272, %v271
      %v301 = vpack.c.b16 %v274, %v273
      %v302 = vpack.c.b16 %v276, %v275
      %v303 = vpack.c.b16 %v278, %v277
      %v304 = vpack.c.b16 %v280, %v279
      %v305 = vpack.c.b16 %v282, %v281
      %v306 = vpack.c.b16 %v284, %v283
      %v307 = vpack.c.b16 %v286, %v285
      %v308 = vpack.c.b16 %v288, %v287
      %v309 = vpack.c.b16 %v290, %v289
      %v310 = vpack.c.b16 %v292, %v291
      %v311 = vpack.c.b16 %v294, %v293
      %v312 = vpack.c.b16 %v296, %v295
      %329 = vmatprep.subr.bf16.mxu0 0
      %330 = vmatpush1.bf16.msra.mxu0 %v304
      %331 = vmatprep.subr.bf16.mxu0 0
      %332 = vmatpush1.bf16.msra.mxu0 %v303
      %333 = vmatprep.subr.bf16.mxu0 0
      %334 = vmatpush1.bf16.msra.mxu0 %v302
      %335 = vmatprep.subr.bf16.mxu0 0
      %336 = vmatpush1.bf16.msra.mxu0 %v301
      %337 = vmatprep.subr.bf16.mxu0 0
      %338 = vmatpush1.bf16.msra.mxu0 %v300
      %339 = vmatprep.subr.bf16.mxu0 0
      %340 = vmatpush1.bf16.msra.mxu0 %v299
      %341 = vmatprep.subr.bf16.mxu0 0
      %342 = vmatpush1.bf16.msra.mxu0 %v298
      %343 = vmatprep.subr.bf16.mxu0 0
      %344 = vmatpush1.bf16.msra.mxu0 %v297
      %345 = vmatprep.subr.bf16.mxu0 0
      %346 = vmatpush2.bf16.msra.mxu0 %v312
      %347 = vmatprep.subr.bf16.mxu0 0
      %348 = vmatpush2.bf16.msra.mxu0 %v311
      %349 = vmatprep.subr.bf16.mxu0 0
      %350 = vmatpush2.bf16.msra.mxu0 %v310
      %351 = vmatprep.subr.bf16.mxu0 0
      %352 = vmatpush2.bf16.msra.mxu0 %v309
      %353 = vmatprep.subr.bf16.mxu0 0
      %354 = vmatpush2.bf16.msra.mxu0 %v308
      %355 = vmatprep.subr.bf16.mxu0 0
      %356 = vmatpush2.bf16.msra.mxu0 %v307
      %357 = vmatprep.subr.bf16.mxu0 0
      %358 = vmatpush2.bf16.msra.mxu0 %v306
      %359 = vmatprep.subr.bf16.mxu0 0
      %360 = vmatpush2.bf16.msra.mxu0 %v305
      %361 = vmatprep.mubr.bf16.mxu0 %v230
      %362 = vmatmul.mubr.bf16.gmra.mxu0 %v229
      %v363 = vpop.f32.mrf.mxu0
      %v364 = vadd.f32 0.0, %v363
      %v365 = vpop.f32.mrf.mxu0
      %v366 = vpop.f32.mrf.mxu0
      %v367 = vadd.f32 0.0, %v366
      %v368 = vpop.f32.mrf.mxu0
      %369 = vdwg.mxu0
      %v370 = vadd.f32 %v364, %v367
      %v371 = vrot.slane %v370, 4
      %v372 = vadd.f32 %v370, %v371
      %v373 = vrot.slane %v372, 2
      %v374 = vadd.f32 %v372, %v373
      %v375 = vrot.slane %v374, 1
      %v376 = vadd.f32 %v374, %v375
      %v377 = vmul.f32 %v364, %v364
      %v378 = vmul.f32 %v367, %v367
      %v379 = vadd.f32 %v377, %v378
      %v380 = vrot.slane %v379, 4
      %v381 = vadd.f32 %v379, %v380
      %v382 = vrot.slane %v381, 2
      %v383 = vadd.f32 %v381, %v382
      %v384 = vrot.slane %v383, 1
      %v385 = vadd.f32 %v383, %v384
      %vm386 = vcmask 1040384
      %v387 = vsel %vm386, %v376, %v385
      %388 = vst [vmem:[%s187] sm:$0x3] %v387
      %v389 = vpack.c.bf16 %v367, %v364
      %v391 = vunpack.c.l.b16 %v389
      %v392 = vunpack.c.h.b16 %v389
      %v393 = vpack.c.b16 %v391, %v391
      %v394 = vpack.c.b16 %v392, %v392
      %397 = vst [vmem:[%s182] sm:$0xf] %v393
      %398 = vst [vmem:[%s182 + $0x4] sm:$0xf] %v394
      %s399 = smul.u32 2, %s15
      %p400 = scmp.lt.s32.totalorder %s399, 3
      %s401 = scalar_select %p400, %s399, 3
      %s402 = smul.addr %s401, 4
      %s403 = scalar_lea.vmem %s2, %s402
      %p404 = scmp.lt.s32.totalorder %s15, 1
      %s405 = scalar_select %p404, %s15, 1
      %s406 = smul.addr %s405, 2
      %s407 = scalar_lea.vmem %s3, %s406
      // Predicated region
      $region29: #{netd32_forward.11} parent=27 // pred_check
        %p408 = pneg %p80
      $region30: #{netd32_forward.11} parent=27 // pred_check_branch
        %410 = sbr.rel (%p408) target = $region32
      $region31: #{netd32_forward.11} parent=27 // pred_region
        %s411 = smul.u32 2, %s15
      $region32: #{netd32_forward.11} parent=27 // pred_fallthru
        _
      // Predicated region
      $region33: #{netd32_forward.11} parent=27 // pred_check
        %p412 = pneg %p106
      $region34: #{netd32_forward.11} parent=27 // pred_check_branch
        %414 = sbr.rel (%p412) target = $region36
      $region35: #{netd32_forward.11} parent=27 // pred_region
        _
      $region36: #{netd32_forward.11} parent=27 // pred_fallthru
        _
    $region28: #{netd32_forward.11} parent=5 // pred_fallthru
      _
    %p415 = scmp.le.s32.totalorder 2, %s10
    // Predicated region
    $region37: #{netd32_forward.11} parent=5 // pred_check
      %p416 = pneg %p415
    $region38: #{netd32_forward.11} parent=5 // pred_check_branch
      %418 = sbr.rel (%p416) target = $region40
    $region39: #{netd32_forward.11} parent=5 // pred_region
      %s419 = ssub.s32 %s10, 2
      // Predicated region
      $region41: #{netd32_forward.11} parent=39 // pred_check
        %p420 = pneg %p86
      $region42: #{netd32_forward.11} parent=39 // pred_check_branch
        %422 = sbr.rel (%p420) target = $region44
      $region43: #{netd32_forward.11} parent=39 // pred_region
        %s423 = smul.u32 2, %s16
        %p424 = scmp.lt.s32.totalorder %s423, 3
        %s425 = scalar_select %p424, %s423, 3
        %s426 = smul.addr %s425, 4
        %s427 = scalar_lea.vmem %s2, %s426
      $region44: #{netd32_forward.11} parent=39 // pred_fallthru
        _
      // Predicated region
      $region45: #{netd32_forward.11} parent=39 // pred_check
        %p428 = pneg %p112
      $region46: #{netd32_forward.11} parent=39 // pred_check_branch
        %430 = sbr.rel (%p428) target = $region48
      $region47: #{netd32_forward.11} parent=39 // pred_region
        %p431 = scmp.lt.s32.totalorder %s16, 1
        %s432 = scalar_select %p431, %s16, 1
        %s433 = smul.addr %s432, 2
        %s434 = scalar_lea.vmem %s3, %s433
      $region48: #{netd32_forward.11} parent=39 // pred_fallthru
        _
    $region40: #{netd32_forward.11} parent=5 // pred_fallthru
      _
  $region6: #{netd32_forward.11} parent=0 // loop_footer
    %s14 = sadd.s32 1, %s10
  $region7: #{netd32_forward.11} parent=0 // loop_footer_branch
    %9 = sbr.rel target = $region3
  $region8: #{netd32_forward.11} parent=0 // loop_exit
    _

// kernel: netd32_forward.12
$region0: #{netd32_forward.12}
  #allocation0 [shape = 'u32[]', space=smem, size = 0x4, offset = 0x4, fixed_abs, tag = 'smem constant byte address 0x4 - core index']
  #allocation1 [shape = 'u32[144,128]{1,0:T(1,128)}', space=vmem, size = 0x12000, scoped, tag = 'internal scratch']
  %s0 = inlined_call_operand.vmem [shape: bf16[32,128], index: 0, kind: input, shape index: {}]
  %s1 = inlined_call_operand.vmem [shape: f32[1,128], index: 1, kind: input, shape index: {}]
  %s2 = inlined_call_operand.vmem [shape: f32[1,128], index: 2, kind: input, shape index: {}]
  %s3 = inlined_call_operand.vmem [shape: bf16[32,128], index: 3, kind: output, shape index: {}]
  %s4 = sld [smem:[#allocation0]]
  $region45: #{netd32_forward.12} parent=0
    _
  %s6 = ssub.s32 1, %s4
  %s7 = scalar_select 0, %s6, %s4
  loop: start=0, step=1, limit=4
  $region2: #{netd32_forward.12} parent=0 // loop_pre_header
    _
  $region3: #{netd32_forward.12} parent=0 // loop_header
    %s9 = sphi 0, %s13
    %p10 = scmp.ge.s32.totalorder %s9, 4
    %s19 = sphi 0, %s21
    %s22 = sphi 0, %s19
    %s23 = sphi 0, %s22
    %s39 = sphi 0, %s23
    %s43 = sphi 0, %s43
    %s45 = sphi 0, %s43
    %s46 = sphi 0, %s45
    %s60 = sphi 0, %s46
    %s64 = sphi 0, %s64
    %s66 = sphi 0, %s64
    %s67 = sphi 0, %s66
    %s81 = sphi 0, %s67
    %s87 = sphi 0, %s89
    %s90 = sphi 0, %s87
    %s91 = sphi 0, %s90
    %s107 = sphi 0, %s91
  $region4: #{netd32_forward.12} parent=0 // loop_header_branch
    %12 = sbr.rel (%p10) target = $region8
  $region5: #{netd32_forward.12} parent=0 // loop_body
    %s14 = ssub.s32 %s9, 1
    %s15 = ssub.s32 %s9, 2
    %s16 = sadd.s32 %s9, 1
    %s17 = ssub.s32 %s9, %s16
    %p18 = scmp.eq.s32.totalorder %s17, 0
    %s20 = sadd.s32 %s19, 1
    %s21 = scalar_select %p18, %s19, %s20
    %p24 = pneg %p18
    %p25 = scmp.eq.s32.totalorder %s9, 1
    %p26 = por %p24, %p25
    %p27 = scmp.ne.s32.totalorder %s19, %s22
    %p28 = scmp.eq.s32.totalorder %s9, 0
    %p29 = por %p27, %p28
    %p30 = scmp.ne.s32.totalorder %s19, %s22
    %p31 = scmp.eq.s32.totalorder %s14, 1
    %p32 = por %p30, %p31
    %p33 = scmp.ne.s32.totalorder %s22, %s23
    %p34 = scmp.eq.s32.totalorder %s14, 0
    %p35 = por %p33, %p34
    %p36 = scmp.ne.s32.totalorder %s22, %s23
    %p37 = scmp.eq.s32.totalorder %s15, 1
    %p38 = por %p36, %p37
    %p40 = scmp.ne.s32.totalorder %s23, %s39
    %p41 = scmp.eq.s32.totalorder %s15, 0
    %p42 = por %p40, %p41
    %s44 = sadd.s32 %s43, 1
    %p47 = scmp.eq.s32.totalorder %s9, 1
    %p48 = scmp.ne.s32.totalorder %s43, %s45
    %p49 = scmp.eq.s32.totalorder %s9, 0
    %p50 = por %p48, %p49
    %p51 = scmp.ne.s32.totalorder %s43, %s45
    %p52 = scmp.eq.s32.totalorder %s14, 1
    %p53 = por %p51, %p52
    %p54 = scmp.ne.s32.totalorder %s45, %s46
    %p55 = scmp.eq.s32.totalorder %s14, 0
    %p56 = por %p54, %p55
    %p57 = scmp.ne.s32.totalorder %s45, %s46
    %p58 = scmp.eq.s32.totalorder %s15, 1
    %p59 = por %p57, %p58
    %p61 = scmp.ne.s32.totalorder %s46, %s60
    %p62 = scmp.eq.s32.totalorder %s15, 0
    %p63 = por %p61, %p62
    %s65 = sadd.s32 %s64, 1
    %p68 = scmp.eq.s32.totalorder %s9, 1
    %p69 = scmp.ne.s32.totalorder %s64, %s66
    %p70 = scmp.eq.s32.totalorder %s9, 0
    %p71 = por %p69, %p70
    %p72 = scmp.ne.s32.totalorder %s64, %s66
    %p73 = scmp.eq.s32.totalorder %s14, 1
    %p74 = por %p72, %p73
    %p75 = scmp.ne.s32.totalorder %s66, %s67
    %p76 = scmp.eq.s32.totalorder %s14, 0
    %p77 = por %p75, %p76
    %p78 = scmp.ne.s32.totalorder %s66, %s67
    %p79 = scmp.eq.s32.totalorder %s15, 1
    %p80 = por %p78, %p79
    %p82 = scmp.ne.s32.totalorder %s67, %s81
    %p83 = scmp.eq.s32.totalorder %s15, 0
    %p84 = por %p82, %p83
    %s85 = ssub.s32 %s9, %s16
    %p86 = scmp.eq.s32.totalorder %s85, 0
    %s88 = sadd.s32 %s87, 1
    %s89 = scalar_select %p86, %s87, %s88
    %p92 = pneg %p86
    %p93 = scmp.eq.s32.totalorder %s9, 1
    %p94 = por %p92, %p93
    %p95 = scmp.ne.s32.totalorder %s87, %s90
    %p96 = scmp.eq.s32.totalorder %s9, 0
    %p97 = por %p95, %p96
    %p98 = scmp.ne.s32.totalorder %s87, %s90
    %p99 = scmp.eq.s32.totalorder %s14, 1
    %p100 = por %p98, %p99
    %p101 = scmp.ne.s32.totalorder %s90, %s91
    %p102 = scmp.eq.s32.totalorder %s14, 0
    %p103 = por %p101, %p102
    %p104 = scmp.ne.s32.totalorder %s90, %s91
    %p105 = scmp.eq.s32.totalorder %s15, 1
    %p106 = por %p104, %p105
    %p108 = scmp.ne.s32.totalorder %s91, %s107
    %p109 = scmp.eq.s32.totalorder %s15, 0
    %p110 = por %p108, %p109
    %p111 = scmp.le.s32.totalorder 1, %s9
    %p112 = scmp.lt.s32.totalorder %s9, 3
    %p113 = pnand %p111, %p112
    %p114 = pneg %p113
    // Predicated region
    $region9: #{netd32_forward.12} parent=5 // pred_check
      _
    $region10: #{netd32_forward.12} parent=5 // pred_check_branch
      %116 = sbr.rel (%p113) target = $region12
    $region11: #{netd32_forward.12} parent=5 // pred_region
      %s117 = ssub.s32 %s9, 1
      // Predicated region
      $region13: #{netd32_forward.12} parent=11 // pred_check
        %p118 = pneg %p56
      $region14: #{netd32_forward.12} parent=11 // pred_check_branch
        %120 = sbr.rel (%p118) target = $region16
      $region15: #{netd32_forward.12} parent=11 // pred_region
        _
      $region16: #{netd32_forward.12} parent=11 // pred_fallthru
        _
      // Predicated region
      $region17: #{netd32_forward.12} parent=11 // pred_check
        %p121 = pneg %p77
      $region18: #{netd32_forward.12} parent=11 // pred_check_branch
        %123 = sbr.rel (%p121) target = $region20
      $region19: #{netd32_forward.12} parent=11 // pred_region
        _
      $region20: #{netd32_forward.12} parent=11 // pred_fallthru
        _
    $region12: #{netd32_forward.12} parent=5 // pred_fallthru
      _
    %p124 = scmp.lt.s32.totalorder %s9, 2
    // Predicated region
    $region21: #{netd32_forward.12} parent=5 // pred_check
      %p125 = pneg %p124
    $region22: #{netd32_forward.12} parent=5 // pred_check_branch
      %127 = sbr.rel (%p125) target = $region24
    $region23: #{netd32_forward.12} parent=5 // pred_region
      // Predicated region
      $region25: #{netd32_forward.12} parent=23 // pred_check
        %p128 = pneg %p29
      $region26: #{netd32_forward.12} parent=23 // pred_check_branch
        %130 = sbr.rel (%p128) target = $region28
      $region27: #{netd32_forward.12} parent=23 // pred_region
        %s131 = smul.u32 2, %s9
        %p132 = scmp.lt.s32.totalorder %s131, 3
        %s133 = scalar_select %p132, %s131, 3
        %s134 = smul.addr %s133, 4
        %s135 = scalar_lea.vmem %s0, %s134
        %s136 = smul.u32 2, %s9
      $region28: #{netd32_forward.12} parent=23 // pred_fallthru
        _
    $region24: #{netd32_forward.12} parent=5 // pred_fallthru
      _
    %p137 = scmp.le.s32.totalorder 1, %s9
    %p138 = scmp.lt.s32.totalorder %s9, 3
    %p139 = pnand %p137, %p138
    %p140 = pneg %p139
    // Predicated region
    $region29: #{netd32_forward.12} parent=5 // pred_check
      _
    $region30: #{netd32_forward.12} parent=5 // pred_check_branch
      %142 = sbr.rel (%p139) target = $region32
    $region31: #{netd32_forward.12} parent=5 // pred_region
      %s143 = ssub.s32 %s9, 1
      %s144 = smul.u32 2, %s14
      %p145 = scmp.lt.s32.totalorder %s144, 3
      %s146 = scalar_select %p145, %s144, 3
      %s147 = smul.addr %s146, 4
      %s148 = scalar_lea.vmem %s0, %s147
      %p149 = pneg %p35
      %p150 = pneg %p32
      %p151 = pneg %p56
      %p152 = pneg %p53
      %p153 = pneg %p77
      %p154 = pneg %p74
      %p155 = pneg %p103
      %p156 = pneg %p100
      %s157 = smul.u32 2, %s14
      %p158 = scmp.lt.s32.totalorder %s157, 3
      %s159 = scalar_select %p158, %s157, 3
      %s160 = smul.addr %s159, 4
      %s161 = scalar_lea.vmem %s3, %s160
      %s162 = smul.u32 2, %s14
      %p163 = scmp.lt.s32.totalorder %s162, 3
      %s164 = scalar_select %p163, %s162, 3
      %s165 = smul.addr %s164, 4
      %s166 = scalar_lea.vmem %s0, %s165
      %s167 = smul.u32 2, %s14
      %s168 = smul.u32 2, %s14
      %p169 = scmp.lt.s32.totalorder %s168, 3
      %s170 = scalar_select %p169, %s168, 3
      %s171 = smul.addr %s170, 4
      %s172 = scalar_lea.vmem %s3, %s171
      %s173 = smul.u32 2, %s14
      %v174 = vld [vmem:[%s166] sm:$0xf]
      %v175 = vld [vmem:[%s166 + $0x4] sm:$0xf]
      %v176 = vunpack.c.l.bf16 %v174
      %v177 = vunpack.c.l.bf16 %v175
      %v178 = vld [vmem:[%s1] sm:$0x1]
      %v180 = vlaneseq
      %v181 = vshrl.u32 %v180, 7
      %v182 = vsub.s32 0, %v181
      %v183 = vrot.slane %v178, %v182
      %v185 = vmul.f32 %v176, %v183
      %v186 = vmul.f32 %v177, %v183
      %v187 = vld [vmem:[%s2] sm:$0x1]
      %v189 = vlaneseq
      %v190 = vshrl.u32 %v189, 7
      %v191 = vsub.s32 0, %v190
      %v192 = vrot.slane %v187, %v191
      %v194 = vadd.f32 %v185, %v192
      %v195 = vadd.f32 %v186, %v192
      %v196 = vmul.f32 %v194, 0.2
      %v197 = vmul.f32 %v195, 0.2
      %v198 = vmax.f32 %v194, %v196
      %v199 = vmax.f32 %v195, %v197
      %v200 = vpack.c.bf16 %v199, %v198
      %v202 = vunpack.c.l.b16 %v200
      %v203 = vunpack.c.h.b16 %v200
      %v204 = vpack.c.b16 %v202, %v202
      %v205 = vpack.c.b16 %v203, %v203
      %208 = vst [vmem:[%s172] sm:$0xf] %v204
      %209 = vst [vmem:[%s172 + $0x4] sm:$0xf] %v205
      %s210 = smul.u32 2, %s14
      %p211 = scmp.lt.s32.totalorder %s210, 3
      %s212 = scalar_select %p211, %s210, 3
      %s213 = smul.addr %s212, 4
      %s214 = scalar_lea.vmem %s3, %s213
      // Predicated region
      $region33: #{netd32_forward.12} parent=31 // pred_check
        %p215 = pneg %p100
      $region34: #{netd32_forward.12} parent=31 // pred_check_branch
        %217 = sbr.rel (%p215) target = $region36
      $region35: #{netd32_forward.12} parent=31 // pred_region
        %s218 = smul.u32 2, %s14
      $region36: #{netd32_forward.12} parent=31 // pred_fallthru
        _
    $region32: #{netd32_forward.12} parent=5 // pred_fallthru
      _
    %p219 = scmp.le.s32.totalorder 2, %s9
    // Predicated region
    $region37: #{netd32_forward.12} parent=5 // pred_check
      %p220 = pneg %p219
    $region38: #{netd32_forward.12} parent=5 // pred_check_branch
      %222 = sbr.rel (%p220) target = $region40
    $region39: #{netd32_forward.12} parent=5 // pred_region
      %s223 = ssub.s32 %s9, 2
      // Predicated region
      $region41: #{netd32_forward.12} parent=39 // pred_check
        %p224 = pneg %p106
      $region42: #{netd32_forward.12} parent=39 // pred_check_branch
        %226 = sbr.rel (%p224) target = $region44
      $region43: #{netd32_forward.12} parent=39 // pred_region
        %s227 = smul.u32 2, %s15
        %p228 = scmp.lt.s32.totalorder %s227, 3
        %s229 = scalar_select %p228, %s227, 3
        %s230 = smul.addr %s229, 4
        %s231 = scalar_lea.vmem %s3, %s230
      $region44: #{netd32_forward.12} parent=39 // pred_fallthru
        _
    $region40: #{netd32_forward.12} parent=5 // pred_fallthru
      _
  $region6: #{netd32_forward.12} parent=0 // loop_footer
    %s13 = sadd.s32 1, %s9
  $region7: #{netd32_forward.12} parent=0 // loop_footer_branch
    %8 = sbr.rel target = $region3
  $region8: #{netd32_forward.12} parent=0 // loop_exit
    _

// kernel: netd32_forward.13
$region0: #{netd32_forward.13}
  #allocation0 [shape = 'u32[]', space=smem, size = 0x4, offset = 0x4, fixed_abs, tag = 'smem constant byte address 0x4 - core index']
  #allocation1 [shape = 'u32[144,128]{1,0:T(1,128)}', space=vmem, size = 0x12000, scoped, tag = 'internal scratch']
  %s0 = inlined_call_operand.vmem [shape: bf16[8,512], index: 0, kind: input, shape index: {}]
  %s1 = inlined_call_operand.vmem [shape: bf16[512,128], index: 1, kind: input, shape index: {}]
  %s2 = inlined_call_operand.vmem [shape: f32[8,128], index: 2, kind: output, shape index: {}]
  %s3 = sld [smem:[#allocation0]]
  $region18: #{netd32_forward.13} parent=0
    _
  %s5 = ssub.s32 1, %s3
  %s6 = scalar_select 0, %s5, %s3
  // Predicated region
  $region2: #{netd32_forward.13} parent=0 // pred_check
    _
  $region3: #{netd32_forward.13} parent=0 // pred_check_branch
    %8 = sbr.rel (0) target = $region5
  $region4: #{netd32_forward.13} parent=0 // pred_region
    _
  $region5: #{netd32_forward.13} parent=0 // pred_fallthru
    _
  // Predicated region
  $region6: #{netd32_forward.13} parent=0 // pred_check
    _
  $region7: #{netd32_forward.13} parent=0 // pred_check_branch
    %10 = sbr.rel (0) target = $region9
  $region8: #{netd32_forward.13} parent=0 // pred_region
    _
  $region9: #{netd32_forward.13} parent=0 // pred_fallthru
    _
  %v12 = vld [vmem:[%s0] sm:$0xff]
  %v13 = vld [vmem:[%s0 + $0x8] sm:$0xff]
  %v14 = vld [vmem:[%s1] sm:$0xf]
  %v15 = vld [vmem:[%s1 + $0x4] sm:$0xf]
  %v16 = vld [vmem:[%s1 + $0x8] sm:$0xf]
  %v17 = vld [vmem:[%s1 + $0xc] sm:$0xf]
  %v18 = vld [vmem:[%s1 + $0x10] sm:$0xf]
  %v19 = vld [vmem:[%s1 + $0x14] sm:$0xf]
  %v20 = vld [vmem:[%s1 + $0x18] sm:$0xf]
  %v21 = vld [vmem:[%s1 + $0x1c] sm:$0xf]
  %v22 = vld [vmem:[%s1 + $0x20] sm:$0xf]
  %v23 = vld [vmem:[%s1 + $0x24] sm:$0xf]
  %v24 = vld [vmem:[%s1 + $0x28] sm:$0xf]
  %v25 = vld [vmem:[%s1 + $0x2c] sm:$0xf]
  %v26 = vld [vmem:[%s1 + $0x30] sm:$0xf]
  %v27 = vld [vmem:[%s1 + $0x34] sm:$0xf]
  %v28 = vld [vmem:[%s1 + $0x38] sm:$0xf]
  %v29 = vld [vmem:[%s1 + $0x3c] sm:$0xf]
  %v30 = vld [vmem:[%s1 + $0x40] sm:$0xf]
  %v31 = vld [vmem:[%s1 + $0x44] sm:$0xf]
  %v32 = vld [vmem:[%s1 + $0x48] sm:$0xf]
  %v33 = vld [vmem:[%s1 + $0x4c] sm:$0xf]
  %v34 = vld [vmem:[%s1 + $0x50] sm:$0xf]
  %v35 = vld [vmem:[%s1 + $0x54] sm:$0xf]
  %v36 = vld [vmem:[%s1 + $0x58] sm:$0xf]
  %v37 = vld [vmem:[%s1 + $0x5c] sm:$0xf]
  %v38 = vld [vmem:[%s1 + $0x60] sm:$0xf]
  %v39 = vld [vmem:[%s1 + $0x64] sm:$0xf]
  %v40 = vld [vmem:[%s1 + $0x68] sm:$0xf]
  %v41 = vld [vmem:[%s1 + $0x6c] sm:$0xf]
  %v42 = vld [vmem:[%s1 + $0x70] sm:$0xf]
  %v43 = vld [vmem:[%s1 + $0x74] sm:$0xf]
  %v44 = vld [vmem:[%s1 + $0x78] sm:$0xf]
  %v45 = vld [vmem:[%s1 + $0x7c] sm:$0xf]
  %v46 = vld [vmem:[%s1 + $0x80] sm:$0xf]
  %v47 = vld [vmem:[%s1 + $0x84] sm:$0xf]
  %v48 = vld [vmem:[%s1 + $0x88] sm:$0xf]
  %v49 = vld [vmem:[%s1 + $0x8c] sm:$0xf]
  %v50 = vld [vmem:[%s1 + $0x90] sm:$0xf]
  %v51 = vld [vmem:[%s1 + $0x94] sm:$0xf]
  %v52 = vld [vmem:[%s1 + $0x98] sm:$0xf]
  %v53 = vld [vmem:[%s1 + $0x9c] sm:$0xf]
  %v54 = vld [vmem:[%s1 + $0xa0] sm:$0xf]
  %v55 = vld [vmem:[%s1 + $0xa4] sm:$0xf]
  %v56 = vld [vmem:[%s1 + $0xa8] sm:$0xf]
  %v57 = vld [vmem:[%s1 + $0xac] sm:$0xf]
  %v58 = vld [vmem:[%s1 + $0xb0] sm:$0xf]
  %v59 = vld [vmem:[%s1 + $0xb4] sm:$0xf]
  %v60 = vld [vmem:[%s1 + $0xb8] sm:$0xf]
  %v61 = vld [vmem:[%s1 + $0xbc] sm:$0xf]
  %v62 = vld [vmem:[%s1 + $0xc0] sm:$0xf]
  %v63 = vld [vmem:[%s1 + $0xc4] sm:$0xf]
  %v64 = vld [vmem:[%s1 + $0xc8] sm:$0xf]
  %v65 = vld [vmem:[%s1 + $0xcc] sm:$0xf]
  %v66 = vld [vmem:[%s1 + $0xd0] sm:$0xf]
  %v67 = vld [vmem:[%s1 + $0xd4] sm:$0xf]
  %v68 = vld [vmem:[%s1 + $0xd8] sm:$0xf]
  %v69 = vld [vmem:[%s1 + $0xdc] sm:$0xf]
  %v70 = vld [vmem:[%s1 + $0xe0] sm:$0xf]
  %v71 = vld [vmem:[%s1 + $0xe4] sm:$0xf]
  %v72 = vld [vmem:[%s1 + $0xe8] sm:$0xf]
  %v73 = vld [vmem:[%s1 + $0xec] sm:$0xf]
  %v74 = vld [vmem:[%s1 + $0xf0] sm:$0xf]
  %v75 = vld [vmem:[%s1 + $0xf4] sm:$0xf]
  %v76 = vld [vmem:[%s1 + $0xf8] sm:$0xf]
  %v77 = vld [vmem:[%s1 + $0xfc] sm:$0xf]
  %v80 = vunpack.c.l.b16 %v12
  %v81 = vunpack.c.h.b16 %v12
  %v82 = vunpack.c.l.b16 %v13
  %v83 = vunpack.c.h.b16 %v13
  %v84 = vpack.c.b16 %v80, %v80
  %v85 = vpack.c.b16 %v81, %v81
  %v86 = vpack.c.b16 %v82, %v82
  %v87 = vpack.c.b16 %v83, %v83
  %v156 = vunpack.c.l.b16 %v14
  %v157 = vunpack.c.l.b16 %v15
  %v158 = vunpack.c.l.b16 %v16
  %v159 = vunpack.c.l.b16 %v17
  %v160 = vunpack.c.l.b16 %v18
  %v161 = vunpack.c.l.b16 %v19
  %v162 = vunpack.c.l.b16 %v20
  %v163 = vunpack.c.l.b16 %v21
  %v164 = vunpack.c.l.b16 %v22
  %v165 = vunpack.c.l.b16 %v23
  %v166 = vunpack.c.l.b16 %v24
  %v167 = vunpack.c.l.b16 %v25
  %v168 = vunpack.c.l.b16 %v26
  %v169 = vunpack.c.l.b16 %v27
  %v170 = vunpack.c.l.b16 %v28
  %v171 = vunpack.c.l.b16 %v29
  %v172 = vunpack.c.l.b16 %v30
  %v173 = vunpack.c.l.b16 %v31
  %v174 = vunpack.c.l.b16 %v32
  %v175 = vunpack.c.l.b16 %v33
  %v176 = vunpack.c.l.b16 %v34
  %v177 = vunpack.c.l.b16 %v35
  %v178 = vunpack.c.l.b16 %v36
  %v179 = vunpack.c.l.b16 %v37
  %v180 = vunpack.c.l.b16 %v38
  %v181 = vunpack.c.l.b16 %v39
  %v182 = vunpack.c.l.b16 %v40
  %v183 = vunpack.c.l.b16 %v41
  %v184 = vunpack.c.l.b16 %v42
  %v185 = vunpack.c.l.b16 %v43
  %v186 = vunpack.c.l.b16 %v44
  %v187 = vunpack.c.l.b16 %v45
  %v188 = vunpack.c.l.b16 %v46
  %v189 = vunpack.c.l.b16 %v47
  %v190 = vunpack.c.l.b16 %v48
  %v191 = vunpack.c.l.b16 %v49
  %v192 = vunpack.c.l.b16 %v50
  %v193 = vunpack.c.l.b16 %v51
  %v194 = vunpack.c.l.b16 %v52
  %v195 = vunpack.c.l.b16 %v53
  %v196 = vunpack.c.l.b16 %v54
  %v197 = vunpack.c.l.b16 %v55
  %v198 = vunpack.c.l.b16 %v56
  %v199 = vunpack.c.l.b16 %v57
  %v200 = vunpack.c.l.b16 %v58
  %v201 = vunpack.c.l.b16 %v59
  %v202 = vunpack.c.l.b16 %v60
  %v203 = vunpack.c.l.b16 %v61
  %v204 = vunpack.c.l.b16 %v62
  %v205 = vunpack.c.l.b16 %v63
  %v206 = vunpack.c.l.b16 %v64
  %v207 = vunpack.c.l.b16 %v65
  %v208 = vunpack.c.l.b16 %v66
  %v209 = vunpack.c.l.b16 %v67
  %v210 = vunpack.c.l.b16 %v68
  %v211 = vunpack.c.l.b16 %v69
  %v212 = vunpack.c.l.b16 %v70
  %v213 = vunpack.c.l.b16 %v71
  %v214 = vunpack.c.l.b16 %v72
  %v215 = vunpack.c.l.b16 %v73
  %v216 = vunpack.c.l.b16 %v74
  %v217 = vunpack.c.l.b16 %v75
  %v218 = vunpack.c.l.b16 %v76
  %v219 = vunpack.c.l.b16 %v77
  %v220 = vpack.c.b16 %v157, %v156
  %v221 = vpack.c.b16 %v159, %v158
  %v222 = vpack.c.b16 %v161, %v160
  %v223 = vpack.c.b16 %v163, %v162
  %v224 = vpack.c.b16 %v165, %v164
  %v225 = vpack.c.b16 %v167, %v166
  %v226 = vpack.c.b16 %v169, %v168
  %v227 = vpack.c.b16 %v171, %v170
  %v228 = vpack.c.b16 %v173, %v172
  %v229 = vpack.c.b16 %v175, %v174
  %v230 = vpack.c.b16 %v177, %v176
  %v231 = vpack.c.b16 %v179, %v178
  %v232 = vpack.c.b16 %v181, %v180
  %v233 = vpack.c.b16 %v183, %v182
  %v234 = vpack.c.b16 %v185, %v184
  %v235 = vpack.c.b16 %v187, %v186
  %v236 = vpack.c.b16 %v189, %v188
  %v237 = vpack.c.b16 %v191, %v190
  %v238 = vpack.c.b16 %v193, %v192
  %v239 = vpack.c.b16 %v195, %v194
  %v240 = vpack.c.b16 %v197, %v196
  %v241 = vpack.c.b16 %v199, %v198
  %v242 = vpack.c.b16 %v201, %v200
  %v243 = vpack.c.b16 %v203, %v202
  %v244 = vpack.c.b16 %v205, %v204
  %v245 = vpack.c.b16 %v207, %v206
  %v246 = vpack.c.b16 %v209, %v208
  %v247 = vpack.c.b16 %v211, %v210
  %v248 = vpack.c.b16 %v213, %v212
  %v249 = vpack.c.b16 %v215, %v214
  %v250 = vpack.c.b16 %v217, %v216
  %v251 = vpack.c.b16 %v219, %v218
  %284 = vmatprep.subr.bf16.mxu0 0
  %285 = vmatpush1.bf16.msra.mxu0 %v227
  %286 = vmatprep.subr.bf16.mxu0 0
  %287 = vmatpush1.bf16.msra.mxu0 %v226
  %288 = vmatprep.subr.bf16.mxu0 0
  %289 = vmatpush1.bf16.msra.mxu0 %v225
  %290 = vmatprep.subr.bf16.mxu0 0
  %291 = vmatpush1.bf16.msra.mxu0 %v224
  %292 = vmatprep.subr.bf16.mxu0 0
  %293 = vmatpush1.bf16.msra.mxu0 %v223
  %294 = vmatprep.subr.bf16.mxu0 0
  %295 = vmatpush1.bf16.msra.mxu0 %v222
  %296 = vmatprep.subr.bf16.mxu0 0
  %297 = vmatpush1.bf16.msra.mxu0 %v221
  %298 = vmatprep.subr.bf16.mxu0 0
  %299 = vmatpush1.bf16.msra.mxu0 %v220
  %300 = vmatprep.subr.bf16.mxu0 0
  %301 = vmatpush2.bf16.msra.mxu0 %v235
  %302 = vmatprep.subr.bf16.mxu0 0
  %303 = vmatpush2.bf16.msra.mxu0 %v234
  %304 = vmatprep.subr.bf16.mxu0 0
  %305 = vmatpush2.bf16.msra.mxu0 %v233
  %306 = vmatprep.subr.bf16.mxu0 0
  %307 = vmatpush2.bf16.msra.mxu0 %v232
  %308 = vmatprep.subr.bf16.mxu0 0
  %309 = vmatpush2.bf16.msra.mxu0 %v231
  %310 = vmatprep.subr.bf16.mxu0 0
  %311 = vmatpush2.bf16.msra.mxu0 %v230
  %312 = vmatprep.subr.bf16.mxu0 0
  %313 = vmatpush2.bf16.msra.mxu0 %v229
  %314 = vmatprep.subr.bf16.mxu0 0
  %315 = vmatpush2.bf16.msra.mxu0 %v228
  %316 = vmatprep.mubr.bf16.mxu0 %v85
  %317 = vmatmul.mubr.bf16.gmra.mxu0 %v84
  %v318 = vpop.f32.mrf.mxu0
  %v319 = vadd.f32 0.0, %v318
  %v320 = vpop.f32.mrf.mxu0
  %v321 = vpop.f32.mrf.mxu0
  %v322 = vpop.f32.mrf.mxu0
  %323 = vdwg.mxu0
  %324 = vmatprep.subr.bf16.mxu0 0
  %325 = vmatpush1.bf16.msra.mxu0 %v243
  %326 = vmatprep.subr.bf16.mxu0 0
  %327 = vmatpush1.bf16.msra.mxu0 %v242
  %328 = vmatprep.subr.bf16.mxu0 0
  %329 = vmatpush1.bf16.msra.mxu0 %v241
  %330 = vmatprep.subr.bf16.mxu0 0
  %331 = vmatpush1.bf16.msra.mxu0 %v240
  %332 = vmatprep.subr.bf16.mxu0 0
  %333 = vmatpush1.bf16.msra.mxu0 %v239
  %334 = vmatprep.subr.bf16.mxu0 0
  %335 = vmatpush1.bf16.msra.mxu0 %v238
  %336 = vmatprep.subr.bf16.mxu0 0
  %337 = vmatpush1.bf16.msra.mxu0 %v237
  %338 = vmatprep.subr.bf16.mxu0 0
  %339 = vmatpush1.bf16.msra.mxu0 %v236
  %340 = vmatprep.subr.bf16.mxu0 0
  %341 = vmatpush2.bf16.msra.mxu0 %v251
  %342 = vmatprep.subr.bf16.mxu0 0
  %343 = vmatpush2.bf16.msra.mxu0 %v250
  %344 = vmatprep.subr.bf16.mxu0 0
  %345 = vmatpush2.bf16.msra.mxu0 %v249
  %346 = vmatprep.subr.bf16.mxu0 0
  %347 = vmatpush2.bf16.msra.mxu0 %v248
  %348 = vmatprep.subr.bf16.mxu0 0
  %349 = vmatpush2.bf16.msra.mxu0 %v247
  %350 = vmatprep.subr.bf16.mxu0 0
  %351 = vmatpush2.bf16.msra.mxu0 %v246
  %352 = vmatprep.subr.bf16.mxu0 0
  %353 = vmatpush2.bf16.msra.mxu0 %v245
  %354 = vmatprep.subr.bf16.mxu0 0
  %355 = vmatpush2.bf16.msra.mxu0 %v244
  %356 = vmatprep.mubr.bf16.mxu0 %v87
  %357 = vmatmul.mubr.bf16.gmra.mxu0 %v86
  %v358 = vpop.f32.mrf.mxu0
  %v359 = vadd.f32 %v319, %v358
  %v360 = vpop.f32.mrf.mxu0
  %v361 = vpop.f32.mrf.mxu0
  %v362 = vpop.f32.mrf.mxu0
  %363 = vdwg.mxu0
  %364 = vst [vmem:[%s2] sm:$0xff] %v359
  // Predicated region
  $region10: #{netd32_forward.13} parent=0 // pred_check
    _
  $region11: #{netd32_forward.13} parent=0 // pred_check_branch
    %366 = sbr.rel (0) target = $region13
  $region12: #{netd32_forward.13} parent=0 // pred_region
    _
  $region13: #{netd32_forward.13} parent=0 // pred_fallthru
    _
  // Predicated region
  $region14: #{netd32_forward.13} parent=0 // pred_check
    _
  $region15: #{netd32_forward.13} parent=0 // pred_check_branch
    %368 = sbr.rel (0) target = $region17
  $region16: #{netd32_forward.13} parent=0 // pred_region
    _
  $region17: #{netd32_forward.13} parent=0 // pred_fallthru
    _

</llo_original>
